<compile_context>
chip_gen: v5e
topology: v5e:2x2
jax: 0.10.0
libtpu: 0.0.40
codegen_flags: <defaults>
</compile_context>

<pallas_src>
import jax
import jax.numpy as jnp
from jax.experimental import pallas as pl
from jax.experimental.pallas import tpu as pltpu

# Model config (from the PyTorch module)
INPUT_SIZE = 32
HIDDEN_SIZES = [64, 64, 128]
OUTPUT_SIZE = 10


def _apply_gates(gates, c_prev, H):
    """Gate columns are pre-ordered [i | f | o | g] (kernel layout)."""
    sig = jax.nn.sigmoid(gates[:, : 3 * H])   # one contiguous sigmoid region
    g = jnp.tanh(gates[:, 3 * H:])            # one contiguous tanh region
    i = sig[:, 0 * H: 1 * H]
    f = sig[:, 1 * H: 2 * H]
    o = sig[:, 2 * H: 3 * H]
    c_new = f * c_prev + i * g
    h_new = o * jnp.tanh(c_new)
    return h_new, c_new


def lstm_stack_kernel(
    xg_ref,                       # (B, TC, 4*H0): precomputed x @ Wih0 + b0 chunk
    whh0_ref,                     # (H0, 4*H0)
    w1_ref, b1_ref,               # (H0+H1, 4*H1), (1, 4*H1)   (stacked [Wih;Whh])
    w2_ref, b2_ref,               # (H1+H2, 4*H2), (1, 4*H2)
    wfc_ref, bfc_ref,             # (H2, OUT), (1, OUT)
    out_ref,                      # (B, OUT)
    h0, c0, h1, c1, h2, c2,       # VMEM scratch: recurrent state (persists over grid)
):
    t_chunk = pl.program_id(0)
    H0, H1, H2 = HIDDEN_SIZES
    TC = xg_ref.shape[1]

    # Zero-init recurrent state at the first chunk (matches torch.zeros init).
    @pl.when(t_chunk == 0)
    def _():
        h0[...] = jnp.zeros_like(h0)
        c0[...] = jnp.zeros_like(c0)
        h1[...] = jnp.zeros_like(h1)
        c1[...] = jnp.zeros_like(c1)
        h2[...] = jnp.zeros_like(h2)
        c2[...] = jnp.zeros_like(c2)

    # Weights stay resident in VMEM across all chunks (constant block index).
    whh0 = whh0_ref[...]
    w1 = w1_ref[...]
    b1 = b1_ref[...]
    w2 = w2_ref[...]
    b2 = b2_ref[...]

    def step(i, carry):
        h0_v, c0_v, h1_v, c1_v, h2_v, c2_v = carry

        # Layer 0: input projection already hoisted; only the recurrent matmul
        # sits on the serial critical path.
        g0 = xg_ref[:, i, :] + jnp.dot(h0_v, whh0,
                                       preferred_element_type=jnp.float32)
        h0_v, c0_v = _apply_gates(g0, c0_v, H0)

        # Layer 1: fused [x; h] @ [Wih; Whh]  (one MXU push instead of two).
        g1 = jnp.dot(jnp.concatenate([h0_v, h1_v], axis=-1), w1,
                     preferred_element_type=jnp.float32) + b1
        h1_v, c1_v = _apply_gates(g1, c1_v, H1)

        # Layer 2: fused as well.
        g2 = jnp.dot(jnp.concatenate([h1_v, h2_v], axis=-1), w2,
                     preferred_element_type=jnp.float32) + b2
        h2_v, c2_v = _apply_gates(g2, c2_v, H2)

        return (h0_v, c0_v, h1_v, c1_v, h2_v, c2_v)

    carry = (h0[...], c0[...], h1[...], c1[...], h2[...], c2[...])
    carry = jax.lax.fori_loop(0, TC, step, carry, unroll=True)
    h0_f, c0_f, h1_f, c1_f, h2_f, c2_f = carry

    h0[...] = h0_f
    c0[...] = c0_f
    h1[...] = h1_f
    c1[...] = c1_f
    h2[...] = h2_f
    c2[...] = c2_f

    # Final linear layer on the last hidden state of the top LSTM.
    @pl.when(t_chunk == pl.num_programs(0) - 1)
    def _():
        out_ref[...] = (
            jnp.dot(h2_f, wfc_ref[...], preferred_element_type=jnp.float32)
            + bfc_ref[...]
        )


def _pick_time_chunk(T, max_chunk=32):
    """Largest chunk <= max_chunk that divides T and is a multiple of 8
    (layout-friendly second-to-last block dim); else run the whole sequence
    as a single chunk (block dim == full extent is always legal)."""
    for tc in range(min(max_chunk, T), 0, -1):
        if T % tc == 0 and tc % 8 == 0:
            return tc
    return T


def _reorder_gates(w, H):
    """PyTorch gate column order [i, f, g, o] -> kernel order [i, f, o, g]."""
    return jnp.concatenate(
        [w[..., : 2 * H], w[..., 3 * H:], w[..., 2 * H: 3 * H]], axis=-1)


def prepare_kernel_params(params):
    """Convert PyTorch-style params to the kernel layout:
    transposed, gate-reordered, biases fused, layer-1/2 weights stacked."""
    (l0, l1, l2, (w_fc, b_fc)) = params
    H0, H1, H2 = HIDDEN_SIZES

    w_ih0, w_hh0, b_ih0, b_hh0 = l0
    wih0_t = _reorder_gates(w_ih0.T, H0)                     # (D_in, 4H0)
    whh0_t = _reorder_gates(w_hh0.T, H0)                     # (H0, 4H0)
    b0 = _reorder_gates((b_ih0 + b_hh0)[None, :], H0)        # (1, 4H0)

    def fuse(lp, H):
        w_ih, w_hh, b_ih, b_hh = lp
        w = jnp.concatenate([w_ih.T, w_hh.T], axis=0)        # (in + H, 4H)
        return _reorder_gates(w, H), _reorder_gates((b_ih + b_hh)[None, :], H)

    w1, b1 = fuse(l1, H1)                                    # (H0+H1, 4H1)
    w2, b2 = fuse(l2, H2)                                    # (H1+H2, 4H2)
    wfc_t = w_fc.T                                           # (H2, OUT)
    bfc = b_fc[None, :]                                      # (1, OUT)
    return wih0_t, whh0_t, b0, w1, b1, w2, b2, wfc_t, bfc


def variable_size_lstm(x, params, *, time_chunk=None):
    """x: (B, T, INPUT_SIZE) float32 -> (B, OUTPUT_SIZE) float32."""
    B, T, D = x.shape
    assert D == INPUT_SIZE
    H0, H1, H2 = HIDDEN_SIZES

    (wih0_t, whh0_t, b0, w1, b1, w2, b2, wfc_t, bfc) = prepare_kernel_params(params)

    # Hoist the layer-0 input projection (+ fused bias) out of the recurrence:
    # one well-shaped (B*T, D) x (D, 4H0) matmul for the whole sequence.
    xg = jnp.einsum("btd,dg->btg", x, wih0_t) + b0           # (B, T, 4H0)

    TC = time_chunk if time_chunk is not None else _pick_time_chunk(T)
    assert T % TC == 0
    num_chunks = T // TC

    def const_spec(shape):
        # Weights stay resident across all chunks (constant block index).
        # NOTE: could add pipeline_mode=pl.Buffered(1) to drop the second
        # weight buffer, but the total weight footprint is <1 MiB here.
        return pl.BlockSpec(shape, lambda t: tuple(0 for _ in shape))

    grid_spec = pltpu.PrefetchScalarGridSpec(
        num_scalar_prefetch=0,
        grid=(num_chunks,),
        in_specs=[
            pl.BlockSpec((B, TC, 4 * H0), lambda t: (0, t, 0)),   # xg chunk
            const_spec(whh0_t.shape),
            const_spec(w1.shape), const_spec(b1.shape),
            const_spec(w2.shape), const_spec(b2.shape),
            const_spec(wfc_t.shape), const_spec(bfc.shape),
        ],
        out_specs=pl.BlockSpec((B, OUTPUT_SIZE), lambda t: (0, 0)),
        scratch_shapes=[
            pltpu.VMEM((B, H0), jnp.float32), pltpu.VMEM((B, H0), jnp.float32),
            pltpu.VMEM((B, H1), jnp.float32), pltpu.VMEM((B, H1), jnp.float32),
            pltpu.VMEM((B, H2), jnp.float32), pltpu.VMEM((B, H2), jnp.float32),
        ],
    )

    return pl.pallas_call(
        lstm_stack_kernel,
        out_shape=jax.ShapeDtypeStruct((B, OUTPUT_SIZE), jnp.float32),
        grid_spec=grid_spec,
        compiler_params=pltpu.CompilerParams(
            dimension_semantics=("arbitrary",),      # sequential recurrence over time
            vmem_limit_bytes=32 * 1024 * 1024,       # explicit budget (v7x-safe)
        ),
    )(xg, whh0_t, w1, b1, w2, b2, wfc_t, bfc)
    # TODO(synk): on v7x, add a "parallel" batch grid axis / core_map over the
    # 2 TensorCores once the batch is large enough to be worth splitting.


def init_params(key):
    """Deterministic synthetic parameters in PyTorch nn.LSTMCell / nn.Linear
    layout: per layer (w_ih (4H,in), w_hh (4H,H), b_ih (4H,), b_hh (4H,)),
    gate order (i, f, g, o); plus (w_fc (out,H), b_fc (out,))."""
    sizes = [INPUT_SIZE] + HIDDEN_SIZES
    keys = jax.random.split(key, 3 * 4 + 2)
    layers = []
    k = 0
    for layer in range(3):
        in_dim, H = sizes[layer], sizes[layer + 1]
        bound = 1.0 / (float(H) ** 0.5)
        w_ih = jax.random.uniform(keys[k], (4 * H, in_dim),
                                  minval=-bound, maxval=bound, dtype=jnp.float32)
        w_hh = jax.random.uniform(keys[k + 1], (4 * H, H),
                                  minval=-bound, maxval=bound, dtype=jnp.float32)
        b_ih = jax.random.uniform(keys[k + 2], (4 * H,),
                                  minval=-bound, maxval=bound, dtype=jnp.float32)
        b_hh = jax.random.uniform(keys[k + 3], (4 * H,),
                                  minval=-bound, maxval=bound, dtype=jnp.float32)
        layers.append((w_ih, w_hh, b_ih, b_hh))
        k += 4
    H_last = HIDDEN_SIZES[-1]
    bound = 1.0 / (float(H_last) ** 0.5)
    w_fc = jax.random.uniform(keys[k], (OUTPUT_SIZE, H_last),
                              minval=-bound, maxval=bound, dtype=jnp.float32)
    b_fc = jax.random.uniform(keys[k + 1], (OUTPUT_SIZE,),
                              minval=-bound, maxval=bound, dtype=jnp.float32)
    return (*layers, (w_fc, b_fc))


def reference_forward(x, params):
    """Pure-JAX replica of the PyTorch forward pass (PyTorch layouts/gate order)."""
    (l0, l1, l2, (w_fc, b_fc)) = params
    B = x.shape[0]
    hs = [jnp.zeros((B, H), jnp.float32) for H in HIDDEN_SIZES]
    cs = [jnp.zeros((B, H), jnp.float32) for H in HIDDEN_SIZES]
    layer_params = (l0, l1, l2)

    def cell(x_in, h, c, w_ih, w_hh, b_ih, b_hh, H):
        gates = x_in @ w_ih.T + b_ih + h @ w_hh.T + b_hh
        i = jax.nn.sigmoid(gates[:, 0 * H:1 * H])
        f = jax.nn.sigmoid(gates[:, 1 * H:2 * H])
        g = jnp.tanh(gates[:, 2 * H:3 * H])
        o = jax.nn.sigmoid(gates[:, 3 * H:4 * H])
        c_new = f * c + i * g
        return o * jnp.tanh(c_new), c_new

    for t in range(x.shape[1]):
        inp = x[:, t, :]
        for l in range(3):
            hs[l], cs[l] = cell(inp, hs[l], cs[l], *layer_params[l], HIDDEN_SIZES[l])
            inp = hs[l]
    return hs[2] @ w_fc.T + b_fc


if __name__ == "__main__":
    key = jax.random.PRNGKey(0)
    k_x, k_p = jax.random.split(key)

    B, T = 2, 8
    x = jax.random.normal(k_x, (B, T, INPUT_SIZE), dtype=jnp.float32)
    params = init_params(k_p)

    out = variable_size_lstm(x, params)
    out = jax.block_until_ready(out)

    ref = reference_forward(x, params)
    assert out.shape == (B, OUTPUT_SIZE)
    assert jnp.allclose(out, ref, atol=1e-4, rtol=1e-5), "mismatch vs reference"

    print("KERNEL_OK")
</pallas_src>

<mosaic_0001>
module attributes {stable_mosaic.version = 11 : i64} {
  func.func @lstm_stack_kernel(%arg0: i32, %arg1: memref<2x8x256xf32, #tpu.memory_space<vmem>>, %arg2: memref<64x256xf32, #tpu.memory_space<vmem>>, %arg3: memref<128x256xf32, #tpu.memory_space<vmem>>, %arg4: memref<1x256xf32, #tpu.memory_space<vmem>>, %arg5: memref<192x512xf32, #tpu.memory_space<vmem>>, %arg6: memref<1x512xf32, #tpu.memory_space<vmem>>, %arg7: memref<128x10xf32, #tpu.memory_space<vmem>>, %arg8: memref<1x10xf32, #tpu.memory_space<vmem>>, %arg9: memref<2x10xf32, #tpu.memory_space<vmem>>, %arg10: memref<2x64xf32, #tpu.memory_space<vmem>>, %arg11: memref<2x64xf32, #tpu.memory_space<vmem>>, %arg12: memref<2x64xf32, #tpu.memory_space<vmem>>, %arg13: memref<2x64xf32, #tpu.memory_space<vmem>>, %arg14: memref<2x128xf32, #tpu.memory_space<vmem>>, %arg15: memref<2x128xf32, #tpu.memory_space<vmem>>) attributes {dimension_semantics = [#tpu.dimension_semantics<arbitrary>], iteration_bounds = array<i64: 1>, scalar_prefetch = 0 : i64, scratch_operands = 6 : i64, tpu.core_type = #tpu.core_type<tc>, window_params = [{transform_indices = @transform_0, window_bounds = array<i64: 2, 8, 256>}, {pipeline_mode = #tpu.pipeline_mode<synchronous>, transform_indices = @transform_1, window_bounds = array<i64: 64, 256>}, {pipeline_mode = #tpu.pipeline_mode<synchronous>, transform_indices = @transform_2, window_bounds = array<i64: 128, 256>}, {pipeline_mode = #tpu.pipeline_mode<synchronous>, transform_indices = @transform_3, window_bounds = array<i64: 1, 256>}, {pipeline_mode = #tpu.pipeline_mode<synchronous>, transform_indices = @transform_4, window_bounds = array<i64: 192, 512>}, {pipeline_mode = #tpu.pipeline_mode<synchronous>, transform_indices = @transform_5, window_bounds = array<i64: 1, 512>}, {pipeline_mode = #tpu.pipeline_mode<synchronous>, transform_indices = @transform_6, window_bounds = array<i64: 128, 10>}, {pipeline_mode = #tpu.pipeline_mode<synchronous>, transform_indices = @transform_7, window_bounds = array<i64: 1, 10>}, {pipeline_mode = #tpu.pipeline_mode<synchronous>, transform_indices = @transform_8, window_bounds = array<i64: 2, 10>}]} {
    %c0_i32 = arith.constant 0 : i32
    %0 = arith.cmpi eq, %arg0, %c0_i32 : i32
    %1 = arith.extui %0 : i1 to i32
    %c0_i32_0 = arith.constant 0 : i32
    %2 = arith.cmpi ne, %1, %c0_i32_0 : i32
    scf.if %2 {
      %cst_100 = arith.constant 0.000000e+00 : f32
      %511 = vector.broadcast %cst_100 : f32 to vector<2x64xf32>
      %c0_101 = arith.constant 0 : index
      %c0_102 = arith.constant 0 : index
      %512 = vector.load %arg10[%c0_101, %c0_102] : memref<2x64xf32, #tpu.memory_space<vmem>>, vector<2x64xf32>
      tpu.vector_store %arg10[%c0_101, %c0_102], %511 {strides = array<i32>} : memref<2x64xf32, #tpu.memory_space<vmem>>, vector<2x64xf32>,
      %cst_103 = arith.constant 0.000000e+00 : f32
      %513 = vector.broadcast %cst_103 : f32 to vector<2x64xf32>
      %c0_104 = arith.constant 0 : index
      %c0_105 = arith.constant 0 : index
      %514 = vector.load %arg11[%c0_104, %c0_105] : memref<2x64xf32, #tpu.memory_space<vmem>>, vector<2x64xf32>
      tpu.vector_store %arg11[%c0_104, %c0_105], %513 {strides = array<i32>} : memref<2x64xf32, #tpu.memory_space<vmem>>, vector<2x64xf32>,
      %cst_106 = arith.constant 0.000000e+00 : f32
      %515 = vector.broadcast %cst_106 : f32 to vector<2x64xf32>
      %c0_107 = arith.constant 0 : index
      %c0_108 = arith.constant 0 : index
      %516 = vector.load %arg12[%c0_107, %c0_108] : memref<2x64xf32, #tpu.memory_space<vmem>>, vector<2x64xf32>
      tpu.vector_store %arg12[%c0_107, %c0_108], %515 {strides = array<i32>} : memref<2x64xf32, #tpu.memory_space<vmem>>, vector<2x64xf32>,
      %cst_109 = arith.constant 0.000000e+00 : f32
      %517 = vector.broadcast %cst_109 : f32 to vector<2x64xf32>
      %c0_110 = arith.constant 0 : index
      %c0_111 = arith.constant 0 : index
      %518 = vector.load %arg13[%c0_110, %c0_111] : memref<2x64xf32, #tpu.memory_space<vmem>>, vector<2x64xf32>
      tpu.vector_store %arg13[%c0_110, %c0_111], %517 {strides = array<i32>} : memref<2x64xf32, #tpu.memory_space<vmem>>, vector<2x64xf32>,
      %cst_112 = arith.constant 0.000000e+00 : f32
      %519 = vector.broadcast %cst_112 : f32 to vector<2x128xf32>
      %c0_113 = arith.constant 0 : index
      %c0_114 = arith.constant 0 : index
      %520 = vector.load %arg14[%c0_113, %c0_114] : memref<2x128xf32, #tpu.memory_space<vmem>>, vector<2x128xf32>
      tpu.vector_store %arg14[%c0_113, %c0_114], %519 {strides = array<i32>} : memref<2x128xf32, #tpu.memory_space<vmem>>, vector<2x128xf32>,
      %cst_115 = arith.constant 0.000000e+00 : f32
      %521 = vector.broadcast %cst_115 : f32 to vector<2x128xf32>
      %c0_116 = arith.constant 0 : index
      %c0_117 = arith.constant 0 : index
      %522 = vector.load %arg15[%c0_116, %c0_117] : memref<2x128xf32, #tpu.memory_space<vmem>>, vector<2x128xf32>
      tpu.vector_store %arg15[%c0_116, %c0_117], %521 {strides = array<i32>} : memref<2x128xf32, #tpu.memory_space<vmem>>, vector<2x128xf32>,
    } else {
    }
    %c0 = arith.constant 0 : index
    %c0_1 = arith.constant 0 : index
    %3 = vector.load %arg2[%c0, %c0_1] : memref<64x256xf32, #tpu.memory_space<vmem>>, vector<64x256xf32>
    %c0_2 = arith.constant 0 : index
    %c0_3 = arith.constant 0 : index
    %4 = vector.load %arg3[%c0_2, %c0_3] : memref<128x256xf32, #tpu.memory_space<vmem>>, vector<128x256xf32>
    %c0_4 = arith.constant 0 : index
    %c0_5 = arith.constant 0 : index
    %5 = vector.load %arg4[%c0_4, %c0_5] : memref<1x256xf32, #tpu.memory_space<vmem>>, vector<1x256xf32>
    %c0_6 = arith.constant 0 : index
    %c0_7 = arith.constant 0 : index
    %6 = vector.load %arg5[%c0_6, %c0_7] : memref<192x512xf32, #tpu.memory_space<vmem>>, vector<192x512xf32>
    %c0_8 = arith.constant 0 : index
    %c0_9 = arith.constant 0 : index
    %7 = vector.load %arg6[%c0_8, %c0_9] : memref<1x512xf32, #tpu.memory_space<vmem>>, vector<1x512xf32>
    %c0_10 = arith.constant 0 : index
    %c0_11 = arith.constant 0 : index
    %8 = vector.load %arg10[%c0_10, %c0_11] : memref<2x64xf32, #tpu.memory_space<vmem>>, vector<2x64xf32>
    %c0_12 = arith.constant 0 : index
    %c0_13 = arith.constant 0 : index
    %9 = vector.load %arg11[%c0_12, %c0_13] : memref<2x64xf32, #tpu.memory_space<vmem>>, vector<2x64xf32>
    %c0_14 = arith.constant 0 : index
    %c0_15 = arith.constant 0 : index
    %10 = vector.load %arg12[%c0_14, %c0_15] : memref<2x64xf32, #tpu.memory_space<vmem>>, vector<2x64xf32>
    %c0_16 = arith.constant 0 : index
    %c0_17 = arith.constant 0 : index
    %11 = vector.load %arg13[%c0_16, %c0_17] : memref<2x64xf32, #tpu.memory_space<vmem>>, vector<2x64xf32>
    %c0_18 = arith.constant 0 : index
    %c0_19 = arith.constant 0 : index
    %12 = vector.load %arg14[%c0_18, %c0_19] : memref<2x128xf32, #tpu.memory_space<vmem>>, vector<2x128xf32>
    %c0_20 = arith.constant 0 : index
    %c0_21 = arith.constant 0 : index
    %13 = vector.load %arg15[%c0_20, %c0_21] : memref<2x128xf32, #tpu.memory_space<vmem>>, vector<2x128xf32>
    %c0_i32_22 = arith.constant 0 : i32
    %c0_23 = arith.constant 0 : index
    %14 = arith.index_cast %c0_i32_22 : i32 to index
    %c0_24 = arith.constant 0 : index
    %15 = vector.load %arg1[%c0_23, %14, %c0_24] : memref<2x8x256xf32, #tpu.memory_space<vmem>>, vector<2x1x256xf32>
    %16 = vector.shape_cast %15 : vector<2x1x256xf32> to vector<2x256xf32>
    %cst = arith.constant dense<0.000000e+00> : vector<2x256xf32>
    %17 = tpu.matmul %8, %3, %cst {dimension_numbers = #tpu.dot_dimension_numbers<[1], [0], [0], [1], [0, 0, 1, 1], [], []>} : vector<2x64xf32>, vector<64x256xf32>, vector<2x256xf32> -> vector<2x256xf32>
    %18 = arith.addf %16, %17 : vector<2x256xf32>
    %19 = vector.extract_strided_slice %18 {offsets = [0, 0], sizes = [2, 192], strides = [1, 1]} : vector<2x256xf32> to vector<2x192xf32>
    %20 = arith.negf %19 : vector<2x192xf32>
    %21 = math.exp %20 : vector<2x192xf32>
    %cst_25 = arith.constant 1.000000e+00 : f32
    %22 = vector.broadcast %cst_25 : f32 to vector<2x192xf32>
    %23 = arith.addf %22, %21 : vector<2x192xf32>
    %24 = arith.divf %22, %23 : vector<2x192xf32>
    %25 = vector.extract_strided_slice %18 {offsets = [0, 192], sizes = [2, 64], strides = [1, 1]} : vector<2x256xf32> to vector<2x64xf32>
    %26 = math.tanh %25 : vector<2x64xf32>
    %27 = vector.extract_strided_slice %24 {offsets = [0, 0], sizes = [2, 64], strides = [1, 1]} : vector<2x192xf32> to vector<2x64xf32>
    %28 = vector.extract_strided_slice %24 {offsets = [0, 64], sizes = [2, 64], strides = [1, 1]} : vector<2x192xf32> to vector<2x64xf32>
    %29 = vector.extract_strided_slice %24 {offsets = [0, 128], sizes = [2, 64], strides = [1, 1]} : vector<2x192xf32> to vector<2x64xf32>
    %30 = arith.mulf %28, %9 : vector<2x64xf32>
    %31 = arith.mulf %27, %26 : vector<2x64xf32>
    %32 = arith.addf %30, %31 : vector<2x64xf32>
    %33 = math.tanh %32 : vector<2x64xf32>
    %34 = arith.mulf %29, %33 : vector<2x64xf32>
    %35 = tpu.concatenate %34, %10 in 1 : vector<2x64xf32>, vector<2x64xf32> -> vector<2x128xf32>
    %cst_26 = arith.constant dense<0.000000e+00> : vector<2x256xf32>
    %36 = tpu.matmul %35, %4, %cst_26 {dimension_numbers = #tpu.dot_dimension_numbers<[1], [0], [0], [1], [0, 0, 1, 1], [], []>} : vector<2x128xf32>, vector<128x256xf32>, vector<2x256xf32> -> vector<2x256xf32>
    %37 = vector.broadcast %5 : vector<1x256xf32> to vector<2x256xf32>
    %38 = arith.addf %36, %37 : vector<2x256xf32>
    %39 = vector.extract_strided_slice %38 {offsets = [0, 0], sizes = [2, 192], strides = [1, 1]} : vector<2x256xf32> to vector<2x192xf32>
    %40 = arith.negf %39 : vector<2x192xf32>
    %41 = math.exp %40 : vector<2x192xf32>
    %cst_27 = arith.constant 1.000000e+00 : f32
    %42 = vector.broadcast %cst_27 : f32 to vector<2x192xf32>
    %43 = arith.addf %42, %41 : vector<2x192xf32>
    %44 = arith.divf %42, %43 : vector<2x192xf32>
    %45 = vector.extract_strided_slice %38 {offsets = [0, 192], sizes = [2, 64], strides = [1, 1]} : vector<2x256xf32> to vector<2x64xf32>
    %46 = math.tanh %45 : vector<2x64xf32>
    %47 = vector.extract_strided_slice %44 {offsets = [0, 0], sizes = [2, 64], strides = [1, 1]} : vector<2x192xf32> to vector<2x64xf32>
    %48 = vector.extract_strided_slice %44 {offsets = [0, 64], sizes = [2, 64], strides = [1, 1]} : vector<2x192xf32> to vector<2x64xf32>
    %49 = vector.extract_strided_slice %44 {offsets = [0, 128], sizes = [2, 64], strides = [1, 1]} : vector<2x192xf32> to vector<2x64xf32>
    %50 = arith.mulf %48, %11 : vector<2x64xf32>
    %51 = arith.mulf %47, %46 : vector<2x64xf32>
    %52 = arith.addf %50, %51 : vector<2x64xf32>
    %53 = math.tanh %52 : vector<2x64xf32>
    %54 = arith.mulf %49, %53 : vector<2x64xf32>
    %55 = tpu.concatenate %54, %12 in 1 : vector<2x64xf32>, vector<2x128xf32> -> vector<2x192xf32>
    %cst_28 = arith.constant dense<0.000000e+00> : vector<2x512xf32>
    %56 = tpu.matmul %55, %6, %cst_28 {dimension_numbers = #tpu.dot_dimension_numbers<[1], [0], [0], [1], [0, 0, 1, 1], [], []>} : vector<2x192xf32>, vector<192x512xf32>, vector<2x512xf32> -> vector<2x512xf32>
    %57 = vector.broadcast %7 : vector<1x512xf32> to vector<2x512xf32>
    %58 = arith.addf %56, %57 : vector<2x512xf32>
    %59 = vector.extract_strided_slice %58 {offsets = [0, 0], sizes = [2, 384], strides = [1, 1]} : vector<2x512xf32> to vector<2x384xf32>
    %60 = arith.negf %59 : vector<2x384xf32>
    %61 = math.exp %60 : vector<2x384xf32>
    %cst_29 = arith.constant 1.000000e+00 : f32
    %62 = vector.broadcast %cst_29 : f32 to vector<2x384xf32>
    %63 = arith.addf %62, %61 : vector<2x384xf32>
    %64 = arith.divf %62, %63 : vector<2x384xf32>
    %65 = vector.extract_strided_slice %58 {offsets = [0, 384], sizes = [2, 128], strides = [1, 1]} : vector<2x512xf32> to vector<2x128xf32>
    %66 = math.tanh %65 : vector<2x128xf32>
    %67 = vector.extract_strided_slice %64 {offsets = [0, 0], sizes = [2, 128], strides = [1, 1]} : vector<2x384xf32> to vector<2x128xf32>
    %68 = vector.extract_strided_slice %64 {offsets = [0, 128], sizes = [2, 128], strides = [1, 1]} : vector<2x384xf32> to vector<2x128xf32>
    %69 = vector.extract_strided_slice %64 {offsets = [0, 256], sizes = [2, 128], strides = [1, 1]} : vector<2x384xf32> to vector<2x128xf32>
    %70 = arith.mulf %68, %13 : vector<2x128xf32>
    %71 = arith.mulf %67, %66 : vector<2x128xf32>
    %72 = arith.addf %70, %71 : vector<2x128xf32>
    %73 = math.tanh %72 : vector<2x128xf32>
    %74 = arith.mulf %69, %73 : vector<2x128xf32>
    %c1_i32 = arith.constant 1 : i32
    %c0_30 = arith.constant 0 : index
    %75 = arith.index_cast %c1_i32 : i32 to index
    %c0_31 = arith.constant 0 : index
    %76 = vector.load %arg1[%c0_30, %75, %c0_31] : memref<2x8x256xf32, #tpu.memory_space<vmem>>, vector<2x1x256xf32>
    %77 = vector.shape_cast %76 : vector<2x1x256xf32> to vector<2x256xf32>
    %cst_32 = arith.constant dense<0.000000e+00> : vector<2x256xf32>
    %78 = tpu.matmul %34, %3, %cst_32 {dimension_numbers = #tpu.dot_dimension_numbers<[1], [0], [0], [1], [0, 0, 1, 1], [], []>} : vector<2x64xf32>, vector<64x256xf32>, vector<2x256xf32> -> vector<2x256xf32>
    %79 = arith.addf %77, %78 : vector<2x256xf32>
    %80 = vector.extract_strided_slice %79 {offsets = [0, 0], sizes = [2, 192], strides = [1, 1]} : vector<2x256xf32> to vector<2x192xf32>
    %81 = arith.negf %80 : vector<2x192xf32>
    %82 = math.exp %81 : vector<2x192xf32>
    %cst_33 = arith.constant 1.000000e+00 : f32
    %83 = vector.broadcast %cst_33 : f32 to vector<2x192xf32>
    %84 = arith.addf %83, %82 : vector<2x192xf32>
    %85 = arith.divf %83, %84 : vector<2x192xf32>
    %86 = vector.extract_strided_slice %79 {offsets = [0, 192], sizes = [2, 64], strides = [1, 1]} : vector<2x256xf32> to vector<2x64xf32>
    %87 = math.tanh %86 : vector<2x64xf32>
    %88 = vector.extract_strided_slice %85 {offsets = [0, 0], sizes = [2, 64], strides = [1, 1]} : vector<2x192xf32> to vector<2x64xf32>
    %89 = vector.extract_strided_slice %85 {offsets = [0, 64], sizes = [2, 64], strides = [1, 1]} : vector<2x192xf32> to vector<2x64xf32>
    %90 = vector.extract_strided_slice %85 {offsets = [0, 128], sizes = [2, 64], strides = [1, 1]} : vector<2x192xf32> to vector<2x64xf32>
    %91 = arith.mulf %89, %32 : vector<2x64xf32>
    %92 = arith.mulf %88, %87 : vector<2x64xf32>
    %93 = arith.addf %91, %92 : vector<2x64xf32>
    %94 = math.tanh %93 : vector<2x64xf32>
    %95 = arith.mulf %90, %94 : vector<2x64xf32>
    %96 = tpu.concatenate %95, %54 in 1 : vector<2x64xf32>, vector<2x64xf32> -> vector<2x128xf32>
    %cst_34 = arith.constant dense<0.000000e+00> : vector<2x256xf32>
    %97 = tpu.matmul %96, %4, %cst_34 {dimension_numbers = #tpu.dot_dimension_numbers<[1], [0], [0], [1], [0, 0, 1, 1], [], []>} : vector<2x128xf32>, vector<128x256xf32>, vector<2x256xf32> -> vector<2x256xf32>
    %98 = vector.broadcast %5 : vector<1x256xf32> to vector<2x256xf32>
    %99 = arith.addf %97, %98 : vector<2x256xf32>
    %100 = vector.extract_strided_slice %99 {offsets = [0, 0], sizes = [2, 192], strides = [1, 1]} : vector<2x256xf32> to vector<2x192xf32>
    %101 = arith.negf %100 : vector<2x192xf32>
    %102 = math.exp %101 : vector<2x192xf32>
    %cst_35 = arith.constant 1.000000e+00 : f32
    %103 = vector.broadcast %cst_35 : f32 to vector<2x192xf32>
    %104 = arith.addf %103, %102 : vector<2x192xf32>
    %105 = arith.divf %103, %104 : vector<2x192xf32>
    %106 = vector.extract_strided_slice %99 {offsets = [0, 192], sizes = [2, 64], strides = [1, 1]} : vector<2x256xf32> to vector<2x64xf32>
    %107 = math.tanh %106 : vector<2x64xf32>
    %108 = vector.extract_strided_slice %105 {offsets = [0, 0], sizes = [2, 64], strides = [1, 1]} : vector<2x192xf32> to vector<2x64xf32>
    %109 = vector.extract_strided_slice %105 {offsets = [0, 64], sizes = [2, 64], strides = [1, 1]} : vector<2x192xf32> to vector<2x64xf32>
    %110 = vector.extract_strided_slice %105 {offsets = [0, 128], sizes = [2, 64], strides = [1, 1]} : vector<2x192xf32> to vector<2x64xf32>
    %111 = arith.mulf %109, %52 : vector<2x64xf32>
    %112 = arith.mulf %108, %107 : vector<2x64xf32>
    %113 = arith.addf %111, %112 : vector<2x64xf32>
    %114 = math.tanh %113 : vector<2x64xf32>
    %115 = arith.mulf %110, %114 : vector<2x64xf32>
    %116 = tpu.concatenate %115, %74 in 1 : vector<2x64xf32>, vector<2x128xf32> -> vector<2x192xf32>
    %cst_36 = arith.constant dense<0.000000e+00> : vector<2x512xf32>
    %117 = tpu.matmul %116, %6, %cst_36 {dimension_numbers = #tpu.dot_dimension_numbers<[1], [0], [0], [1], [0, 0, 1, 1], [], []>} : vector<2x192xf32>, vector<192x512xf32>, vector<2x512xf32> -> vector<2x512xf32>
    %118 = vector.broadcast %7 : vector<1x512xf32> to vector<2x512xf32>
    %119 = arith.addf %117, %118 : vector<2x512xf32>
    %120 = vector.extract_strided_slice %119 {offsets = [0, 0], sizes = [2, 384], strides = [1, 1]} : vector<2x512xf32> to vector<2x384xf32>
    %121 = arith.negf %120 : vector<2x384xf32>
    %122 = math.exp %121 : vector<2x384xf32>
    %cst_37 = arith.constant 1.000000e+00 : f32
    %123 = vector.broadcast %cst_37 : f32 to vector<2x384xf32>
    %124 = arith.addf %123, %122 : vector<2x384xf32>
    %125 = arith.divf %123, %124 : vector<2x384xf32>
    %126 = vector.extract_strided_slice %119 {offsets = [0, 384], sizes = [2, 128], strides = [1, 1]} : vector<2x512xf32> to vector<2x128xf32>
    %127 = math.tanh %126 : vector<2x128xf32>
    %128 = vector.extract_strided_slice %125 {offsets = [0, 0], sizes = [2, 128], strides = [1, 1]} : vector<2x384xf32> to vector<2x128xf32>
    %129 = vector.extract_strided_slice %125 {offsets = [0, 128], sizes = [2, 128], strides = [1, 1]} : vector<2x384xf32> to vector<2x128xf32>
    %130 = vector.extract_strided_slice %125 {offsets = [0, 256], sizes = [2, 128], strides = [1, 1]} : vector<2x384xf32> to vector<2x128xf32>
    %131 = arith.mulf %129, %72 : vector<2x128xf32>
    %132 = arith.mulf %128, %127 : vector<2x128xf32>
    %133 = arith.addf %131, %132 : vector<2x128xf32>
    %134 = math.tanh %133 : vector<2x128xf32>
    %135 = arith.mulf %130, %134 : vector<2x128xf32>
    %c2_i32 = arith.constant 2 : i32
    %c0_38 = arith.constant 0 : index
    %136 = arith.index_cast %c2_i32 : i32 to index
    %c0_39 = arith.constant 0 : index
    %137 = vector.load %arg1[%c0_38, %136, %c0_39] : memref<2x8x256xf32, #tpu.memory_space<vmem>>, vector<2x1x256xf32>
    %138 = vector.shape_cast %137 : vector<2x1x256xf32> to vector<2x256xf32>
    %cst_40 = arith.constant dense<0.000000e+00> : vector<2x256xf32>
    %139 = tpu.matmul %95, %3, %cst_40 {dimension_numbers = #tpu.dot_dimension_numbers<[1], [0], [0], [1], [0, 0, 1, 1], [], []>} : vector<2x64xf32>, vector<64x256xf32>, vector<2x256xf32> -> vector<2x256xf32>
    %140 = arith.addf %138, %139 : vector<2x256xf32>
    %141 = vector.extract_strided_slice %140 {offsets = [0, 0], sizes = [2, 192], strides = [1, 1]} : vector<2x256xf32> to vector<2x192xf32>
    %142 = arith.negf %141 : vector<2x192xf32>
    %143 = math.exp %142 : vector<2x192xf32>
    %cst_41 = arith.constant 1.000000e+00 : f32
    %144 = vector.broadcast %cst_41 : f32 to vector<2x192xf32>
    %145 = arith.addf %144, %143 : vector<2x192xf32>
    %146 = arith.divf %144, %145 : vector<2x192xf32>
    %147 = vector.extract_strided_slice %140 {offsets = [0, 192], sizes = [2, 64], strides = [1, 1]} : vector<2x256xf32> to vector<2x64xf32>
    %148 = math.tanh %147 : vector<2x64xf32>
    %149 = vector.extract_strided_slice %146 {offsets = [0, 0], sizes = [2, 64], strides = [1, 1]} : vector<2x192xf32> to vector<2x64xf32>
    %150 = vector.extract_strided_slice %146 {offsets = [0, 64], sizes = [2, 64], strides = [1, 1]} : vector<2x192xf32> to vector<2x64xf32>
    %151 = vector.extract_strided_slice %146 {offsets = [0, 128], sizes = [2, 64], strides = [1, 1]} : vector<2x192xf32> to vector<2x64xf32>
    %152 = arith.mulf %150, %93 : vector<2x64xf32>
    %153 = arith.mulf %149, %148 : vector<2x64xf32>
    %154 = arith.addf %152, %153 : vector<2x64xf32>
    %155 = math.tanh %154 : vector<2x64xf32>
    %156 = arith.mulf %151, %155 : vector<2x64xf32>
    %157 = tpu.concatenate %156, %115 in 1 : vector<2x64xf32>, vector<2x64xf32> -> vector<2x128xf32>
    %cst_42 = arith.constant dense<0.000000e+00> : vector<2x256xf32>
    %158 = tpu.matmul %157, %4, %cst_42 {dimension_numbers = #tpu.dot_dimension_numbers<[1], [0], [0], [1], [0, 0, 1, 1], [], []>} : vector<2x128xf32>, vector<128x256xf32>, vector<2x256xf32> -> vector<2x256xf32>
    %159 = vector.broadcast %5 : vector<1x256xf32> to vector<2x256xf32>
    %160 = arith.addf %158, %159 : vector<2x256xf32>
    %161 = vector.extract_strided_slice %160 {offsets = [0, 0], sizes = [2, 192], strides = [1, 1]} : vector<2x256xf32> to vector<2x192xf32>
    %162 = arith.negf %161 : vector<2x192xf32>
    %163 = math.exp %162 : vector<2x192xf32>
    %cst_43 = arith.constant 1.000000e+00 : f32
    %164 = vector.broadcast %cst_43 : f32 to vector<2x192xf32>
    %165 = arith.addf %164, %163 : vector<2x192xf32>
    %166 = arith.divf %164, %165 : vector<2x192xf32>
    %167 = vector.extract_strided_slice %160 {offsets = [0, 192], sizes = [2, 64], strides = [1, 1]} : vector<2x256xf32> to vector<2x64xf32>
    %168 = math.tanh %167 : vector<2x64xf32>
    %169 = vector.extract_strided_slice %166 {offsets = [0, 0], sizes = [2, 64], strides = [1, 1]} : vector<2x192xf32> to vector<2x64xf32>
    %170 = vector.extract_strided_slice %166 {offsets = [0, 64], sizes = [2, 64], strides = [1, 1]} : vector<2x192xf32> to vector<2x64xf32>
    %171 = vector.extract_strided_slice %166 {offsets = [0, 128], sizes = [2, 64], strides = [1, 1]} : vector<2x192xf32> to vector<2x64xf32>
    %172 = arith.mulf %170, %113 : vector<2x64xf32>
    %173 = arith.mulf %169, %168 : vector<2x64xf32>
    %174 = arith.addf %172, %173 : vector<2x64xf32>
    %175 = math.tanh %174 : vector<2x64xf32>
    %176 = arith.mulf %171, %175 : vector<2x64xf32>
    %177 = tpu.concatenate %176, %135 in 1 : vector<2x64xf32>, vector<2x128xf32> -> vector<2x192xf32>
    %cst_44 = arith.constant dense<0.000000e+00> : vector<2x512xf32>
    %178 = tpu.matmul %177, %6, %cst_44 {dimension_numbers = #tpu.dot_dimension_numbers<[1], [0], [0], [1], [0, 0, 1, 1], [], []>} : vector<2x192xf32>, vector<192x512xf32>, vector<2x512xf32> -> vector<2x512xf32>
    %179 = vector.broadcast %7 : vector<1x512xf32> to vector<2x512xf32>
    %180 = arith.addf %178, %179 : vector<2x512xf32>
    %181 = vector.extract_strided_slice %180 {offsets = [0, 0], sizes = [2, 384], strides = [1, 1]} : vector<2x512xf32> to vector<2x384xf32>
    %182 = arith.negf %181 : vector<2x384xf32>
    %183 = math.exp %182 : vector<2x384xf32>
    %cst_45 = arith.constant 1.000000e+00 : f32
    %184 = vector.broadcast %cst_45 : f32 to vector<2x384xf32>
    %185 = arith.addf %184, %183 : vector<2x384xf32>
    %186 = arith.divf %184, %185 : vector<2x384xf32>
    %187 = vector.extract_strided_slice %180 {offsets = [0, 384], sizes = [2, 128], strides = [1, 1]} : vector<2x512xf32> to vector<2x128xf32>
    %188 = math.tanh %187 : vector<2x128xf32>
    %189 = vector.extract_strided_slice %186 {offsets = [0, 0], sizes = [2, 128], strides = [1, 1]} : vector<2x384xf32> to vector<2x128xf32>
    %190 = vector.extract_strided_slice %186 {offsets = [0, 128], sizes = [2, 128], strides = [1, 1]} : vector<2x384xf32> to vector<2x128xf32>
    %191 = vector.extract_strided_slice %186 {offsets = [0, 256], sizes = [2, 128], strides = [1, 1]} : vector<2x384xf32> to vector<2x128xf32>
    %192 = arith.mulf %190, %133 : vector<2x128xf32>
    %193 = arith.mulf %189, %188 : vector<2x128xf32>
    %194 = arith.addf %192, %193 : vector<2x128xf32>
    %195 = math.tanh %194 : vector<2x128xf32>
    %196 = arith.mulf %191, %195 : vector<2x128xf32>
    %c3_i32 = arith.constant 3 : i32
    %c0_46 = arith.constant 0 : index
    %197 = arith.index_cast %c3_i32 : i32 to index
    %c0_47 = arith.constant 0 : index
    %198 = vector.load %arg1[%c0_46, %197, %c0_47] : memref<2x8x256xf32, #tpu.memory_space<vmem>>, vector<2x1x256xf32>
    %199 = vector.shape_cast %198 : vector<2x1x256xf32> to vector<2x256xf32>
    %cst_48 = arith.constant dense<0.000000e+00> : vector<2x256xf32>
    %200 = tpu.matmul %156, %3, %cst_48 {dimension_numbers = #tpu.dot_dimension_numbers<[1], [0], [0], [1], [0, 0, 1, 1], [], []>} : vector<2x64xf32>, vector<64x256xf32>, vector<2x256xf32> -> vector<2x256xf32>
    %201 = arith.addf %199, %200 : vector<2x256xf32>
    %202 = vector.extract_strided_slice %201 {offsets = [0, 0], sizes = [2, 192], strides = [1, 1]} : vector<2x256xf32> to vector<2x192xf32>
    %203 = arith.negf %202 : vector<2x192xf32>
    %204 = math.exp %203 : vector<2x192xf32>
    %cst_49 = arith.constant 1.000000e+00 : f32
    %205 = vector.broadcast %cst_49 : f32 to vector<2x192xf32>
    %206 = arith.addf %205, %204 : vector<2x192xf32>
    %207 = arith.divf %205, %206 : vector<2x192xf32>
    %208 = vector.extract_strided_slice %201 {offsets = [0, 192], sizes = [2, 64], strides = [1, 1]} : vector<2x256xf32> to vector<2x64xf32>
    %209 = math.tanh %208 : vector<2x64xf32>
    %210 = vector.extract_strided_slice %207 {offsets = [0, 0], sizes = [2, 64], strides = [1, 1]} : vector<2x192xf32> to vector<2x64xf32>
    %211 = vector.extract_strided_slice %207 {offsets = [0, 64], sizes = [2, 64], strides = [1, 1]} : vector<2x192xf32> to vector<2x64xf32>
    %212 = vector.extract_strided_slice %207 {offsets = [0, 128], sizes = [2, 64], strides = [1, 1]} : vector<2x192xf32> to vector<2x64xf32>
    %213 = arith.mulf %211, %154 : vector<2x64xf32>
    %214 = arith.mulf %210, %209 : vector<2x64xf32>
    %215 = arith.addf %213, %214 : vector<2x64xf32>
    %216 = math.tanh %215 : vector<2x64xf32>
    %217 = arith.mulf %212, %216 : vector<2x64xf32>
    %218 = tpu.concatenate %217, %176 in 1 : vector<2x64xf32>, vector<2x64xf32> -> vector<2x128xf32>
    %cst_50 = arith.constant dense<0.000000e+00> : vector<2x256xf32>
    %219 = tpu.matmul %218, %4, %cst_50 {dimension_numbers = #tpu.dot_dimension_numbers<[1], [0], [0], [1], [0, 0, 1, 1], [], []>} : vector<2x128xf32>, vector<128x256xf32>, vector<2x256xf32> -> vector<2x256xf32>
    %220 = vector.broadcast %5 : vector<1x256xf32> to vector<2x256xf32>
    %221 = arith.addf %219, %220 : vector<2x256xf32>
    %222 = vector.extract_strided_slice %221 {offsets = [0, 0], sizes = [2, 192], strides = [1, 1]} : vector<2x256xf32> to vector<2x192xf32>
    %223 = arith.negf %222 : vector<2x192xf32>
    %224 = math.exp %223 : vector<2x192xf32>
    %cst_51 = arith.constant 1.000000e+00 : f32
    %225 = vector.broadcast %cst_51 : f32 to vector<2x192xf32>
    %226 = arith.addf %225, %224 : vector<2x192xf32>
    %227 = arith.divf %225, %226 : vector<2x192xf32>
    %228 = vector.extract_strided_slice %221 {offsets = [0, 192], sizes = [2, 64], strides = [1, 1]} : vector<2x256xf32> to vector<2x64xf32>
    %229 = math.tanh %228 : vector<2x64xf32>
    %230 = vector.extract_strided_slice %227 {offsets = [0, 0], sizes = [2, 64], strides = [1, 1]} : vector<2x192xf32> to vector<2x64xf32>
    %231 = vector.extract_strided_slice %227 {offsets = [0, 64], sizes = [2, 64], strides = [1, 1]} : vector<2x192xf32> to vector<2x64xf32>
    %232 = vector.extract_strided_slice %227 {offsets = [0, 128], sizes = [2, 64], strides = [1, 1]} : vector<2x192xf32> to vector<2x64xf32>
    %233 = arith.mulf %231, %174 : vector<2x64xf32>
    %234 = arith.mulf %230, %229 : vector<2x64xf32>
    %235 = arith.addf %233, %234 : vector<2x64xf32>
    %236 = math.tanh %235 : vector<2x64xf32>
    %237 = arith.mulf %232, %236 : vector<2x64xf32>
    %238 = tpu.concatenate %237, %196 in 1 : vector<2x64xf32>, vector<2x128xf32> -> vector<2x192xf32>
    %cst_52 = arith.constant dense<0.000000e+00> : vector<2x512xf32>
    %239 = tpu.matmul %238, %6, %cst_52 {dimension_numbers = #tpu.dot_dimension_numbers<[1], [0], [0], [1], [0, 0, 1, 1], [], []>} : vector<2x192xf32>, vector<192x512xf32>, vector<2x512xf32> -> vector<2x512xf32>
    %240 = vector.broadcast %7 : vector<1x512xf32> to vector<2x512xf32>
    %241 = arith.addf %239, %240 : vector<2x512xf32>
    %242 = vector.extract_strided_slice %241 {offsets = [0, 0], sizes = [2, 384], strides = [1, 1]} : vector<2x512xf32> to vector<2x384xf32>
    %243 = arith.negf %242 : vector<2x384xf32>
    %244 = math.exp %243 : vector<2x384xf32>
    %cst_53 = arith.constant 1.000000e+00 : f32
    %245 = vector.broadcast %cst_53 : f32 to vector<2x384xf32>
    %246 = arith.addf %245, %244 : vector<2x384xf32>
    %247 = arith.divf %245, %246 : vector<2x384xf32>
    %248 = vector.extract_strided_slice %241 {offsets = [0, 384], sizes = [2, 128], strides = [1, 1]} : vector<2x512xf32> to vector<2x128xf32>
    %249 = math.tanh %248 : vector<2x128xf32>
    %250 = vector.extract_strided_slice %247 {offsets = [0, 0], sizes = [2, 128], strides = [1, 1]} : vector<2x384xf32> to vector<2x128xf32>
    %251 = vector.extract_strided_slice %247 {offsets = [0, 128], sizes = [2, 128], strides = [1, 1]} : vector<2x384xf32> to vector<2x128xf32>
    %252 = vector.extract_strided_slice %247 {offsets = [0, 256], sizes = [2, 128], strides = [1, 1]} : vector<2x384xf32> to vector<2x128xf32>
    %253 = arith.mulf %251, %194 : vector<2x128xf32>
    %254 = arith.mulf %250, %249 : vector<2x128xf32>
    %255 = arith.addf %253, %254 : vector<2x128xf32>
    %256 = math.tanh %255 : vector<2x128xf32>
    %257 = arith.mulf %252, %256 : vector<2x128xf32>
    %c4_i32 = arith.constant 4 : i32
    %c0_54 = arith.constant 0 : index
    %258 = arith.index_cast %c4_i32 : i32 to index
    %c0_55 = arith.constant 0 : index
    %259 = vector.load %arg1[%c0_54, %258, %c0_55] : memref<2x8x256xf32, #tpu.memory_space<vmem>>, vector<2x1x256xf32>
    %260 = vector.shape_cast %259 : vector<2x1x256xf32> to vector<2x256xf32>
    %cst_56 = arith.constant dense<0.000000e+00> : vector<2x256xf32>
    %261 = tpu.matmul %217, %3, %cst_56 {dimension_numbers = #tpu.dot_dimension_numbers<[1], [0], [0], [1], [0, 0, 1, 1], [], []>} : vector<2x64xf32>, vector<64x256xf32>, vector<2x256xf32> -> vector<2x256xf32>
    %262 = arith.addf %260, %261 : vector<2x256xf32>
    %263 = vector.extract_strided_slice %262 {offsets = [0, 0], sizes = [2, 192], strides = [1, 1]} : vector<2x256xf32> to vector<2x192xf32>
    %264 = arith.negf %263 : vector<2x192xf32>
    %265 = math.exp %264 : vector<2x192xf32>
    %cst_57 = arith.constant 1.000000e+00 : f32
    %266 = vector.broadcast %cst_57 : f32 to vector<2x192xf32>
    %267 = arith.addf %266, %265 : vector<2x192xf32>
    %268 = arith.divf %266, %267 : vector<2x192xf32>
    %269 = vector.extract_strided_slice %262 {offsets = [0, 192], sizes = [2, 64], strides = [1, 1]} : vector<2x256xf32> to vector<2x64xf32>
    %270 = math.tanh %269 : vector<2x64xf32>
    %271 = vector.extract_strided_slice %268 {offsets = [0, 0], sizes = [2, 64], strides = [1, 1]} : vector<2x192xf32> to vector<2x64xf32>
    %272 = vector.extract_strided_slice %268 {offsets = [0, 64], sizes = [2, 64], strides = [1, 1]} : vector<2x192xf32> to vector<2x64xf32>
    %273 = vector.extract_strided_slice %268 {offsets = [0, 128], sizes = [2, 64], strides = [1, 1]} : vector<2x192xf32> to vector<2x64xf32>
    %274 = arith.mulf %272, %215 : vector<2x64xf32>
    %275 = arith.mulf %271, %270 : vector<2x64xf32>
    %276 = arith.addf %274, %275 : vector<2x64xf32>
    %277 = math.tanh %276 : vector<2x64xf32>
    %278 = arith.mulf %273, %277 : vector<2x64xf32>
    %279 = tpu.concatenate %278, %237 in 1 : vector<2x64xf32>, vector<2x64xf32> -> vector<2x128xf32>
    %cst_58 = arith.constant dense<0.000000e+00> : vector<2x256xf32>
    %280 = tpu.matmul %279, %4, %cst_58 {dimension_numbers = #tpu.dot_dimension_numbers<[1], [0], [0], [1], [0, 0, 1, 1], [], []>} : vector<2x128xf32>, vector<128x256xf32>, vector<2x256xf32> -> vector<2x256xf32>
    %281 = vector.broadcast %5 : vector<1x256xf32> to vector<2x256xf32>
    %282 = arith.addf %280, %281 : vector<2x256xf32>
    %283 = vector.extract_strided_slice %282 {offsets = [0, 0], sizes = [2, 192], strides = [1, 1]} : vector<2x256xf32> to vector<2x192xf32>
    %284 = arith.negf %283 : vector<2x192xf32>
    %285 = math.exp %284 : vector<2x192xf32>
    %cst_59 = arith.constant 1.000000e+00 : f32
    %286 = vector.broadcast %cst_59 : f32 to vector<2x192xf32>
    %287 = arith.addf %286, %285 : vector<2x192xf32>
    %288 = arith.divf %286, %287 : vector<2x192xf32>
    %289 = vector.extract_strided_slice %282 {offsets = [0, 192], sizes = [2, 64], strides = [1, 1]} : vector<2x256xf32> to vector<2x64xf32>
    %290 = math.tanh %289 : vector<2x64xf32>
    %291 = vector.extract_strided_slice %288 {offsets = [0, 0], sizes = [2, 64], strides = [1, 1]} : vector<2x192xf32> to vector<2x64xf32>
    %292 = vector.extract_strided_slice %288 {offsets = [0, 64], sizes = [2, 64], strides = [1, 1]} : vector<2x192xf32> to vector<2x64xf32>
    %293 = vector.extract_strided_slice %288 {offsets = [0, 128], sizes = [2, 64], strides = [1, 1]} : vector<2x192xf32> to vector<2x64xf32>
    %294 = arith.mulf %292, %235 : vector<2x64xf32>
    %295 = arith.mulf %291, %290 : vector<2x64xf32>
    %296 = arith.addf %294, %295 : vector<2x64xf32>
    %297 = math.tanh %296 : vector<2x64xf32>
    %298 = arith.mulf %293, %297 : vector<2x64xf32>
    %299 = tpu.concatenate %298, %257 in 1 : vector<2x64xf32>, vector<2x128xf32> -> vector<2x192xf32>
    %cst_60 = arith.constant dense<0.000000e+00> : vector<2x512xf32>
    %300 = tpu.matmul %299, %6, %cst_60 {dimension_numbers = #tpu.dot_dimension_numbers<[1], [0], [0], [1], [0, 0, 1, 1], [], []>} : vector<2x192xf32>, vector<192x512xf32>, vector<2x512xf32> -> vector<2x512xf32>
    %301 = vector.broadcast %7 : vector<1x512xf32> to vector<2x512xf32>
    %302 = arith.addf %300, %301 : vector<2x512xf32>
    %303 = vector.extract_strided_slice %302 {offsets = [0, 0], sizes = [2, 384], strides = [1, 1]} : vector<2x512xf32> to vector<2x384xf32>
    %304 = arith.negf %303 : vector<2x384xf32>
    %305 = math.exp %304 : vector<2x384xf32>
    %cst_61 = arith.constant 1.000000e+00 : f32
    %306 = vector.broadcast %cst_61 : f32 to vector<2x384xf32>
    %307 = arith.addf %306, %305 : vector<2x384xf32>
    %308 = arith.divf %306, %307 : vector<2x384xf32>
    %309 = vector.extract_strided_slice %302 {offsets = [0, 384], sizes = [2, 128], strides = [1, 1]} : vector<2x512xf32> to vector<2x128xf32>
    %310 = math.tanh %309 : vector<2x128xf32>
    %311 = vector.extract_strided_slice %308 {offsets = [0, 0], sizes = [2, 128], strides = [1, 1]} : vector<2x384xf32> to vector<2x128xf32>
    %312 = vector.extract_strided_slice %308 {offsets = [0, 128], sizes = [2, 128], strides = [1, 1]} : vector<2x384xf32> to vector<2x128xf32>
    %313 = vector.extract_strided_slice %308 {offsets = [0, 256], sizes = [2, 128], strides = [1, 1]} : vector<2x384xf32> to vector<2x128xf32>
    %314 = arith.mulf %312, %255 : vector<2x128xf32>
    %315 = arith.mulf %311, %310 : vector<2x128xf32>
    %316 = arith.addf %314, %315 : vector<2x128xf32>
    %317 = math.tanh %316 : vector<2x128xf32>
    %318 = arith.mulf %313, %317 : vector<2x128xf32>
    %c5_i32 = arith.constant 5 : i32
    %c0_62 = arith.constant 0 : index
    %319 = arith.index_cast %c5_i32 : i32 to index
    %c0_63 = arith.constant 0 : index
    %320 = vector.load %arg1[%c0_62, %319, %c0_63] : memref<2x8x256xf32, #tpu.memory_space<vmem>>, vector<2x1x256xf32>
    %321 = vector.shape_cast %320 : vector<2x1x256xf32> to vector<2x256xf32>
    %cst_64 = arith.constant dense<0.000000e+00> : vector<2x256xf32>
    %322 = tpu.matmul %278, %3, %cst_64 {dimension_numbers = #tpu.dot_dimension_numbers<[1], [0], [0], [1], [0, 0, 1, 1], [], []>} : vector<2x64xf32>, vector<64x256xf32>, vector<2x256xf32> -> vector<2x256xf32>
    %323 = arith.addf %321, %322 : vector<2x256xf32>
    %324 = vector.extract_strided_slice %323 {offsets = [0, 0], sizes = [2, 192], strides = [1, 1]} : vector<2x256xf32> to vector<2x192xf32>
    %325 = arith.negf %324 : vector<2x192xf32>
    %326 = math.exp %325 : vector<2x192xf32>
    %cst_65 = arith.constant 1.000000e+00 : f32
    %327 = vector.broadcast %cst_65 : f32 to vector<2x192xf32>
    %328 = arith.addf %327, %326 : vector<2x192xf32>
    %329 = arith.divf %327, %328 : vector<2x192xf32>
    %330 = vector.extract_strided_slice %323 {offsets = [0, 192], sizes = [2, 64], strides = [1, 1]} : vector<2x256xf32> to vector<2x64xf32>
    %331 = math.tanh %330 : vector<2x64xf32>
    %332 = vector.extract_strided_slice %329 {offsets = [0, 0], sizes = [2, 64], strides = [1, 1]} : vector<2x192xf32> to vector<2x64xf32>
    %333 = vector.extract_strided_slice %329 {offsets = [0, 64], sizes = [2, 64], strides = [1, 1]} : vector<2x192xf32> to vector<2x64xf32>
    %334 = vector.extract_strided_slice %329 {offsets = [0, 128], sizes = [2, 64], strides = [1, 1]} : vector<2x192xf32> to vector<2x64xf32>
    %335 = arith.mulf %333, %276 : vector<2x64xf32>
    %336 = arith.mulf %332, %331 : vector<2x64xf32>
    %337 = arith.addf %335, %336 : vector<2x64xf32>
    %338 = math.tanh %337 : vector<2x64xf32>
    %339 = arith.mulf %334, %338 : vector<2x64xf32>
    %340 = tpu.concatenate %339, %298 in 1 : vector<2x64xf32>, vector<2x64xf32> -> vector<2x128xf32>
    %cst_66 = arith.constant dense<0.000000e+00> : vector<2x256xf32>
    %341 = tpu.matmul %340, %4, %cst_66 {dimension_numbers = #tpu.dot_dimension_numbers<[1], [0], [0], [1], [0, 0, 1, 1], [], []>} : vector<2x128xf32>, vector<128x256xf32>, vector<2x256xf32> -> vector<2x256xf32>
    %342 = vector.broadcast %5 : vector<1x256xf32> to vector<2x256xf32>
    %343 = arith.addf %341, %342 : vector<2x256xf32>
    %344 = vector.extract_strided_slice %343 {offsets = [0, 0], sizes = [2, 192], strides = [1, 1]} : vector<2x256xf32> to vector<2x192xf32>
    %345 = arith.negf %344 : vector<2x192xf32>
    %346 = math.exp %345 : vector<2x192xf32>
    %cst_67 = arith.constant 1.000000e+00 : f32
    %347 = vector.broadcast %cst_67 : f32 to vector<2x192xf32>
    %348 = arith.addf %347, %346 : vector<2x192xf32>
    %349 = arith.divf %347, %348 : vector<2x192xf32>
    %350 = vector.extract_strided_slice %343 {offsets = [0, 192], sizes = [2, 64], strides = [1, 1]} : vector<2x256xf32> to vector<2x64xf32>
    %351 = math.tanh %350 : vector<2x64xf32>
    %352 = vector.extract_strided_slice %349 {offsets = [0, 0], sizes = [2, 64], strides = [1, 1]} : vector<2x192xf32> to vector<2x64xf32>
    %353 = vector.extract_strided_slice %349 {offsets = [0, 64], sizes = [2, 64], strides = [1, 1]} : vector<2x192xf32> to vector<2x64xf32>
    %354 = vector.extract_strided_slice %349 {offsets = [0, 128], sizes = [2, 64], strides = [1, 1]} : vector<2x192xf32> to vector<2x64xf32>
    %355 = arith.mulf %353, %296 : vector<2x64xf32>
    %356 = arith.mulf %352, %351 : vector<2x64xf32>
    %357 = arith.addf %355, %356 : vector<2x64xf32>
    %358 = math.tanh %357 : vector<2x64xf32>
    %359 = arith.mulf %354, %358 : vector<2x64xf32>
    %360 = tpu.concatenate %359, %318 in 1 : vector<2x64xf32>, vector<2x128xf32> -> vector<2x192xf32>
    %cst_68 = arith.constant dense<0.000000e+00> : vector<2x512xf32>
    %361 = tpu.matmul %360, %6, %cst_68 {dimension_numbers = #tpu.dot_dimension_numbers<[1], [0], [0], [1], [0, 0, 1, 1], [], []>} : vector<2x192xf32>, vector<192x512xf32>, vector<2x512xf32> -> vector<2x512xf32>
    %362 = vector.broadcast %7 : vector<1x512xf32> to vector<2x512xf32>
    %363 = arith.addf %361, %362 : vector<2x512xf32>
    %364 = vector.extract_strided_slice %363 {offsets = [0, 0], sizes = [2, 384], strides = [1, 1]} : vector<2x512xf32> to vector<2x384xf32>
    %365 = arith.negf %364 : vector<2x384xf32>
    %366 = math.exp %365 : vector<2x384xf32>
    %cst_69 = arith.constant 1.000000e+00 : f32
    %367 = vector.broadcast %cst_69 : f32 to vector<2x384xf32>
    %368 = arith.addf %367, %366 : vector<2x384xf32>
    %369 = arith.divf %367, %368 : vector<2x384xf32>
    %370 = vector.extract_strided_slice %363 {offsets = [0, 384], sizes = [2, 128], strides = [1, 1]} : vector<2x512xf32> to vector<2x128xf32>
    %371 = math.tanh %370 : vector<2x128xf32>
    %372 = vector.extract_strided_slice %369 {offsets = [0, 0], sizes = [2, 128], strides = [1, 1]} : vector<2x384xf32> to vector<2x128xf32>
    %373 = vector.extract_strided_slice %369 {offsets = [0, 128], sizes = [2, 128], strides = [1, 1]} : vector<2x384xf32> to vector<2x128xf32>
    %374 = vector.extract_strided_slice %369 {offsets = [0, 256], sizes = [2, 128], strides = [1, 1]} : vector<2x384xf32> to vector<2x128xf32>
    %375 = arith.mulf %373, %316 : vector<2x128xf32>
    %376 = arith.mulf %372, %371 : vector<2x128xf32>
    %377 = arith.addf %375, %376 : vector<2x128xf32>
    %378 = math.tanh %377 : vector<2x128xf32>
    %379 = arith.mulf %374, %378 : vector<2x128xf32>
    %c6_i32 = arith.constant 6 : i32
    %c0_70 = arith.constant 0 : index
    %380 = arith.index_cast %c6_i32 : i32 to index
    %c0_71 = arith.constant 0 : index
    %381 = vector.load %arg1[%c0_70, %380, %c0_71] : memref<2x8x256xf32, #tpu.memory_space<vmem>>, vector<2x1x256xf32>
    %382 = vector.shape_cast %381 : vector<2x1x256xf32> to vector<2x256xf32>
    %cst_72 = arith.constant dense<0.000000e+00> : vector<2x256xf32>
    %383 = tpu.matmul %339, %3, %cst_72 {dimension_numbers = #tpu.dot_dimension_numbers<[1], [0], [0], [1], [0, 0, 1, 1], [], []>} : vector<2x64xf32>, vector<64x256xf32>, vector<2x256xf32> -> vector<2x256xf32>
    %384 = arith.addf %382, %383 : vector<2x256xf32>
    %385 = vector.extract_strided_slice %384 {offsets = [0, 0], sizes = [2, 192], strides = [1, 1]} : vector<2x256xf32> to vector<2x192xf32>
    %386 = arith.negf %385 : vector<2x192xf32>
    %387 = math.exp %386 : vector<2x192xf32>
    %cst_73 = arith.constant 1.000000e+00 : f32
    %388 = vector.broadcast %cst_73 : f32 to vector<2x192xf32>
    %389 = arith.addf %388, %387 : vector<2x192xf32>
    %390 = arith.divf %388, %389 : vector<2x192xf32>
    %391 = vector.extract_strided_slice %384 {offsets = [0, 192], sizes = [2, 64], strides = [1, 1]} : vector<2x256xf32> to vector<2x64xf32>
    %392 = math.tanh %391 : vector<2x64xf32>
    %393 = vector.extract_strided_slice %390 {offsets = [0, 0], sizes = [2, 64], strides = [1, 1]} : vector<2x192xf32> to vector<2x64xf32>
    %394 = vector.extract_strided_slice %390 {offsets = [0, 64], sizes = [2, 64], strides = [1, 1]} : vector<2x192xf32> to vector<2x64xf32>
    %395 = vector.extract_strided_slice %390 {offsets = [0, 128], sizes = [2, 64], strides = [1, 1]} : vector<2x192xf32> to vector<2x64xf32>
    %396 = arith.mulf %394, %337 : vector<2x64xf32>
    %397 = arith.mulf %393, %392 : vector<2x64xf32>
    %398 = arith.addf %396, %397 : vector<2x64xf32>
    %399 = math.tanh %398 : vector<2x64xf32>
    %400 = arith.mulf %395, %399 : vector<2x64xf32>
    %401 = tpu.concatenate %400, %359 in 1 : vector<2x64xf32>, vector<2x64xf32> -> vector<2x128xf32>
    %cst_74 = arith.constant dense<0.000000e+00> : vector<2x256xf32>
    %402 = tpu.matmul %401, %4, %cst_74 {dimension_numbers = #tpu.dot_dimension_numbers<[1], [0], [0], [1], [0, 0, 1, 1], [], []>} : vector<2x128xf32>, vector<128x256xf32>, vector<2x256xf32> -> vector<2x256xf32>
    %403 = vector.broadcast %5 : vector<1x256xf32> to vector<2x256xf32>
    %404 = arith.addf %402, %403 : vector<2x256xf32>
    %405 = vector.extract_strided_slice %404 {offsets = [0, 0], sizes = [2, 192], strides = [1, 1]} : vector<2x256xf32> to vector<2x192xf32>
    %406 = arith.negf %405 : vector<2x192xf32>
    %407 = math.exp %406 : vector<2x192xf32>
    %cst_75 = arith.constant 1.000000e+00 : f32
    %408 = vector.broadcast %cst_75 : f32 to vector<2x192xf32>
    %409 = arith.addf %408, %407 : vector<2x192xf32>
    %410 = arith.divf %408, %409 : vector<2x192xf32>
    %411 = vector.extract_strided_slice %404 {offsets = [0, 192], sizes = [2, 64], strides = [1, 1]} : vector<2x256xf32> to vector<2x64xf32>
    %412 = math.tanh %411 : vector<2x64xf32>
    %413 = vector.extract_strided_slice %410 {offsets = [0, 0], sizes = [2, 64], strides = [1, 1]} : vector<2x192xf32> to vector<2x64xf32>
    %414 = vector.extract_strided_slice %410 {offsets = [0, 64], sizes = [2, 64], strides = [1, 1]} : vector<2x192xf32> to vector<2x64xf32>
    %415 = vector.extract_strided_slice %410 {offsets = [0, 128], sizes = [2, 64], strides = [1, 1]} : vector<2x192xf32> to vector<2x64xf32>
    %416 = arith.mulf %414, %357 : vector<2x64xf32>
    %417 = arith.mulf %413, %412 : vector<2x64xf32>
    %418 = arith.addf %416, %417 : vector<2x64xf32>
    %419 = math.tanh %418 : vector<2x64xf32>
    %420 = arith.mulf %415, %419 : vector<2x64xf32>
    %421 = tpu.concatenate %420, %379 in 1 : vector<2x64xf32>, vector<2x128xf32> -> vector<2x192xf32>
    %cst_76 = arith.constant dense<0.000000e+00> : vector<2x512xf32>
    %422 = tpu.matmul %421, %6, %cst_76 {dimension_numbers = #tpu.dot_dimension_numbers<[1], [0], [0], [1], [0, 0, 1, 1], [], []>} : vector<2x192xf32>, vector<192x512xf32>, vector<2x512xf32> -> vector<2x512xf32>
    %423 = vector.broadcast %7 : vector<1x512xf32> to vector<2x512xf32>
    %424 = arith.addf %422, %423 : vector<2x512xf32>
    %425 = vector.extract_strided_slice %424 {offsets = [0, 0], sizes = [2, 384], strides = [1, 1]} : vector<2x512xf32> to vector<2x384xf32>
    %426 = arith.negf %425 : vector<2x384xf32>
    %427 = math.exp %426 : vector<2x384xf32>
    %cst_77 = arith.constant 1.000000e+00 : f32
    %428 = vector.broadcast %cst_77 : f32 to vector<2x384xf32>
    %429 = arith.addf %428, %427 : vector<2x384xf32>
    %430 = arith.divf %428, %429 : vector<2x384xf32>
    %431 = vector.extract_strided_slice %424 {offsets = [0, 384], sizes = [2, 128], strides = [1, 1]} : vector<2x512xf32> to vector<2x128xf32>
    %432 = math.tanh %431 : vector<2x128xf32>
    %433 = vector.extract_strided_slice %430 {offsets = [0, 0], sizes = [2, 128], strides = [1, 1]} : vector<2x384xf32> to vector<2x128xf32>
    %434 = vector.extract_strided_slice %430 {offsets = [0, 128], sizes = [2, 128], strides = [1, 1]} : vector<2x384xf32> to vector<2x128xf32>
    %435 = vector.extract_strided_slice %430 {offsets = [0, 256], sizes = [2, 128], strides = [1, 1]} : vector<2x384xf32> to vector<2x128xf32>
    %436 = arith.mulf %434, %377 : vector<2x128xf32>
    %437 = arith.mulf %433, %432 : vector<2x128xf32>
    %438 = arith.addf %436, %437 : vector<2x128xf32>
    %439 = math.tanh %438 : vector<2x128xf32>
    %440 = arith.mulf %435, %439 : vector<2x128xf32>
    %c7_i32 = arith.constant 7 : i32
    %c0_78 = arith.constant 0 : index
    %441 = arith.index_cast %c7_i32 : i32 to index
    %c0_79 = arith.constant 0 : index
    %442 = vector.load %arg1[%c0_78, %441, %c0_79] : memref<2x8x256xf32, #tpu.memory_space<vmem>>, vector<2x1x256xf32>
    %443 = vector.shape_cast %442 : vector<2x1x256xf32> to vector<2x256xf32>
    %cst_80 = arith.constant dense<0.000000e+00> : vector<2x256xf32>
    %444 = tpu.matmul %400, %3, %cst_80 {dimension_numbers = #tpu.dot_dimension_numbers<[1], [0], [0], [1], [0, 0, 1, 1], [], []>} : vector<2x64xf32>, vector<64x256xf32>, vector<2x256xf32> -> vector<2x256xf32>
    %445 = arith.addf %443, %444 : vector<2x256xf32>
    %446 = vector.extract_strided_slice %445 {offsets = [0, 0], sizes = [2, 192], strides = [1, 1]} : vector<2x256xf32> to vector<2x192xf32>
    %447 = arith.negf %446 : vector<2x192xf32>
    %448 = math.exp %447 : vector<2x192xf32>
    %cst_81 = arith.constant 1.000000e+00 : f32
    %449 = vector.broadcast %cst_81 : f32 to vector<2x192xf32>
    %450 = arith.addf %449, %448 : vector<2x192xf32>
    %451 = arith.divf %449, %450 : vector<2x192xf32>
    %452 = vector.extract_strided_slice %445 {offsets = [0, 192], sizes = [2, 64], strides = [1, 1]} : vector<2x256xf32> to vector<2x64xf32>
    %453 = math.tanh %452 : vector<2x64xf32>
    %454 = vector.extract_strided_slice %451 {offsets = [0, 0], sizes = [2, 64], strides = [1, 1]} : vector<2x192xf32> to vector<2x64xf32>
    %455 = vector.extract_strided_slice %451 {offsets = [0, 64], sizes = [2, 64], strides = [1, 1]} : vector<2x192xf32> to vector<2x64xf32>
    %456 = vector.extract_strided_slice %451 {offsets = [0, 128], sizes = [2, 64], strides = [1, 1]} : vector<2x192xf32> to vector<2x64xf32>
    %457 = arith.mulf %455, %398 : vector<2x64xf32>
    %458 = arith.mulf %454, %453 : vector<2x64xf32>
    %459 = arith.addf %457, %458 : vector<2x64xf32>
    %460 = math.tanh %459 : vector<2x64xf32>
    %461 = arith.mulf %456, %460 : vector<2x64xf32>
    %462 = tpu.concatenate %461, %420 in 1 : vector<2x64xf32>, vector<2x64xf32> -> vector<2x128xf32>
    %cst_82 = arith.constant dense<0.000000e+00> : vector<2x256xf32>
    %463 = tpu.matmul %462, %4, %cst_82 {dimension_numbers = #tpu.dot_dimension_numbers<[1], [0], [0], [1], [0, 0, 1, 1], [], []>} : vector<2x128xf32>, vector<128x256xf32>, vector<2x256xf32> -> vector<2x256xf32>
    %464 = vector.broadcast %5 : vector<1x256xf32> to vector<2x256xf32>
    %465 = arith.addf %463, %464 : vector<2x256xf32>
    %466 = vector.extract_strided_slice %465 {offsets = [0, 0], sizes = [2, 192], strides = [1, 1]} : vector<2x256xf32> to vector<2x192xf32>
    %467 = arith.negf %466 : vector<2x192xf32>
    %468 = math.exp %467 : vector<2x192xf32>
    %cst_83 = arith.constant 1.000000e+00 : f32
    %469 = vector.broadcast %cst_83 : f32 to vector<2x192xf32>
    %470 = arith.addf %469, %468 : vector<2x192xf32>
    %471 = arith.divf %469, %470 : vector<2x192xf32>
    %472 = vector.extract_strided_slice %465 {offsets = [0, 192], sizes = [2, 64], strides = [1, 1]} : vector<2x256xf32> to vector<2x64xf32>
    %473 = math.tanh %472 : vector<2x64xf32>
    %474 = vector.extract_strided_slice %471 {offsets = [0, 0], sizes = [2, 64], strides = [1, 1]} : vector<2x192xf32> to vector<2x64xf32>
    %475 = vector.extract_strided_slice %471 {offsets = [0, 64], sizes = [2, 64], strides = [1, 1]} : vector<2x192xf32> to vector<2x64xf32>
    %476 = vector.extract_strided_slice %471 {offsets = [0, 128], sizes = [2, 64], strides = [1, 1]} : vector<2x192xf32> to vector<2x64xf32>
    %477 = arith.mulf %475, %418 : vector<2x64xf32>
    %478 = arith.mulf %474, %473 : vector<2x64xf32>
    %479 = arith.addf %477, %478 : vector<2x64xf32>
    %480 = math.tanh %479 : vector<2x64xf32>
    %481 = arith.mulf %476, %480 : vector<2x64xf32>
    %482 = tpu.concatenate %481, %440 in 1 : vector<2x64xf32>, vector<2x128xf32> -> vector<2x192xf32>
    %cst_84 = arith.constant dense<0.000000e+00> : vector<2x512xf32>
    %483 = tpu.matmul %482, %6, %cst_84 {dimension_numbers = #tpu.dot_dimension_numbers<[1], [0], [0], [1], [0, 0, 1, 1], [], []>} : vector<2x192xf32>, vector<192x512xf32>, vector<2x512xf32> -> vector<2x512xf32>
    %484 = vector.broadcast %7 : vector<1x512xf32> to vector<2x512xf32>
    %485 = arith.addf %483, %484 : vector<2x512xf32>
    %486 = vector.extract_strided_slice %485 {offsets = [0, 0], sizes = [2, 384], strides = [1, 1]} : vector<2x512xf32> to vector<2x384xf32>
    %487 = arith.negf %486 : vector<2x384xf32>
    %488 = math.exp %487 : vector<2x384xf32>
    %cst_85 = arith.constant 1.000000e+00 : f32
    %489 = vector.broadcast %cst_85 : f32 to vector<2x384xf32>
    %490 = arith.addf %489, %488 : vector<2x384xf32>
    %491 = arith.divf %489, %490 : vector<2x384xf32>
    %492 = vector.extract_strided_slice %485 {offsets = [0, 384], sizes = [2, 128], strides = [1, 1]} : vector<2x512xf32> to vector<2x128xf32>
    %493 = math.tanh %492 : vector<2x128xf32>
    %494 = vector.extract_strided_slice %491 {offsets = [0, 0], sizes = [2, 128], strides = [1, 1]} : vector<2x384xf32> to vector<2x128xf32>
    %495 = vector.extract_strided_slice %491 {offsets = [0, 128], sizes = [2, 128], strides = [1, 1]} : vector<2x384xf32> to vector<2x128xf32>
    %496 = vector.extract_strided_slice %491 {offsets = [0, 256], sizes = [2, 128], strides = [1, 1]} : vector<2x384xf32> to vector<2x128xf32>
    %497 = arith.mulf %495, %438 : vector<2x128xf32>
    %498 = arith.mulf %494, %493 : vector<2x128xf32>
    %499 = arith.addf %497, %498 : vector<2x128xf32>
    %500 = math.tanh %499 : vector<2x128xf32>
    %501 = arith.mulf %496, %500 : vector<2x128xf32>
    %c8_i32 = arith.constant 8 : i32
    %c0_86 = arith.constant 0 : index
    %c0_87 = arith.constant 0 : index
    %502 = vector.load %arg10[%c0_86, %c0_87] : memref<2x64xf32, #tpu.memory_space<vmem>>, vector<2x64xf32>
    tpu.vector_store %arg10[%c0_86, %c0_87], %461 {strides = array<i32>} : memref<2x64xf32, #tpu.memory_space<vmem>>, vector<2x64xf32>,
    %c0_88 = arith.constant 0 : index
    %c0_89 = arith.constant 0 : index
    %503 = vector.load %arg11[%c0_88, %c0_89] : memref<2x64xf32, #tpu.memory_space<vmem>>, vector<2x64xf32>
    tpu.vector_store %arg11[%c0_88, %c0_89], %459 {strides = array<i32>} : memref<2x64xf32, #tpu.memory_space<vmem>>, vector<2x64xf32>,
    %c0_90 = arith.constant 0 : index
    %c0_91 = arith.constant 0 : index
    %504 = vector.load %arg12[%c0_90, %c0_91] : memref<2x64xf32, #tpu.memory_space<vmem>>, vector<2x64xf32>
    tpu.vector_store %arg12[%c0_90, %c0_91], %481 {strides = array<i32>} : memref<2x64xf32, #tpu.memory_space<vmem>>, vector<2x64xf32>,
    %c0_92 = arith.constant 0 : index
    %c0_93 = arith.constant 0 : index
    %505 = vector.load %arg13[%c0_92, %c0_93] : memref<2x64xf32, #tpu.memory_space<vmem>>, vector<2x64xf32>
    tpu.vector_store %arg13[%c0_92, %c0_93], %479 {strides = array<i32>} : memref<2x64xf32, #tpu.memory_space<vmem>>, vector<2x64xf32>,
    %c0_94 = arith.constant 0 : index
    %c0_95 = arith.constant 0 : index
    %506 = vector.load %arg14[%c0_94, %c0_95] : memref<2x128xf32, #tpu.memory_space<vmem>>, vector<2x128xf32>
    tpu.vector_store %arg14[%c0_94, %c0_95], %501 {strides = array<i32>} : memref<2x128xf32, #tpu.memory_space<vmem>>, vector<2x128xf32>,
    %c0_96 = arith.constant 0 : index
    %c0_97 = arith.constant 0 : index
    %507 = vector.load %arg15[%c0_96, %c0_97] : memref<2x128xf32, #tpu.memory_space<vmem>>, vector<2x128xf32>
    tpu.vector_store %arg15[%c0_96, %c0_97], %499 {strides = array<i32>} : memref<2x128xf32, #tpu.memory_space<vmem>>, vector<2x128xf32>,
    %c0_i32_98 = arith.constant 0 : i32
    %508 = arith.cmpi eq, %arg0, %c0_i32_98 : i32
    %509 = arith.extui %508 : i1 to i32
    %c0_i32_99 = arith.constant 0 : i32
    %510 = arith.cmpi ne, %509, %c0_i32_99 : i32
    scf.if %510 {
      %c0_100 = arith.constant 0 : index
      %c0_101 = arith.constant 0 : index
      %511 = vector.load %arg7[%c0_100, %c0_101] : memref<128x10xf32, #tpu.memory_space<vmem>>, vector<128x10xf32>
      %cst_102 = arith.constant dense<0.000000e+00> : vector<2x10xf32>
      %512 = tpu.matmul %501, %511, %cst_102 {dimension_numbers = #tpu.dot_dimension_numbers<[1], [0], [0], [1], [0, 0, 1, 1], [], []>} : vector<2x128xf32>, vector<128x10xf32>, vector<2x10xf32> -> vector<2x10xf32>
      %c0_103 = arith.constant 0 : index
      %c0_104 = arith.constant 0 : index
      %513 = vector.load %arg8[%c0_103, %c0_104] : memref<1x10xf32, #tpu.memory_space<vmem>>, vector<1x10xf32>
      %514 = vector.broadcast %513 : vector<1x10xf32> to vector<2x10xf32>
      %515 = arith.addf %512, %514 : vector<2x10xf32>
      %c0_105 = arith.constant 0 : index
      %c0_106 = arith.constant 0 : index
      %516 = vector.load %arg9[%c0_105, %c0_106] : memref<2x10xf32, #tpu.memory_space<vmem>>, vector<2x10xf32>
      tpu.vector_store %arg9[%c0_105, %c0_106], %515 {strides = array<i32>} : memref<2x10xf32, #tpu.memory_space<vmem>>, vector<2x10xf32>,
    } else {
    }
    return
  }
  func.func @transform_0(%arg0: i32) -> (i32, i32, i32) {
    %c0_i32 = arith.constant 0 : i32
    %c0_i32_0 = arith.constant 0 : i32
    %c0_i32_1 = arith.constant 0 : i32
    return %c0_i32, %arg0, %c0_i32_0 : i32, i32, i32
  }
  func.func @transform_1(%arg0: i32) -> (i32, i32) {
    %c0_i32 = arith.constant 0 : i32
    %c0_i32_0 = arith.constant 0 : i32
    %c0_i32_1 = arith.constant 0 : i32
    return %c0_i32, %c0_i32_0 : i32, i32
  }
  func.func @transform_2(%arg0: i32) -> (i32, i32) {
    %c0_i32 = arith.constant 0 : i32
    %c0_i32_0 = arith.constant 0 : i32
    %c0_i32_1 = arith.constant 0 : i32
    return %c0_i32, %c0_i32_0 : i32, i32
  }
  func.func @transform_3(%arg0: i32) -> (i32, i32) {
    %c0_i32 = arith.constant 0 : i32
    %c0_i32_0 = arith.constant 0 : i32
    %c0_i32_1 = arith.constant 0 : i32
    return %c0_i32, %c0_i32_0 : i32, i32
  }
  func.func @transform_4(%arg0: i32) -> (i32, i32) {
    %c0_i32 = arith.constant 0 : i32
    %c0_i32_0 = arith.constant 0 : i32
    %c0_i32_1 = arith.constant 0 : i32
    return %c0_i32, %c0_i32_0 : i32, i32
  }
  func.func @transform_5(%arg0: i32) -> (i32, i32) {
    %c0_i32 = arith.constant 0 : i32
    %c0_i32_0 = arith.constant 0 : i32
    %c0_i32_1 = arith.constant 0 : i32
    return %c0_i32, %c0_i32_0 : i32, i32
  }
  func.func @transform_6(%arg0: i32) -> (i32, i32) {
    %c0_i32 = arith.constant 0 : i32
    %c0_i32_0 = arith.constant 0 : i32
    %c0_i32_1 = arith.constant 0 : i32
    return %c0_i32, %c0_i32_0 : i32, i32
  }
  func.func @transform_7(%arg0: i32) -> (i32, i32) {
    %c0_i32 = arith.constant 0 : i32
    %c0_i32_0 = arith.constant 0 : i32
    %c0_i32_1 = arith.constant 0 : i32
    return %c0_i32, %c0_i32_0 : i32, i32
  }
  func.func @transform_8(%arg0: i32) -> (i32, i32) {
    %c0_i32 = arith.constant 0 : i32
    %c0_i32_0 = arith.constant 0 : i32
    %c0_i32_1 = arith.constant 0 : i32
    return %c0_i32, %c0_i32_0 : i32, i32
  }
}

</mosaic_0001>

<llo_original>
// kernel: tpu_custom_call.1
$region0: #{tpu_custom_call.1}
  #allocation0 [shape = 'u32[]', space=smem, size = 0x4, offset = 0x4, fixed_abs, tag = 'smem constant byte address 0x4 - core index']
  #allocation1 [shape = 'u32[72,128]{1,0:T(1,128)}', space=vmem, size = 0x9000, scoped, tag = 'internal scratch']
  #allocation2 [shape = 'f32[2,64]{1,0:T(2,128)}', space=vmem, size = 0x400, scoped, tag = 'scratch operand']
  #allocation3 [shape = 'f32[2,64]{1,0:T(2,128)}', space=vmem, size = 0x400, scoped, tag = 'scratch operand']
  #allocation4 [shape = 'f32[2,64]{1,0:T(2,128)}', space=vmem, size = 0x400, scoped, tag = 'scratch operand']
  #allocation5 [shape = 'f32[2,64]{1,0:T(2,128)}', space=vmem, size = 0x400, scoped, tag = 'scratch operand']
  #allocation6 [shape = 'f32[2,128]{1,0:T(2,128)}', space=vmem, size = 0x400, scoped, tag = 'scratch operand']
  #allocation7 [shape = 'f32[2,128]{1,0:T(2,128)}', space=vmem, size = 0x400, scoped, tag = 'scratch operand']
  %s0 = inlined_call_operand.hbm [shape: f32[2,8,256], index: 0, kind: input, shape index: {}]
  %s1 = inlined_call_operand.vmem [shape: f32[64,256], index: 1, kind: input, shape index: {}]
  %s2 = inlined_call_operand.hbm [shape: f32[128,256], index: 2, kind: input, shape index: {}]
  %s3 = inlined_call_operand.vmem [shape: f32[1,256], index: 3, kind: input, shape index: {}]
  %s4 = inlined_call_operand.hbm [shape: f32[192,512], index: 4, kind: input, shape index: {}]
  %s5 = inlined_call_operand.vmem [shape: f32[1,512], index: 5, kind: input, shape index: {}]
  %s6 = inlined_call_operand.vmem [shape: f32[128,10], index: 6, kind: input, shape index: {}]
  %s7 = inlined_call_operand.vmem [shape: f32[1,10], index: 7, kind: input, shape index: {}]
  %s8 = inlined_call_operand.hbm [shape: f32[2,10], index: 8, kind: output, shape index: {}]
  %s9 = sld [smem:[#allocation0]]
  $region62: #{tpu_custom_call.1} parent=0
    _
  %s11 = ssub.s32 1, %s9
  %s12 = scalar_select 0, %s11, %s9
  $region1: #{tpu_custom_call.1} parent=0
    #allocation8 [shape = 'u8[16384]{0}', space=vmem, size = 0x4000, scoped, tag = 'input window, operand 0, single buffered']
    #allocation9 [shape = 's32[1]{0}', space=sflag, size = 0x4, scoped, tag = 'scoped memory for tpu_custom_call.1']
    #allocation10 [shape = 's32[1]{0}', space=sflag, size = 0x4, scoped, tag = 'scoped memory for tpu_custom_call.1']
    #allocation11 [shape = 'u8[131072]{0}', space=vmem, size = 0x20000, scoped, tag = 'input window, operand 2, single buffered']
    #allocation12 [shape = 's32[1]{0}', space=sflag, size = 0x4, scoped, tag = 'scoped memory for tpu_custom_call.1']
    #allocation13 [shape = 'u8[393216]{0}', space=vmem, size = 0x60000, scoped, tag = 'input window, operand 4, single buffered']
    #allocation14 [shape = 'u8[1024]{0}', space=vmem, size = 0x400, scoped, tag = 'output window, operand 0, single buffered']
    %13 = vsyncpa [#allocation9], 0
    %14 = vsyncpa [#allocation12], 0
    %15 = vsyncpa [#allocation10], 0
    // Predicated region
    $region2: #{tpu_custom_call.1} parent=1 // pred_check
      _
    $region3: #{tpu_custom_call.1} parent=1 // pred_check_branch
      %17 = sbr.rel (0) target = $region5
    $region4: #{tpu_custom_call.1} parent=1 // pred_region
      %19 = vsyncadd [#allocation9], 0
      %s20 = sshll.u32 %s0, 4
      %s21 = int_to_ptr.hbm [resolvable:$true] %s20
      %s22 = sshll.u32 [#allocation8], 4
      %s23 = int_to_ptr.vmem [resolvable:$true] %s22
      %28 = dma.hbm_to_vmem [thread:$0]  %s21, 512, %s23, [#allocation9], 256, 256, 16
    $region5: #{tpu_custom_call.1} parent=1 // pred_fallthru
      _
    // Predicated region
    $region6: #{tpu_custom_call.1} parent=1 // pred_check
      _
    $region7: #{tpu_custom_call.1} parent=1 // pred_check_branch
      %30 = sbr.rel (0) target = $region9
    $region8: #{tpu_custom_call.1} parent=1 // pred_region
      _
    $region9: #{tpu_custom_call.1} parent=1 // pred_fallthru
      _
    // Predicated region
    $region10: #{tpu_custom_call.1} parent=1 // pred_check
      _
    $region11: #{tpu_custom_call.1} parent=1 // pred_check_branch
      %32 = sbr.rel (0) target = $region13
    $region12: #{tpu_custom_call.1} parent=1 // pred_region
      %34 = vsyncadd [#allocation12], 0
      %s35 = sshll.u32 %s2, 4
      %s36 = int_to_ptr.hbm [resolvable:$true] %s35
      %s37 = sshll.u32 [#allocation11], 4
      %s38 = int_to_ptr.vmem [resolvable:$true] %s37
      %43 = dma.hbm_to_vmem [thread:$0]  %s36, 4096, %s38, [#allocation12], 256, 256, 16
    $region13: #{tpu_custom_call.1} parent=1 // pred_fallthru
      _
    // Predicated region
    $region14: #{tpu_custom_call.1} parent=1 // pred_check
      _
    $region15: #{tpu_custom_call.1} parent=1 // pred_check_branch
      %45 = sbr.rel (0) target = $region17
    $region16: #{tpu_custom_call.1} parent=1 // pred_region
      _
    $region17: #{tpu_custom_call.1} parent=1 // pred_fallthru
      _
    // Predicated region
    $region18: #{tpu_custom_call.1} parent=1 // pred_check
      _
    $region19: #{tpu_custom_call.1} parent=1 // pred_check_branch
      %47 = sbr.rel (0) target = $region21
    $region20: #{tpu_custom_call.1} parent=1 // pred_region
      %49 = vsyncadd [#allocation12], 0
      %s50 = sshll.u32 %s4, 4
      %s51 = int_to_ptr.hbm [resolvable:$true] %s50
      %s52 = sshll.u32 [#allocation13], 4
      %s53 = int_to_ptr.vmem [resolvable:$true] %s52
      %58 = dma.hbm_to_vmem [thread:$0]  %s51, 12288, %s53, [#allocation12], 512, 512, 32
    $region21: #{tpu_custom_call.1} parent=1 // pred_fallthru
      _
    // Predicated region
    $region22: #{tpu_custom_call.1} parent=1 // pred_check
      _
    $region23: #{tpu_custom_call.1} parent=1 // pred_check_branch
      %60 = sbr.rel (0) target = $region25
    $region24: #{tpu_custom_call.1} parent=1 // pred_region
      _
    $region25: #{tpu_custom_call.1} parent=1 // pred_fallthru
      _
    // Predicated region
    $region26: #{tpu_custom_call.1} parent=1 // pred_check
      _
    $region27: #{tpu_custom_call.1} parent=1 // pred_check_branch
      %62 = sbr.rel (0) target = $region29
    $region28: #{tpu_custom_call.1} parent=1 // pred_region
      _
    $region29: #{tpu_custom_call.1} parent=1 // pred_fallthru
      _
    // Predicated region
    $region30: #{tpu_custom_call.1} parent=1 // pred_check
      _
    $region31: #{tpu_custom_call.1} parent=1 // pred_check_branch
      %64 = sbr.rel (0) target = $region33
    $region32: #{tpu_custom_call.1} parent=1 // pred_region
      _
    $region33: #{tpu_custom_call.1} parent=1 // pred_fallthru
      _
    // Predicated region
    $region34: #{tpu_custom_call.1} parent=1 // pred_check
      _
    $region35: #{tpu_custom_call.1} parent=1 // pred_check_branch
      %66 = sbr.rel (0) target = $region37
    $region36: #{tpu_custom_call.1} parent=1 // pred_region
      %68 = dma.done [#allocation9], 512
    $region37: #{tpu_custom_call.1} parent=1 // pred_fallthru
      _
    // Predicated region
    $region38: #{tpu_custom_call.1} parent=1 // pred_check
      _
    $region39: #{tpu_custom_call.1} parent=1 // pred_check_branch
      %70 = sbr.rel (0) target = $region41
    $region40: #{tpu_custom_call.1} parent=1 // pred_region
      %72 = dma.done [#allocation12], 4096
    $region41: #{tpu_custom_call.1} parent=1 // pred_fallthru
      _
    // Predicated region
    $region42: #{tpu_custom_call.1} parent=1 // pred_check
      _
    $region43: #{tpu_custom_call.1} parent=1 // pred_check_branch
      %74 = sbr.rel (0) target = $region45
    $region44: #{tpu_custom_call.1} parent=1 // pred_region
      %76 = dma.done [#allocation12], 12288
    $region45: #{tpu_custom_call.1} parent=1 // pred_fallthru
      _
    %p77 = scmp.eq.s32.totalorder 0, 0
    // Predicated region
    $region46: #{tpu_custom_call.1} parent=1 // pred_check
      %p78 = pneg %p77
    $region47: #{tpu_custom_call.1} parent=1 // pred_check_branch
      %80 = sbr.rel (%p78) target = $region49
    $region48: #{tpu_custom_call.1} parent=1 // pred_region
      %vm81 = vcmask 517120
      %82 = vst.msk [vmem:[#allocation2] sm:$0x3] %vm81, 0.0
      %83 = vst.msk [vmem:[#allocation3] sm:$0x3] %vm81, 0.0
      %84 = vst.msk [vmem:[#allocation4] sm:$0x3] %vm81, 0.0
      %85 = vst.msk [vmem:[#allocation5] sm:$0x3] %vm81, 0.0
      %86 = vst [vmem:[#allocation6] sm:$0x3] 0.0
      %87 = vst [vmem:[#allocation7] sm:$0x3] 0.0
    $region49: #{tpu_custom_call.1} parent=1 // pred_fallthru
      _
    %v88 = vld [vmem:[%s1] sm:$0xff]
    %v89 = vld [vmem:[%s1 + $0x8] sm:$0xff]
    %v90 = vld [vmem:[%s1 + $0x10] sm:$0xff]
    %v91 = vld [vmem:[%s1 + $0x18] sm:$0xff]
    %v92 = vld [vmem:[%s1 + $0x20] sm:$0xff]
    %v93 = vld [vmem:[%s1 + $0x28] sm:$0xff]
    %v94 = vld [vmem:[%s1 + $0x30] sm:$0xff]
    %v95 = vld [vmem:[%s1 + $0x38] sm:$0xff]
    %v96 = vld [vmem:[%s1 + $0x40] sm:$0xff]
    %v97 = vld [vmem:[%s1 + $0x48] sm:$0xff]
    %v98 = vld [vmem:[%s1 + $0x50] sm:$0xff]
    %v99 = vld [vmem:[%s1 + $0x58] sm:$0xff]
    %v100 = vld [vmem:[%s1 + $0x60] sm:$0xff]
    %v101 = vld [vmem:[%s1 + $0x68] sm:$0xff]
    %v102 = vld [vmem:[%s1 + $0x70] sm:$0xff]
    %v103 = vld [vmem:[%s1 + $0x78] sm:$0xff]
    %v104 = vld [vmem:[#allocation11] sm:$0xff]
    %v105 = vld [vmem:[#allocation11 + $0x8] sm:$0xff]
    %v106 = vld [vmem:[#allocation11 + $0x10] sm:$0xff]
    %v107 = vld [vmem:[#allocation11 + $0x18] sm:$0xff]
    %v108 = vld [vmem:[#allocation11 + $0x20] sm:$0xff]
    %v109 = vld [vmem:[#allocation11 + $0x28] sm:$0xff]
    %v110 = vld [vmem:[#allocation11 + $0x30] sm:$0xff]
    %v111 = vld [vmem:[#allocation11 + $0x38] sm:$0xff]
    %v112 = vld [vmem:[#allocation11 + $0x40] sm:$0xff]
    %v113 = vld [vmem:[#allocation11 + $0x48] sm:$0xff]
    %v114 = vld [vmem:[#allocation11 + $0x50] sm:$0xff]
    %v115 = vld [vmem:[#allocation11 + $0x58] sm:$0xff]
    %v116 = vld [vmem:[#allocation11 + $0x60] sm:$0xff]
    %v117 = vld [vmem:[#allocation11 + $0x68] sm:$0xff]
    %v118 = vld [vmem:[#allocation11 + $0x70] sm:$0xff]
    %v119 = vld [vmem:[#allocation11 + $0x78] sm:$0xff]
    %v120 = vld [vmem:[#allocation11 + $0x80] sm:$0xff]
    %v121 = vld [vmem:[#allocation11 + $0x88] sm:$0xff]
    %v122 = vld [vmem:[#allocation11 + $0x90] sm:$0xff]
    %v123 = vld [vmem:[#allocation11 + $0x98] sm:$0xff]
    %v124 = vld [vmem:[#allocation11 + $0xa0] sm:$0xff]
    %v125 = vld [vmem:[#allocation11 + $0xa8] sm:$0xff]
    %v126 = vld [vmem:[#allocation11 + $0xb0] sm:$0xff]
    %v127 = vld [vmem:[#allocation11 + $0xb8] sm:$0xff]
    %v128 = vld [vmem:[#allocation11 + $0xc0] sm:$0xff]
    %v129 = vld [vmem:[#allocation11 + $0xc8] sm:$0xff]
    %v130 = vld [vmem:[#allocation11 + $0xd0] sm:$0xff]
    %v131 = vld [vmem:[#allocation11 + $0xd8] sm:$0xff]
    %v132 = vld [vmem:[#allocation11 + $0xe0] sm:$0xff]
    %v133 = vld [vmem:[#allocation11 + $0xe8] sm:$0xff]
    %v134 = vld [vmem:[#allocation11 + $0xf0] sm:$0xff]
    %v135 = vld [vmem:[#allocation11 + $0xf8] sm:$0xff]
    %v136 = vld [vmem:[%s3] sm:$0x3]
    %v137 = vld [vmem:[#allocation13] sm:$0xff]
    %v138 = vld [vmem:[#allocation13 + $0x8] sm:$0xff]
    %v139 = vld [vmem:[#allocation13 + $0x10] sm:$0xff]
    %v140 = vld [vmem:[#allocation13 + $0x18] sm:$0xff]
    %v141 = vld [vmem:[#allocation13 + $0x20] sm:$0xff]
    %v142 = vld [vmem:[#allocation13 + $0x28] sm:$0xff]
    %v143 = vld [vmem:[#allocation13 + $0x30] sm:$0xff]
    %v144 = vld [vmem:[#allocation13 + $0x38] sm:$0xff]
    %v145 = vld [vmem:[#allocation13 + $0x40] sm:$0xff]
    %v146 = vld [vmem:[#allocation13 + $0x48] sm:$0xff]
    %v147 = vld [vmem:[#allocation13 + $0x50] sm:$0xff]
    %v148 = vld [vmem:[#allocation13 + $0x58] sm:$0xff]
    %v149 = vld [vmem:[#allocation13 + $0x60] sm:$0xff]
    %v150 = vld [vmem:[#allocation13 + $0x68] sm:$0xff]
    %v151 = vld [vmem:[#allocation13 + $0x70] sm:$0xff]
    %v152 = vld [vmem:[#allocation13 + $0x78] sm:$0xff]
    %v153 = vld [vmem:[#allocation13 + $0x80] sm:$0xff]
    %v154 = vld [vmem:[#allocation13 + $0x88] sm:$0xff]
    %v155 = vld [vmem:[#allocation13 + $0x90] sm:$0xff]
    %v156 = vld [vmem:[#allocation13 + $0x98] sm:$0xff]
    %v157 = vld [vmem:[#allocation13 + $0xa0] sm:$0xff]
    %v158 = vld [vmem:[#allocation13 + $0xa8] sm:$0xff]
    %v159 = vld [vmem:[#allocation13 + $0xb0] sm:$0xff]
    %v160 = vld [vmem:[#allocation13 + $0xb8] sm:$0xff]
    %v161 = vld [vmem:[#allocation13 + $0xc0] sm:$0xff]
    %v162 = vld [vmem:[#allocation13 + $0xc8] sm:$0xff]
    %v163 = vld [vmem:[#allocation13 + $0xd0] sm:$0xff]
    %v164 = vld [vmem:[#allocation13 + $0xd8] sm:$0xff]
    %v165 = vld [vmem:[#allocation13 + $0xe0] sm:$0xff]
    %v166 = vld [vmem:[#allocation13 + $0xe8] sm:$0xff]
    %v167 = vld [vmem:[#allocation13 + $0xf0] sm:$0xff]
    %v168 = vld [vmem:[#allocation13 + $0xf8] sm:$0xff]
    %v169 = vld [vmem:[#allocation13 + $0x100] sm:$0xff]
    %v170 = vld [vmem:[#allocation13 + $0x108] sm:$0xff]
    %v171 = vld [vmem:[#allocation13 + $0x110] sm:$0xff]
    %v172 = vld [vmem:[#allocation13 + $0x118] sm:$0xff]
    %v173 = vld [vmem:[#allocation13 + $0x120] sm:$0xff]
    %v174 = vld [vmem:[#allocation13 + $0x128] sm:$0xff]
    %v175 = vld [vmem:[#allocation13 + $0x130] sm:$0xff]
    %v176 = vld [vmem:[#allocation13 + $0x138] sm:$0xff]
    %v177 = vld [vmem:[#allocation13 + $0x140] sm:$0xff]
    %v178 = vld [vmem:[#allocation13 + $0x148] sm:$0xff]
    %v179 = vld [vmem:[#allocation13 + $0x150] sm:$0xff]
    %v180 = vld [vmem:[#allocation13 + $0x158] sm:$0xff]
    %v181 = vld [vmem:[#allocation13 + $0x160] sm:$0xff]
    %v182 = vld [vmem:[#allocation13 + $0x168] sm:$0xff]
    %v183 = vld [vmem:[#allocation13 + $0x170] sm:$0xff]
    %v184 = vld [vmem:[#allocation13 + $0x178] sm:$0xff]
    %v185 = vld [vmem:[#allocation13 + $0x180] sm:$0xff]
    %v186 = vld [vmem:[#allocation13 + $0x188] sm:$0xff]
    %v187 = vld [vmem:[#allocation13 + $0x190] sm:$0xff]
    %v188 = vld [vmem:[#allocation13 + $0x198] sm:$0xff]
    %v189 = vld [vmem:[#allocation13 + $0x1a0] sm:$0xff]
    %v190 = vld [vmem:[#allocation13 + $0x1a8] sm:$0xff]
    %v191 = vld [vmem:[#allocation13 + $0x1b0] sm:$0xff]
    %v192 = vld [vmem:[#allocation13 + $0x1b8] sm:$0xff]
    %v193 = vld [vmem:[#allocation13 + $0x1c0] sm:$0xff]
    %v194 = vld [vmem:[#allocation13 + $0x1c8] sm:$0xff]
    %v195 = vld [vmem:[#allocation13 + $0x1d0] sm:$0xff]
    %v196 = vld [vmem:[#allocation13 + $0x1d8] sm:$0xff]
    %v197 = vld [vmem:[#allocation13 + $0x1e0] sm:$0xff]
    %v198 = vld [vmem:[#allocation13 + $0x1e8] sm:$0xff]
    %v199 = vld [vmem:[#allocation13 + $0x1f0] sm:$0xff]
    %v200 = vld [vmem:[#allocation13 + $0x1f8] sm:$0xff]
    %v201 = vld [vmem:[#allocation13 + $0x200] sm:$0xff]
    %v202 = vld [vmem:[#allocation13 + $0x208] sm:$0xff]
    %v203 = vld [vmem:[#allocation13 + $0x210] sm:$0xff]
    %v204 = vld [vmem:[#allocation13 + $0x218] sm:$0xff]
    %v205 = vld [vmem:[#allocation13 + $0x220] sm:$0xff]
    %v206 = vld [vmem:[#allocation13 + $0x228] sm:$0xff]
    %v207 = vld [vmem:[#allocation13 + $0x230] sm:$0xff]
    %v208 = vld [vmem:[#allocation13 + $0x238] sm:$0xff]
    %v209 = vld [vmem:[#allocation13 + $0x240] sm:$0xff]
    %v210 = vld [vmem:[#allocation13 + $0x248] sm:$0xff]
    %v211 = vld [vmem:[#allocation13 + $0x250] sm:$0xff]
    %v212 = vld [vmem:[#allocation13 + $0x258] sm:$0xff]
    %v213 = vld [vmem:[#allocation13 + $0x260] sm:$0xff]
    %v214 = vld [vmem:[#allocation13 + $0x268] sm:$0xff]
    %v215 = vld [vmem:[#allocation13 + $0x270] sm:$0xff]
    %v216 = vld [vmem:[#allocation13 + $0x278] sm:$0xff]
    %v217 = vld [vmem:[#allocation13 + $0x280] sm:$0xff]
    %v218 = vld [vmem:[#allocation13 + $0x288] sm:$0xff]
    %v219 = vld [vmem:[#allocation13 + $0x290] sm:$0xff]
    %v220 = vld [vmem:[#allocation13 + $0x298] sm:$0xff]
    %v221 = vld [vmem:[#allocation13 + $0x2a0] sm:$0xff]
    %v222 = vld [vmem:[#allocation13 + $0x2a8] sm:$0xff]
    %v223 = vld [vmem:[#allocation13 + $0x2b0] sm:$0xff]
    %v224 = vld [vmem:[#allocation13 + $0x2b8] sm:$0xff]
    %v225 = vld [vmem:[#allocation13 + $0x2c0] sm:$0xff]
    %v226 = vld [vmem:[#allocation13 + $0x2c8] sm:$0xff]
    %v227 = vld [vmem:[#allocation13 + $0x2d0] sm:$0xff]
    %v228 = vld [vmem:[#allocation13 + $0x2d8] sm:$0xff]
    %v229 = vld [vmem:[#allocation13 + $0x2e0] sm:$0xff]
    %v230 = vld [vmem:[#allocation13 + $0x2e8] sm:$0xff]
    %v231 = vld [vmem:[#allocation13 + $0x2f0] sm:$0xff]
    %v232 = vld [vmem:[#allocation13 + $0x2f8] sm:$0xff]
    %v233 = vld [vmem:[%s5] sm:$0xf]
    %v234 = vld [vmem:[#allocation2] sm:$0x3]
    %v235 = vld [vmem:[#allocation3] sm:$0x3]
    %v236 = vld [vmem:[#allocation4] sm:$0x3]
    %v237 = vld [vmem:[#allocation5] sm:$0x3]
    %v238 = vld [vmem:[#allocation6] sm:$0x3]
    %v239 = vld [vmem:[#allocation7] sm:$0x3]
    %v240 = vld [vmem:[#allocation8] ss:$8 sm:$0x3]
    %s241 = scalar_lea.vmem [#allocation8], 16
    %v242 = vld [vmem:[%s241] ss:$8 sm:$0x3]
    %vm243 = vcmask 523264
    %v245 = vsel %vm243, %v234, 0
    %247 = vmatpush.msra.mxu0 0.0
    %248 = vmatpush.msra.mxu0 0.0
    %249 = vmatpush.msra.mxu0 0.0
    %250 = vmatpush.msra.mxu0 0.0
    %251 = vmatpush.msra.mxu0 0.0
    %252 = vmatpush.msra.mxu0 0.0
    %253 = vmatpush.msra.mxu0 0.0
    %254 = vmatpush.msra.mxu0 0.0
    %255 = vmatpush.msra.mxu0 %v102
    %256 = vmatpush.msra.mxu0 %v100
    %257 = vmatpush.msra.mxu0 %v98
    %258 = vmatpush.msra.mxu0 %v96
    %259 = vmatpush.msra.mxu0 %v94
    %260 = vmatpush.msra.mxu0 %v92
    %261 = vmatpush.msra.mxu0 %v90
    %262 = vmatpush.msra.mxu0 %v88
    %263 = vmatmul.f32.gmra.mxu0 %v245
    %v264 = vpop.f32.mrf.mxu0
    %v265 = vadd.f32 0.0, %v264
    %266 = vdwg.mxu0
    %267 = vmatpush.msra.mxu0 0.0
    %268 = vmatpush.msra.mxu0 0.0
    %269 = vmatpush.msra.mxu0 0.0
    %270 = vmatpush.msra.mxu0 0.0
    %271 = vmatpush.msra.mxu0 0.0
    %272 = vmatpush.msra.mxu0 0.0
    %273 = vmatpush.msra.mxu0 0.0
    %274 = vmatpush.msra.mxu0 0.0
    %275 = vmatpush.msra.mxu0 %v103
    %276 = vmatpush.msra.mxu0 %v101
    %277 = vmatpush.msra.mxu0 %v99
    %278 = vmatpush.msra.mxu0 %v97
    %279 = vmatpush.msra.mxu0 %v95
    %280 = vmatpush.msra.mxu0 %v93
    %281 = vmatpush.msra.mxu0 %v91
    %282 = vmatpush.msra.mxu0 %v89
    %283 = vmatmul.f32.gmra.mxu0 %v245
    %v284 = vpop.f32.mrf.mxu0
    %v285 = vadd.f32 0.0, %v284
    %286 = vdwg.mxu0
    %v289 = vrot.slane %v285, 7
    %vm290 = vcmask 1040384
    %v291 = vsel %vm290, %v265, %v289
    %vm292 = vcmask 1041409
    %v293 = vsel %vm292, %v265, %v289
    %v294 = vrot.slane %v293, 1
    %v297 = vadd.f32 %v240, %v291
    %v298 = vadd.f32 %v242, %v294
    %v299 = vxor.u32 %v297, 2147483648
    %v300 = vxor.u32 %v298, 2147483648
    %v301 = vmul.f32 %v299, 1.442695
    %v302 = vpow.pop %v301
    %v303 = vmul.f32 %v300, 1.442695
    %v304 = vpow.pop %v303
    %v305 = vadd.f32 %v302, 1.0
    %v306 = vadd.f32 %v304, 1.0
    %v307 = vrcp.pop %v305
    %v308 = vmul.f32 %v305, %v307
    %v309 = vsub.f32 1.0, %v308
    %v310 = vmul.f32 %v307, %v309
    %v311 = vadd.f32 %v307, %v310
    %vm312 = vweird.f32 %v305
    %vm313 = vweird.f32 %v307
    %vm314 = vmor %vm312, %vm313
    %v315 = vsel %vm314, %v307, %v311
    %v316 = vand.u32 2147483647, %v305
    %vm317 = vcmp.eq.f32.partialorder %v316, 8.507059e+37
    %v318 = vand.u32 %v305, 2147483648
    %v319 = vor.u32 1.1754944e-38, %v318
    %v320 = vsel %vm317, %v319, %v315
    %v321 = vmul.f32 1.0, %v320
    %v322 = vrcp.pop %v306
    %v323 = vmul.f32 %v306, %v322
    %v324 = vsub.f32 1.0, %v323
    %v325 = vmul.f32 %v322, %v324
    %v326 = vadd.f32 %v322, %v325
    %vm327 = vweird.f32 %v306
    %vm328 = vweird.f32 %v322
    %vm329 = vmor %vm327, %vm328
    %v330 = vsel %vm329, %v322, %v326
    %v331 = vand.u32 2147483647, %v306
    %vm332 = vcmp.eq.f32.partialorder %v331, 8.507059e+37
    %v333 = vand.u32 %v306, 2147483648
    %v334 = vor.u32 1.1754944e-38, %v333
    %v335 = vsel %vm332, %v334, %v330
    %v336 = vmul.f32 1.0, %v335
    %339 = vrot.lane.b32.xlu0 %v297, 64
    %v340 = vpop.permute.xlu0 %339
    %341 = vrot.lane.b32.xlu0 %v298, 64
    %v342 = vpop.permute.xlu0 %341
    %v343 = vrot.slane %v340, 1
    %v344 = vrot.slane %v342, 1
    %v347 = vtanh.pop %v343
    %v348 = vtanh.pop %v344
    %v350 = vrot.slane %v235, 1
    %351 = vrot.lane.b32.xlu0 %v235, 64
    %v352 = vpop.permute.xlu0 %351
    %353 = vrot.lane.b32.xlu0 %v350, 64
    %v354 = vpop.permute.xlu0 %353
    %v357 = vmul.f32 %v321, %v352
    %v358 = vmul.f32 %v336, %v354
    %v359 = vmul.f32 %v321, %v347
    %v360 = vmul.f32 %v336, %v348
    %363 = vrot.lane.b32.xlu0 %v359, 64
    %v364 = vpop.permute.xlu0 %363
    %365 = vrot.lane.b32.xlu0 %v360, 64
    %v366 = vpop.permute.xlu0 %365
    %v369 = vadd.f32 %v357, %v364
    %v370 = vadd.f32 %v358, %v366
    %v371 = vtanh.pop %v369
    %v372 = vtanh.pop %v370
    %v375 = vrot.slane %v321, 1
    %v376 = vrot.slane %v336, 1
    %381 = vrot.lane.b32.xlu0 %v371, 64
    %v382 = vpop.permute.xlu0 %381
    %383 = vrot.lane.b32.xlu0 %v372, 64
    %v384 = vpop.permute.xlu0 %383
    %v387 = vmul.f32 %v375, %v382
    %v388 = vmul.f32 %v376, %v384
    %391 = vst [vmem:[#allocation1] ss:$9 sm:$0xff] %v387
    %s392 = scalar_lea.vmem [#allocation1], 1
    %393 = vst [vmem:[%s392] ss:$9 sm:$0xff] %v388
    %v394 = vld [vmem:[#allocation1] sm:$0xff]
    %397 = vrot.lane.b32.xlu0 %v236, 64
    %v398 = vpop.permute.xlu0 %397
    %v400 = vsel %vm243, %v394, %v398
    %v402 = vperm.slane %v136, 0
    %v403 = vperm.slane %v136, 1
    %406 = vmatpush.msra.mxu0 %v134
    %407 = vmatpush.msra.mxu0 %v132
    %408 = vmatpush.msra.mxu0 %v130
    %409 = vmatpush.msra.mxu0 %v128
    %410 = vmatpush.msra.mxu0 %v126
    %411 = vmatpush.msra.mxu0 %v124
    %412 = vmatpush.msra.mxu0 %v122
    %413 = vmatpush.msra.mxu0 %v120
    %414 = vmatpush.msra.mxu0 %v118
    %415 = vmatpush.msra.mxu0 %v116
    %416 = vmatpush.msra.mxu0 %v114
    %417 = vmatpush.msra.mxu0 %v112
    %418 = vmatpush.msra.mxu0 %v110
    %419 = vmatpush.msra.mxu0 %v108
    %420 = vmatpush.msra.mxu0 %v106
    %421 = vmatpush.msra.mxu0 %v104
    %422 = vmatmul.f32.gmra.mxu0 %v400
    %v423 = vpop.f32.mrf.mxu0
    %v424 = vadd.f32 %v402, %v423
    %425 = vdwg.mxu0
    %426 = vmatpush.msra.mxu0 %v135
    %427 = vmatpush.msra.mxu0 %v133
    %428 = vmatpush.msra.mxu0 %v131
    %429 = vmatpush.msra.mxu0 %v129
    %430 = vmatpush.msra.mxu0 %v127
    %431 = vmatpush.msra.mxu0 %v125
    %432 = vmatpush.msra.mxu0 %v123
    %433 = vmatpush.msra.mxu0 %v121
    %434 = vmatpush.msra.mxu0 %v119
    %435 = vmatpush.msra.mxu0 %v117
    %436 = vmatpush.msra.mxu0 %v115
    %437 = vmatpush.msra.mxu0 %v113
    %438 = vmatpush.msra.mxu0 %v111
    %439 = vmatpush.msra.mxu0 %v109
    %440 = vmatpush.msra.mxu0 %v107
    %441 = vmatpush.msra.mxu0 %v105
    %442 = vmatmul.f32.gmra.mxu0 %v400
    %v443 = vpop.f32.mrf.mxu0
    %v444 = vadd.f32 %v403, %v443
    %445 = vdwg.mxu0
    %v446 = vxor.u32 %v424, 2147483648
    %v447 = vxor.u32 %v444, 2147483648
    %v448 = vmul.f32 %v446, 1.442695
    %v449 = vpow.pop %v448
    %v450 = vmul.f32 %v447, 1.442695
    %v451 = vpow.pop %v450
    %v452 = vadd.f32 %v449, 1.0
    %v453 = vadd.f32 %v451, 1.0
    %v454 = vrcp.pop %v452
    %v455 = vmul.f32 %v452, %v454
    %v456 = vsub.f32 1.0, %v455
    %v457 = vmul.f32 %v454, %v456
    %v458 = vadd.f32 %v454, %v457
    %vm459 = vweird.f32 %v452
    %vm460 = vweird.f32 %v454
    %vm461 = vmor %vm459, %vm460
    %v462 = vsel %vm461, %v454, %v458
    %v463 = vand.u32 2147483647, %v452
    %vm464 = vcmp.eq.f32.partialorder %v463, 8.507059e+37
    %v465 = vand.u32 %v452, 2147483648
    %v466 = vor.u32 1.1754944e-38, %v465
    %v467 = vsel %vm464, %v466, %v462
    %v468 = vmul.f32 1.0, %v467
    %v469 = vrcp.pop %v453
    %v470 = vmul.f32 %v453, %v469
    %v471 = vsub.f32 1.0, %v470
    %v472 = vmul.f32 %v469, %v471
    %v473 = vadd.f32 %v469, %v472
    %vm474 = vweird.f32 %v453
    %vm475 = vweird.f32 %v469
    %vm476 = vmor %vm474, %vm475
    %v477 = vsel %vm476, %v469, %v473
    %v478 = vand.u32 2147483647, %v453
    %vm479 = vcmp.eq.f32.partialorder %v478, 8.507059e+37
    %v480 = vand.u32 %v453, 2147483648
    %v481 = vor.u32 1.1754944e-38, %v480
    %v482 = vsel %vm479, %v481, %v477
    %v483 = vmul.f32 1.0, %v482
    %v484 = vtanh.pop %v444
    %486 = vrot.lane.b32.xlu0 %v237, 64
    %v487 = vpop.permute.xlu0 %486
    %v489 = vmul.f32 %v468, %v487
    %491 = vrot.lane.b32.xlu0 %v484, 64
    %v492 = vpop.permute.xlu0 %491
    %v494 = vmul.f32 %v468, %v492
    %496 = vrot.lane.b32.xlu0 %v494, 64
    %v497 = vpop.permute.xlu0 %496
    %v499 = vadd.f32 %v489, %v497
    %v500 = vtanh.pop %v499
    %502 = vrot.lane.b32.xlu0 %v500, 64
    %v503 = vpop.permute.xlu0 %502
    %v505 = vmul.f32 %v483, %v503
    %507 = vrot.lane.b32.xlu0 %v238, 64
    %v508 = vpop.permute.xlu0 %507
    %v510 = vsel %vm243, %v505, %v508
    %v512 = vperm.slane %v233, 0
    %v513 = vperm.slane %v233, 1
    %v514 = vperm.slane %v233, 2
    %v515 = vperm.slane %v233, 3
    %v520 = vsel %vm243, %v508, 0
    %522 = vmatpush.msra.mxu0 %v197
    %523 = vmatpush.msra.mxu0 %v193
    %524 = vmatpush.msra.mxu0 %v189
    %525 = vmatpush.msra.mxu0 %v185
    %526 = vmatpush.msra.mxu0 %v181
    %527 = vmatpush.msra.mxu0 %v177
    %528 = vmatpush.msra.mxu0 %v173
    %529 = vmatpush.msra.mxu0 %v169
    %530 = vmatpush.msra.mxu0 %v165
    %531 = vmatpush.msra.mxu0 %v161
    %532 = vmatpush.msra.mxu0 %v157
    %533 = vmatpush.msra.mxu0 %v153
    %534 = vmatpush.msra.mxu0 %v149
    %535 = vmatpush.msra.mxu0 %v145
    %536 = vmatpush.msra.mxu0 %v141
    %537 = vmatpush.msra.mxu0 %v137
    %538 = vmatmul.f32.gmra.mxu0 %v510
    %v539 = vpop.f32.mrf.mxu0
    %v540 = vadd.f32 %v512, %v539
    %541 = vdwg.mxu0
    %542 = vmatpush.msra.mxu0 0.0
    %543 = vmatpush.msra.mxu0 0.0
    %544 = vmatpush.msra.mxu0 0.0
    %545 = vmatpush.msra.mxu0 0.0
    %546 = vmatpush.msra.mxu0 0.0
    %547 = vmatpush.msra.mxu0 0.0
    %548 = vmatpush.msra.mxu0 0.0
    %549 = vmatpush.msra.mxu0 0.0
    %550 = vmatpush.msra.mxu0 %v229
    %551 = vmatpush.msra.mxu0 %v225
    %552 = vmatpush.msra.mxu0 %v221
    %553 = vmatpush.msra.mxu0 %v217
    %554 = vmatpush.msra.mxu0 %v213
    %555 = vmatpush.msra.mxu0 %v209
    %556 = vmatpush.msra.mxu0 %v205
    %557 = vmatpush.msra.mxu0 %v201
    %558 = vmatmul.f32.gmra.mxu0 %v520
    %v559 = vpop.f32.mrf.mxu0
    %v560 = vadd.f32 %v540, %v559
    %561 = vdwg.mxu0
    %562 = vmatpush.msra.mxu0 %v198
    %563 = vmatpush.msra.mxu0 %v194
    %564 = vmatpush.msra.mxu0 %v190
    %565 = vmatpush.msra.mxu0 %v186
    %566 = vmatpush.msra.mxu0 %v182
    %567 = vmatpush.msra.mxu0 %v178
    %568 = vmatpush.msra.mxu0 %v174
    %569 = vmatpush.msra.mxu0 %v170
    %570 = vmatpush.msra.mxu0 %v166
    %571 = vmatpush.msra.mxu0 %v162
    %572 = vmatpush.msra.mxu0 %v158
    %573 = vmatpush.msra.mxu0 %v154
    %574 = vmatpush.msra.mxu0 %v150
    %575 = vmatpush.msra.mxu0 %v146
    %576 = vmatpush.msra.mxu0 %v142
    %577 = vmatpush.msra.mxu0 %v138
    %578 = vmatmul.f32.gmra.mxu0 %v510
    %v579 = vpop.f32.mrf.mxu0
    %v580 = vadd.f32 %v513, %v579
    %581 = vdwg.mxu0
    %582 = vmatpush.msra.mxu0 0.0
    %583 = vmatpush.msra.mxu0 0.0
    %584 = vmatpush.msra.mxu0 0.0
    %585 = vmatpush.msra.mxu0 0.0
    %586 = vmatpush.msra.mxu0 0.0
    %587 = vmatpush.msra.mxu0 0.0
    %588 = vmatpush.msra.mxu0 0.0
    %589 = vmatpush.msra.mxu0 0.0
    %590 = vmatpush.msra.mxu0 %v230
    %591 = vmatpush.msra.mxu0 %v226
    %592 = vmatpush.msra.mxu0 %v222
    %593 = vmatpush.msra.mxu0 %v218
    %594 = vmatpush.msra.mxu0 %v214
    %595 = vmatpush.msra.mxu0 %v210
    %596 = vmatpush.msra.mxu0 %v206
    %597 = vmatpush.msra.mxu0 %v202
    %598 = vmatmul.f32.gmra.mxu0 %v520
    %v599 = vpop.f32.mrf.mxu0
    %v600 = vadd.f32 %v580, %v599
    %601 = vdwg.mxu0
    %602 = vmatpush.msra.mxu0 %v199
    %603 = vmatpush.msra.mxu0 %v195
    %604 = vmatpush.msra.mxu0 %v191
    %605 = vmatpush.msra.mxu0 %v187
    %606 = vmatpush.msra.mxu0 %v183
    %607 = vmatpush.msra.mxu0 %v179
    %608 = vmatpush.msra.mxu0 %v175
    %609 = vmatpush.msra.mxu0 %v171
    %610 = vmatpush.msra.mxu0 %v167
    %611 = vmatpush.msra.mxu0 %v163
    %612 = vmatpush.msra.mxu0 %v159
    %613 = vmatpush.msra.mxu0 %v155
    %614 = vmatpush.msra.mxu0 %v151
    %615 = vmatpush.msra.mxu0 %v147
    %616 = vmatpush.msra.mxu0 %v143
    %617 = vmatpush.msra.mxu0 %v139
    %618 = vmatmul.f32.gmra.mxu0 %v510
    %v619 = vpop.f32.mrf.mxu0
    %v620 = vadd.f32 %v514, %v619
    %621 = vdwg.mxu0
    %622 = vmatpush.msra.mxu0 0.0
    %623 = vmatpush.msra.mxu0 0.0
    %624 = vmatpush.msra.mxu0 0.0
    %625 = vmatpush.msra.mxu0 0.0
    %626 = vmatpush.msra.mxu0 0.0
    %627 = vmatpush.msra.mxu0 0.0
    %628 = vmatpush.msra.mxu0 0.0
    %629 = vmatpush.msra.mxu0 0.0
    %630 = vmatpush.msra.mxu0 %v231
    %631 = vmatpush.msra.mxu0 %v227
    %632 = vmatpush.msra.mxu0 %v223
    %633 = vmatpush.msra.mxu0 %v219
    %634 = vmatpush.msra.mxu0 %v215
    %635 = vmatpush.msra.mxu0 %v211
    %636 = vmatpush.msra.mxu0 %v207
    %637 = vmatpush.msra.mxu0 %v203
    %638 = vmatmul.f32.gmra.mxu0 %v520
    %v639 = vpop.f32.mrf.mxu0
    %v640 = vadd.f32 %v620, %v639
    %641 = vdwg.mxu0
    %642 = vmatpush.msra.mxu0 %v200
    %643 = vmatpush.msra.mxu0 %v196
    %644 = vmatpush.msra.mxu0 %v192
    %645 = vmatpush.msra.mxu0 %v188
    %646 = vmatpush.msra.mxu0 %v184
    %647 = vmatpush.msra.mxu0 %v180
    %648 = vmatpush.msra.mxu0 %v176
    %649 = vmatpush.msra.mxu0 %v172
    %650 = vmatpush.msra.mxu0 %v168
    %651 = vmatpush.msra.mxu0 %v164
    %652 = vmatpush.msra.mxu0 %v160
    %653 = vmatpush.msra.mxu0 %v156
    %654 = vmatpush.msra.mxu0 %v152
    %655 = vmatpush.msra.mxu0 %v148
    %656 = vmatpush.msra.mxu0 %v144
    %657 = vmatpush.msra.mxu0 %v140
    %658 = vmatmul.f32.gmra.mxu0 %v510
    %v659 = vpop.f32.mrf.mxu0
    %v660 = vadd.f32 %v515, %v659
    %661 = vdwg.mxu0
    %662 = vmatpush.msra.mxu0 0.0
    %663 = vmatpush.msra.mxu0 0.0
    %664 = vmatpush.msra.mxu0 0.0
    %665 = vmatpush.msra.mxu0 0.0
    %666 = vmatpush.msra.mxu0 0.0
    %667 = vmatpush.msra.mxu0 0.0
    %668 = vmatpush.msra.mxu0 0.0
    %669 = vmatpush.msra.mxu0 0.0
    %670 = vmatpush.msra.mxu0 %v232
    %671 = vmatpush.msra.mxu0 %v228
    %672 = vmatpush.msra.mxu0 %v224
    %673 = vmatpush.msra.mxu0 %v220
    %674 = vmatpush.msra.mxu0 %v216
    %675 = vmatpush.msra.mxu0 %v212
    %676 = vmatpush.msra.mxu0 %v208
    %677 = vmatpush.msra.mxu0 %v204
    %678 = vmatmul.f32.gmra.mxu0 %v520
    %v679 = vpop.f32.mrf.mxu0
    %v680 = vadd.f32 %v660, %v679
    %681 = vdwg.mxu0
    %v682 = vxor.u32 %v560, 2147483648
    %v683 = vxor.u32 %v600, 2147483648
    %v684 = vxor.u32 %v640, 2147483648
    %v685 = vmul.f32 %v682, 1.442695
    %v686 = vpow.pop %v685
    %v687 = vmul.f32 %v683, 1.442695
    %v688 = vpow.pop %v687
    %v689 = vmul.f32 %v684, 1.442695
    %v690 = vpow.pop %v689
    %v691 = vadd.f32 %v686, 1.0
    %v692 = vadd.f32 %v688, 1.0
    %v693 = vadd.f32 %v690, 1.0
    %v694 = vrcp.pop %v691
    %v695 = vmul.f32 %v691, %v694
    %v696 = vsub.f32 1.0, %v695
    %v697 = vmul.f32 %v694, %v696
    %v698 = vadd.f32 %v694, %v697
    %vm699 = vweird.f32 %v691
    %vm700 = vweird.f32 %v694
    %vm701 = vmor %vm699, %vm700
    %v702 = vsel %vm701, %v694, %v698
    %v703 = vand.u32 2147483647, %v691
    %vm704 = vcmp.eq.f32.partialorder %v703, 8.507059e+37
    %v705 = vand.u32 %v691, 2147483648
    %v706 = vor.u32 1.1754944e-38, %v705
    %v707 = vsel %vm704, %v706, %v702
    %v708 = vmul.f32 1.0, %v707
    %v709 = vrcp.pop %v692
    %v710 = vmul.f32 %v692, %v709
    %v711 = vsub.f32 1.0, %v710
    %v712 = vmul.f32 %v709, %v711
    %v713 = vadd.f32 %v709, %v712
    %vm714 = vweird.f32 %v692
    %vm715 = vweird.f32 %v709
    %vm716 = vmor %vm714, %vm715
    %v717 = vsel %vm716, %v709, %v713
    %v718 = vand.u32 2147483647, %v692
    %vm719 = vcmp.eq.f32.partialorder %v718, 8.507059e+37
    %v720 = vand.u32 %v692, 2147483648
    %v721 = vor.u32 1.1754944e-38, %v720
    %v722 = vsel %vm719, %v721, %v717
    %v723 = vmul.f32 1.0, %v722
    %v724 = vrcp.pop %v693
    %v725 = vmul.f32 %v693, %v724
    %v726 = vsub.f32 1.0, %v725
    %v727 = vmul.f32 %v724, %v726
    %v728 = vadd.f32 %v724, %v727
    %vm729 = vweird.f32 %v693
    %vm730 = vweird.f32 %v724
    %vm731 = vmor %vm729, %vm730
    %v732 = vsel %vm731, %v724, %v728
    %v733 = vand.u32 2147483647, %v693
    %vm734 = vcmp.eq.f32.partialorder %v733, 8.507059e+37
    %v735 = vand.u32 %v693, 2147483648
    %v736 = vor.u32 1.1754944e-38, %v735
    %v737 = vsel %vm734, %v736, %v732
    %v738 = vmul.f32 1.0, %v737
    %v739 = vtanh.pop %v680
    %v740 = vmul.f32 %v723, %v239
    %v741 = vmul.f32 %v708, %v739
    %v742 = vadd.f32 %v740, %v741
    %v743 = vtanh.pop %v742
    %v744 = vmul.f32 %v738, %v743
    %s745 = scalar_lea.vmem [#allocation8], 1
    %v746 = vld [vmem:[%s745] ss:$8 sm:$0x3]
    %s747 = scalar_lea.vmem [#allocation8], 17
    %v748 = vld [vmem:[%s747] ss:$8 sm:$0x3]
    %749 = vst [vmem:[#allocation1] ss:$9 sm:$0xff] %v387
    %s750 = scalar_lea.vmem [#allocation1], 1
    %751 = vst [vmem:[%s750] ss:$9 sm:$0xff] %v388
    %v752 = vld [vmem:[#allocation1] sm:$0xff]
    %v753 = vsel %vm243, %v752, 0
    %755 = vmatpush.msra.mxu0 0.0
    %756 = vmatpush.msra.mxu0 0.0
    %757 = vmatpush.msra.mxu0 0.0
    %758 = vmatpush.msra.mxu0 0.0
    %759 = vmatpush.msra.mxu0 0.0
    %760 = vmatpush.msra.mxu0 0.0
    %761 = vmatpush.msra.mxu0 0.0
    %762 = vmatpush.msra.mxu0 0.0
    %763 = vmatpush.msra.mxu0 %v102
    %764 = vmatpush.msra.mxu0 %v100
    %765 = vmatpush.msra.mxu0 %v98
    %766 = vmatpush.msra.mxu0 %v96
    %767 = vmatpush.msra.mxu0 %v94
    %768 = vmatpush.msra.mxu0 %v92
    %769 = vmatpush.msra.mxu0 %v90
    %770 = vmatpush.msra.mxu0 %v88
    %771 = vmatmul.f32.gmra.mxu0 %v753
    %v772 = vpop.f32.mrf.mxu0
    %v773 = vadd.f32 0.0, %v772
    %774 = vdwg.mxu0
    %775 = vmatpush.msra.mxu0 0.0
    %776 = vmatpush.msra.mxu0 0.0
    %777 = vmatpush.msra.mxu0 0.0
    %778 = vmatpush.msra.mxu0 0.0
    %779 = vmatpush.msra.mxu0 0.0
    %780 = vmatpush.msra.mxu0 0.0
    %781 = vmatpush.msra.mxu0 0.0
    %782 = vmatpush.msra.mxu0 0.0
    %783 = vmatpush.msra.mxu0 %v103
    %784 = vmatpush.msra.mxu0 %v101
    %785 = vmatpush.msra.mxu0 %v99
    %786 = vmatpush.msra.mxu0 %v97
    %787 = vmatpush.msra.mxu0 %v95
    %788 = vmatpush.msra.mxu0 %v93
    %789 = vmatpush.msra.mxu0 %v91
    %790 = vmatpush.msra.mxu0 %v89
    %791 = vmatmul.f32.gmra.mxu0 %v753
    %v792 = vpop.f32.mrf.mxu0
    %v793 = vadd.f32 0.0, %v792
    %794 = vdwg.mxu0
    %v797 = vrot.slane %v793, 7
    %v798 = vsel %vm290, %v773, %v797
    %v799 = vsel %vm292, %v773, %v797
    %v800 = vrot.slane %v799, 1
    %v803 = vadd.f32 %v746, %v798
    %v804 = vadd.f32 %v748, %v800
    %v805 = vxor.u32 %v803, 2147483648
    %v806 = vxor.u32 %v804, 2147483648
    %v807 = vmul.f32 %v805, 1.442695
    %v808 = vpow.pop %v807
    %v809 = vmul.f32 %v806, 1.442695
    %v810 = vpow.pop %v809
    %v811 = vadd.f32 %v808, 1.0
    %v812 = vadd.f32 %v810, 1.0
    %v813 = vrcp.pop %v811
    %v814 = vmul.f32 %v811, %v813
    %v815 = vsub.f32 1.0, %v814
    %v816 = vmul.f32 %v813, %v815
    %v817 = vadd.f32 %v813, %v816
    %vm818 = vweird.f32 %v811
    %vm819 = vweird.f32 %v813
    %vm820 = vmor %vm818, %vm819
    %v821 = vsel %vm820, %v813, %v817
    %v822 = vand.u32 2147483647, %v811
    %vm823 = vcmp.eq.f32.partialorder %v822, 8.507059e+37
    %v824 = vand.u32 %v811, 2147483648
    %v825 = vor.u32 1.1754944e-38, %v824
    %v826 = vsel %vm823, %v825, %v821
    %v827 = vmul.f32 1.0, %v826
    %v828 = vrcp.pop %v812
    %v829 = vmul.f32 %v812, %v828
    %v830 = vsub.f32 1.0, %v829
    %v831 = vmul.f32 %v828, %v830
    %v832 = vadd.f32 %v828, %v831
    %vm833 = vweird.f32 %v812
    %vm834 = vweird.f32 %v828
    %vm835 = vmor %vm833, %vm834
    %v836 = vsel %vm835, %v828, %v832
    %v837 = vand.u32 2147483647, %v812
    %vm838 = vcmp.eq.f32.partialorder %v837, 8.507059e+37
    %v839 = vand.u32 %v812, 2147483648
    %v840 = vor.u32 1.1754944e-38, %v839
    %v841 = vsel %vm838, %v840, %v836
    %v842 = vmul.f32 1.0, %v841
    %845 = vrot.lane.b32.xlu0 %v803, 64
    %v846 = vpop.permute.xlu0 %845
    %847 = vrot.lane.b32.xlu0 %v804, 64
    %v848 = vpop.permute.xlu0 %847
    %v849 = vrot.slane %v846, 1
    %v850 = vrot.slane %v848, 1
    %v853 = vtanh.pop %v849
    %v854 = vtanh.pop %v850
    %v855 = vmul.f32 %v827, %v369
    %v856 = vmul.f32 %v842, %v370
    %v857 = vmul.f32 %v827, %v853
    %v858 = vmul.f32 %v842, %v854
    %861 = vrot.lane.b32.xlu0 %v857, 64
    %v862 = vpop.permute.xlu0 %861
    %863 = vrot.lane.b32.xlu0 %v858, 64
    %v864 = vpop.permute.xlu0 %863
    %v867 = vadd.f32 %v855, %v862
    %v868 = vadd.f32 %v856, %v864
    %v869 = vtanh.pop %v867
    %v870 = vtanh.pop %v868
    %v873 = vrot.slane %v827, 1
    %v874 = vrot.slane %v842, 1
    %879 = vrot.lane.b32.xlu0 %v869, 64
    %v880 = vpop.permute.xlu0 %879
    %881 = vrot.lane.b32.xlu0 %v870, 64
    %v882 = vpop.permute.xlu0 %881
    %v885 = vmul.f32 %v873, %v880
    %v886 = vmul.f32 %v874, %v882
    %889 = vst [vmem:[#allocation1] ss:$9 sm:$0xff] %v885
    %s890 = scalar_lea.vmem [#allocation1], 1
    %891 = vst [vmem:[%s890] ss:$9 sm:$0xff] %v886
    %v892 = vld [vmem:[#allocation1] sm:$0xff]
    %895 = vrot.lane.b32.xlu0 %v505, 64
    %v896 = vpop.permute.xlu0 %895
    %v898 = vsel %vm243, %v892, %v896
    %899 = vmatpush.msra.mxu0 %v134
    %900 = vmatpush.msra.mxu0 %v132
    %901 = vmatpush.msra.mxu0 %v130
    %902 = vmatpush.msra.mxu0 %v128
    %903 = vmatpush.msra.mxu0 %v126
    %904 = vmatpush.msra.mxu0 %v124
    %905 = vmatpush.msra.mxu0 %v122
    %906 = vmatpush.msra.mxu0 %v120
    %907 = vmatpush.msra.mxu0 %v118
    %908 = vmatpush.msra.mxu0 %v116
    %909 = vmatpush.msra.mxu0 %v114
    %910 = vmatpush.msra.mxu0 %v112
    %911 = vmatpush.msra.mxu0 %v110
    %912 = vmatpush.msra.mxu0 %v108
    %913 = vmatpush.msra.mxu0 %v106
    %914 = vmatpush.msra.mxu0 %v104
    %915 = vmatmul.f32.gmra.mxu0 %v898
    %v916 = vpop.f32.mrf.mxu0
    %v917 = vadd.f32 %v402, %v916
    %918 = vdwg.mxu0
    %919 = vmatpush.msra.mxu0 %v135
    %920 = vmatpush.msra.mxu0 %v133
    %921 = vmatpush.msra.mxu0 %v131
    %922 = vmatpush.msra.mxu0 %v129
    %923 = vmatpush.msra.mxu0 %v127
    %924 = vmatpush.msra.mxu0 %v125
    %925 = vmatpush.msra.mxu0 %v123
    %926 = vmatpush.msra.mxu0 %v121
    %927 = vmatpush.msra.mxu0 %v119
    %928 = vmatpush.msra.mxu0 %v117
    %929 = vmatpush.msra.mxu0 %v115
    %930 = vmatpush.msra.mxu0 %v113
    %931 = vmatpush.msra.mxu0 %v111
    %932 = vmatpush.msra.mxu0 %v109
    %933 = vmatpush.msra.mxu0 %v107
    %934 = vmatpush.msra.mxu0 %v105
    %935 = vmatmul.f32.gmra.mxu0 %v898
    %v936 = vpop.f32.mrf.mxu0
    %v937 = vadd.f32 %v403, %v936
    %938 = vdwg.mxu0
    %v939 = vxor.u32 %v917, 2147483648
    %v940 = vxor.u32 %v937, 2147483648
    %v941 = vmul.f32 %v939, 1.442695
    %v942 = vpow.pop %v941
    %v943 = vmul.f32 %v940, 1.442695
    %v944 = vpow.pop %v943
    %v945 = vadd.f32 %v942, 1.0
    %v946 = vadd.f32 %v944, 1.0
    %v947 = vrcp.pop %v945
    %v948 = vmul.f32 %v945, %v947
    %v949 = vsub.f32 1.0, %v948
    %v950 = vmul.f32 %v947, %v949
    %v951 = vadd.f32 %v947, %v950
    %vm952 = vweird.f32 %v945
    %vm953 = vweird.f32 %v947
    %vm954 = vmor %vm952, %vm953
    %v955 = vsel %vm954, %v947, %v951
    %v956 = vand.u32 2147483647, %v945
    %vm957 = vcmp.eq.f32.partialorder %v956, 8.507059e+37
    %v958 = vand.u32 %v945, 2147483648
    %v959 = vor.u32 1.1754944e-38, %v958
    %v960 = vsel %vm957, %v959, %v955
    %v961 = vmul.f32 1.0, %v960
    %v962 = vrcp.pop %v946
    %v963 = vmul.f32 %v946, %v962
    %v964 = vsub.f32 1.0, %v963
    %v965 = vmul.f32 %v962, %v964
    %v966 = vadd.f32 %v962, %v965
    %vm967 = vweird.f32 %v946
    %vm968 = vweird.f32 %v962
    %vm969 = vmor %vm967, %vm968
    %v970 = vsel %vm969, %v962, %v966
    %v971 = vand.u32 2147483647, %v946
    %vm972 = vcmp.eq.f32.partialorder %v971, 8.507059e+37
    %v973 = vand.u32 %v946, 2147483648
    %v974 = vor.u32 1.1754944e-38, %v973
    %v975 = vsel %vm972, %v974, %v970
    %v976 = vmul.f32 1.0, %v975
    %v977 = vtanh.pop %v937
    %v978 = vmul.f32 %v961, %v499
    %980 = vrot.lane.b32.xlu0 %v977, 64
    %v981 = vpop.permute.xlu0 %980
    %v983 = vmul.f32 %v961, %v981
    %985 = vrot.lane.b32.xlu0 %v983, 64
    %v986 = vpop.permute.xlu0 %985
    %v988 = vadd.f32 %v978, %v986
    %v989 = vtanh.pop %v988
    %991 = vrot.lane.b32.xlu0 %v989, 64
    %v992 = vpop.permute.xlu0 %991
    %v994 = vmul.f32 %v976, %v992
    %996 = vrot.lane.b32.xlu0 %v744, 64
    %v997 = vpop.permute.xlu0 %996
    %v999 = vsel %vm243, %v994, %v997
    %v1000 = vsel %vm243, %v997, 0
    %1002 = vmatpush.msra.mxu0 %v197
    %1003 = vmatpush.msra.mxu0 %v193
    %1004 = vmatpush.msra.mxu0 %v189
    %1005 = vmatpush.msra.mxu0 %v185
    %1006 = vmatpush.msra.mxu0 %v181
    %1007 = vmatpush.msra.mxu0 %v177
    %1008 = vmatpush.msra.mxu0 %v173
    %1009 = vmatpush.msra.mxu0 %v169
    %1010 = vmatpush.msra.mxu0 %v165
    %1011 = vmatpush.msra.mxu0 %v161
    %1012 = vmatpush.msra.mxu0 %v157
    %1013 = vmatpush.msra.mxu0 %v153
    %1014 = vmatpush.msra.mxu0 %v149
    %1015 = vmatpush.msra.mxu0 %v145
    %1016 = vmatpush.msra.mxu0 %v141
    %1017 = vmatpush.msra.mxu0 %v137
    %1018 = vmatmul.f32.gmra.mxu0 %v999
    %v1019 = vpop.f32.mrf.mxu0
    %v1020 = vadd.f32 %v512, %v1019
    %1021 = vdwg.mxu0
    %1022 = vmatpush.msra.mxu0 0.0
    %1023 = vmatpush.msra.mxu0 0.0
    %1024 = vmatpush.msra.mxu0 0.0
    %1025 = vmatpush.msra.mxu0 0.0
    %1026 = vmatpush.msra.mxu0 0.0
    %1027 = vmatpush.msra.mxu0 0.0
    %1028 = vmatpush.msra.mxu0 0.0
    %1029 = vmatpush.msra.mxu0 0.0
    %1030 = vmatpush.msra.mxu0 %v229
    %1031 = vmatpush.msra.mxu0 %v225
    %1032 = vmatpush.msra.mxu0 %v221
    %1033 = vmatpush.msra.mxu0 %v217
    %1034 = vmatpush.msra.mxu0 %v213
    %1035 = vmatpush.msra.mxu0 %v209
    %1036 = vmatpush.msra.mxu0 %v205
    %1037 = vmatpush.msra.mxu0 %v201
    %1038 = vmatmul.f32.gmra.mxu0 %v1000
    %v1039 = vpop.f32.mrf.mxu0
    %v1040 = vadd.f32 %v1020, %v1039
    %1041 = vdwg.mxu0
    %1042 = vmatpush.msra.mxu0 %v198
    %1043 = vmatpush.msra.mxu0 %v194
    %1044 = vmatpush.msra.mxu0 %v190
    %1045 = vmatpush.msra.mxu0 %v186
    %1046 = vmatpush.msra.mxu0 %v182
    %1047 = vmatpush.msra.mxu0 %v178
    %1048 = vmatpush.msra.mxu0 %v174
    %1049 = vmatpush.msra.mxu0 %v170
    %1050 = vmatpush.msra.mxu0 %v166
    %1051 = vmatpush.msra.mxu0 %v162
    %1052 = vmatpush.msra.mxu0 %v158
    %1053 = vmatpush.msra.mxu0 %v154
    %1054 = vmatpush.msra.mxu0 %v150
    %1055 = vmatpush.msra.mxu0 %v146
    %1056 = vmatpush.msra.mxu0 %v142
    %1057 = vmatpush.msra.mxu0 %v138
    %1058 = vmatmul.f32.gmra.mxu0 %v999
    %v1059 = vpop.f32.mrf.mxu0
    %v1060 = vadd.f32 %v513, %v1059
    %1061 = vdwg.mxu0
    %1062 = vmatpush.msra.mxu0 0.0
    %1063 = vmatpush.msra.mxu0 0.0
    %1064 = vmatpush.msra.mxu0 0.0
    %1065 = vmatpush.msra.mxu0 0.0
    %1066 = vmatpush.msra.mxu0 0.0
    %1067 = vmatpush.msra.mxu0 0.0
    %1068 = vmatpush.msra.mxu0 0.0
    %1069 = vmatpush.msra.mxu0 0.0
    %1070 = vmatpush.msra.mxu0 %v230
    %1071 = vmatpush.msra.mxu0 %v226
    %1072 = vmatpush.msra.mxu0 %v222
    %1073 = vmatpush.msra.mxu0 %v218
    %1074 = vmatpush.msra.mxu0 %v214
    %1075 = vmatpush.msra.mxu0 %v210
    %1076 = vmatpush.msra.mxu0 %v206
    %1077 = vmatpush.msra.mxu0 %v202
    %1078 = vmatmul.f32.gmra.mxu0 %v1000
    %v1079 = vpop.f32.mrf.mxu0
    %v1080 = vadd.f32 %v1060, %v1079
    %1081 = vdwg.mxu0
    %1082 = vmatpush.msra.mxu0 %v199
    %1083 = vmatpush.msra.mxu0 %v195
    %1084 = vmatpush.msra.mxu0 %v191
    %1085 = vmatpush.msra.mxu0 %v187
    %1086 = vmatpush.msra.mxu0 %v183
    %1087 = vmatpush.msra.mxu0 %v179
    %1088 = vmatpush.msra.mxu0 %v175
    %1089 = vmatpush.msra.mxu0 %v171
    %1090 = vmatpush.msra.mxu0 %v167
    %1091 = vmatpush.msra.mxu0 %v163
    %1092 = vmatpush.msra.mxu0 %v159
    %1093 = vmatpush.msra.mxu0 %v155
    %1094 = vmatpush.msra.mxu0 %v151
    %1095 = vmatpush.msra.mxu0 %v147
    %1096 = vmatpush.msra.mxu0 %v143
    %1097 = vmatpush.msra.mxu0 %v139
    %1098 = vmatmul.f32.gmra.mxu0 %v999
    %v1099 = vpop.f32.mrf.mxu0
    %v1100 = vadd.f32 %v514, %v1099
    %1101 = vdwg.mxu0
    %1102 = vmatpush.msra.mxu0 0.0
    %1103 = vmatpush.msra.mxu0 0.0
    %1104 = vmatpush.msra.mxu0 0.0
    %1105 = vmatpush.msra.mxu0 0.0
    %1106 = vmatpush.msra.mxu0 0.0
    %1107 = vmatpush.msra.mxu0 0.0
    %1108 = vmatpush.msra.mxu0 0.0
    %1109 = vmatpush.msra.mxu0 0.0
    %1110 = vmatpush.msra.mxu0 %v231
    %1111 = vmatpush.msra.mxu0 %v227
    %1112 = vmatpush.msra.mxu0 %v223
    %1113 = vmatpush.msra.mxu0 %v219
    %1114 = vmatpush.msra.mxu0 %v215
    %1115 = vmatpush.msra.mxu0 %v211
    %1116 = vmatpush.msra.mxu0 %v207
    %1117 = vmatpush.msra.mxu0 %v203
    %1118 = vmatmul.f32.gmra.mxu0 %v1000
    %v1119 = vpop.f32.mrf.mxu0
    %v1120 = vadd.f32 %v1100, %v1119
    %1121 = vdwg.mxu0
    %1122 = vmatpush.msra.mxu0 %v200
    %1123 = vmatpush.msra.mxu0 %v196
    %1124 = vmatpush.msra.mxu0 %v192
    %1125 = vmatpush.msra.mxu0 %v188
    %1126 = vmatpush.msra.mxu0 %v184
    %1127 = vmatpush.msra.mxu0 %v180
    %1128 = vmatpush.msra.mxu0 %v176
    %1129 = vmatpush.msra.mxu0 %v172
    %1130 = vmatpush.msra.mxu0 %v168
    %1131 = vmatpush.msra.mxu0 %v164
    %1132 = vmatpush.msra.mxu0 %v160
    %1133 = vmatpush.msra.mxu0 %v156
    %1134 = vmatpush.msra.mxu0 %v152
    %1135 = vmatpush.msra.mxu0 %v148
    %1136 = vmatpush.msra.mxu0 %v144
    %1137 = vmatpush.msra.mxu0 %v140
    %1138 = vmatmul.f32.gmra.mxu0 %v999
    %v1139 = vpop.f32.mrf.mxu0
    %v1140 = vadd.f32 %v515, %v1139
    %1141 = vdwg.mxu0
    %1142 = vmatpush.msra.mxu0 0.0
    %1143 = vmatpush.msra.mxu0 0.0
    %1144 = vmatpush.msra.mxu0 0.0
    %1145 = vmatpush.msra.mxu0 0.0
    %1146 = vmatpush.msra.mxu0 0.0
    %1147 = vmatpush.msra.mxu0 0.0
    %1148 = vmatpush.msra.mxu0 0.0
    %1149 = vmatpush.msra.mxu0 0.0
    %1150 = vmatpush.msra.mxu0 %v232
    %1151 = vmatpush.msra.mxu0 %v228
    %1152 = vmatpush.msra.mxu0 %v224
    %1153 = vmatpush.msra.mxu0 %v220
    %1154 = vmatpush.msra.mxu0 %v216
    %1155 = vmatpush.msra.mxu0 %v212
    %1156 = vmatpush.msra.mxu0 %v208
    %1157 = vmatpush.msra.mxu0 %v204
    %1158 = vmatmul.f32.gmra.mxu0 %v1000
    %v1159 = vpop.f32.mrf.mxu0
    %v1160 = vadd.f32 %v1140, %v1159
    %1161 = vdwg.mxu0
    %v1162 = vxor.u32 %v1040, 2147483648
    %v1163 = vxor.u32 %v1080, 2147483648
    %v1164 = vxor.u32 %v1120, 2147483648
    %v1165 = vmul.f32 %v1162, 1.442695
    %v1166 = vpow.pop %v1165
    %v1167 = vmul.f32 %v1163, 1.442695
    %v1168 = vpow.pop %v1167
    %v1169 = vmul.f32 %v1164, 1.442695
    %v1170 = vpow.pop %v1169
    %v1171 = vadd.f32 %v1166, 1.0
    %v1172 = vadd.f32 %v1168, 1.0
    %v1173 = vadd.f32 %v1170, 1.0
    %v1174 = vrcp.pop %v1171
    %v1175 = vmul.f32 %v1171, %v1174
    %v1176 = vsub.f32 1.0, %v1175
    %v1177 = vmul.f32 %v1174, %v1176
    %v1178 = vadd.f32 %v1174, %v1177
    %vm1179 = vweird.f32 %v1171
    %vm1180 = vweird.f32 %v1174
    %vm1181 = vmor %vm1179, %vm1180
    %v1182 = vsel %vm1181, %v1174, %v1178
    %v1183 = vand.u32 2147483647, %v1171
    %vm1184 = vcmp.eq.f32.partialorder %v1183, 8.507059e+37
    %v1185 = vand.u32 %v1171, 2147483648
    %v1186 = vor.u32 1.1754944e-38, %v1185
    %v1187 = vsel %vm1184, %v1186, %v1182
    %v1188 = vmul.f32 1.0, %v1187
    %v1189 = vrcp.pop %v1172
    %v1190 = vmul.f32 %v1172, %v1189
    %v1191 = vsub.f32 1.0, %v1190
    %v1192 = vmul.f32 %v1189, %v1191
    %v1193 = vadd.f32 %v1189, %v1192
    %vm1194 = vweird.f32 %v1172
    %vm1195 = vweird.f32 %v1189
    %vm1196 = vmor %vm1194, %vm1195
    %v1197 = vsel %vm1196, %v1189, %v1193
    %v1198 = vand.u32 2147483647, %v1172
    %vm1199 = vcmp.eq.f32.partialorder %v1198, 8.507059e+37
    %v1200 = vand.u32 %v1172, 2147483648
    %v1201 = vor.u32 1.1754944e-38, %v1200
    %v1202 = vsel %vm1199, %v1201, %v1197
    %v1203 = vmul.f32 1.0, %v1202
    %v1204 = vrcp.pop %v1173
    %v1205 = vmul.f32 %v1173, %v1204
    %v1206 = vsub.f32 1.0, %v1205
    %v1207 = vmul.f32 %v1204, %v1206
    %v1208 = vadd.f32 %v1204, %v1207
    %vm1209 = vweird.f32 %v1173
    %vm1210 = vweird.f32 %v1204
    %vm1211 = vmor %vm1209, %vm1210
    %v1212 = vsel %vm1211, %v1204, %v1208
    %v1213 = vand.u32 2147483647, %v1173
    %vm1214 = vcmp.eq.f32.partialorder %v1213, 8.507059e+37
    %v1215 = vand.u32 %v1173, 2147483648
    %v1216 = vor.u32 1.1754944e-38, %v1215
    %v1217 = vsel %vm1214, %v1216, %v1212
    %v1218 = vmul.f32 1.0, %v1217
    %v1219 = vtanh.pop %v1160
    %v1220 = vmul.f32 %v1203, %v742
    %v1221 = vmul.f32 %v1188, %v1219
    %v1222 = vadd.f32 %v1220, %v1221
    %v1223 = vtanh.pop %v1222
    %v1224 = vmul.f32 %v1218, %v1223
    %s1225 = scalar_lea.vmem [#allocation8], 2
    %v1226 = vld [vmem:[%s1225] ss:$8 sm:$0x3]
    %s1227 = scalar_lea.vmem [#allocation8], 18
    %v1228 = vld [vmem:[%s1227] ss:$8 sm:$0x3]
    %1229 = vst [vmem:[#allocation1] ss:$9 sm:$0xff] %v885
    %s1230 = scalar_lea.vmem [#allocation1], 1
    %1231 = vst [vmem:[%s1230] ss:$9 sm:$0xff] %v886
    %v1232 = vld [vmem:[#allocation1] sm:$0xff]
    %v1233 = vsel %vm243, %v1232, 0
    %1235 = vmatpush.msra.mxu0 0.0
    %1236 = vmatpush.msra.mxu0 0.0
    %1237 = vmatpush.msra.mxu0 0.0
    %1238 = vmatpush.msra.mxu0 0.0
    %1239 = vmatpush.msra.mxu0 0.0
    %1240 = vmatpush.msra.mxu0 0.0
    %1241 = vmatpush.msra.mxu0 0.0
    %1242 = vmatpush.msra.mxu0 0.0
    %1243 = vmatpush.msra.mxu0 %v102
    %1244 = vmatpush.msra.mxu0 %v100
    %1245 = vmatpush.msra.mxu0 %v98
    %1246 = vmatpush.msra.mxu0 %v96
    %1247 = vmatpush.msra.mxu0 %v94
    %1248 = vmatpush.msra.mxu0 %v92
    %1249 = vmatpush.msra.mxu0 %v90
    %1250 = vmatpush.msra.mxu0 %v88
    %1251 = vmatmul.f32.gmra.mxu0 %v1233
    %v1252 = vpop.f32.mrf.mxu0
    %v1253 = vadd.f32 0.0, %v1252
    %1254 = vdwg.mxu0
    %1255 = vmatpush.msra.mxu0 0.0
    %1256 = vmatpush.msra.mxu0 0.0
    %1257 = vmatpush.msra.mxu0 0.0
    %1258 = vmatpush.msra.mxu0 0.0
    %1259 = vmatpush.msra.mxu0 0.0
    %1260 = vmatpush.msra.mxu0 0.0
    %1261 = vmatpush.msra.mxu0 0.0
    %1262 = vmatpush.msra.mxu0 0.0
    %1263 = vmatpush.msra.mxu0 %v103
    %1264 = vmatpush.msra.mxu0 %v101
    %1265 = vmatpush.msra.mxu0 %v99
    %1266 = vmatpush.msra.mxu0 %v97
    %1267 = vmatpush.msra.mxu0 %v95
    %1268 = vmatpush.msra.mxu0 %v93
    %1269 = vmatpush.msra.mxu0 %v91
    %1270 = vmatpush.msra.mxu0 %v89
    %1271 = vmatmul.f32.gmra.mxu0 %v1233
    %v1272 = vpop.f32.mrf.mxu0
    %v1273 = vadd.f32 0.0, %v1272
    %1274 = vdwg.mxu0
    %v1277 = vrot.slane %v1273, 7
    %v1278 = vsel %vm290, %v1253, %v1277
    %v1279 = vsel %vm292, %v1253, %v1277
    %v1280 = vrot.slane %v1279, 1
    %v1283 = vadd.f32 %v1226, %v1278
    %v1284 = vadd.f32 %v1228, %v1280
    %v1285 = vxor.u32 %v1283, 2147483648
    %v1286 = vxor.u32 %v1284, 2147483648
    %v1287 = vmul.f32 %v1285, 1.442695
    %v1288 = vpow.pop %v1287
    %v1289 = vmul.f32 %v1286, 1.442695
    %v1290 = vpow.pop %v1289
    %v1291 = vadd.f32 %v1288, 1.0
    %v1292 = vadd.f32 %v1290, 1.0
    %v1293 = vrcp.pop %v1291
    %v1294 = vmul.f32 %v1291, %v1293
    %v1295 = vsub.f32 1.0, %v1294
    %v1296 = vmul.f32 %v1293, %v1295
    %v1297 = vadd.f32 %v1293, %v1296
    %vm1298 = vweird.f32 %v1291
    %vm1299 = vweird.f32 %v1293
    %vm1300 = vmor %vm1298, %vm1299
    %v1301 = vsel %vm1300, %v1293, %v1297
    %v1302 = vand.u32 2147483647, %v1291
    %vm1303 = vcmp.eq.f32.partialorder %v1302, 8.507059e+37
    %v1304 = vand.u32 %v1291, 2147483648
    %v1305 = vor.u32 1.1754944e-38, %v1304
    %v1306 = vsel %vm1303, %v1305, %v1301
    %v1307 = vmul.f32 1.0, %v1306
    %v1308 = vrcp.pop %v1292
    %v1309 = vmul.f32 %v1292, %v1308
    %v1310 = vsub.f32 1.0, %v1309
    %v1311 = vmul.f32 %v1308, %v1310
    %v1312 = vadd.f32 %v1308, %v1311
    %vm1313 = vweird.f32 %v1292
    %vm1314 = vweird.f32 %v1308
    %vm1315 = vmor %vm1313, %vm1314
    %v1316 = vsel %vm1315, %v1308, %v1312
    %v1317 = vand.u32 2147483647, %v1292
    %vm1318 = vcmp.eq.f32.partialorder %v1317, 8.507059e+37
    %v1319 = vand.u32 %v1292, 2147483648
    %v1320 = vor.u32 1.1754944e-38, %v1319
    %v1321 = vsel %vm1318, %v1320, %v1316
    %v1322 = vmul.f32 1.0, %v1321
    %1325 = vrot.lane.b32.xlu0 %v1283, 64
    %v1326 = vpop.permute.xlu0 %1325
    %1327 = vrot.lane.b32.xlu0 %v1284, 64
    %v1328 = vpop.permute.xlu0 %1327
    %v1329 = vrot.slane %v1326, 1
    %v1330 = vrot.slane %v1328, 1
    %v1333 = vtanh.pop %v1329
    %v1334 = vtanh.pop %v1330
    %v1335 = vmul.f32 %v1307, %v867
    %v1336 = vmul.f32 %v1322, %v868
    %v1337 = vmul.f32 %v1307, %v1333
    %v1338 = vmul.f32 %v1322, %v1334
    %1341 = vrot.lane.b32.xlu0 %v1337, 64
    %v1342 = vpop.permute.xlu0 %1341
    %1343 = vrot.lane.b32.xlu0 %v1338, 64
    %v1344 = vpop.permute.xlu0 %1343
    %v1347 = vadd.f32 %v1335, %v1342
    %v1348 = vadd.f32 %v1336, %v1344
    %v1349 = vtanh.pop %v1347
    %v1350 = vtanh.pop %v1348
    %v1353 = vrot.slane %v1307, 1
    %v1354 = vrot.slane %v1322, 1
    %1359 = vrot.lane.b32.xlu0 %v1349, 64
    %v1360 = vpop.permute.xlu0 %1359
    %1361 = vrot.lane.b32.xlu0 %v1350, 64
    %v1362 = vpop.permute.xlu0 %1361
    %v1365 = vmul.f32 %v1353, %v1360
    %v1366 = vmul.f32 %v1354, %v1362
    %1369 = vst [vmem:[#allocation1] ss:$9 sm:$0xff] %v1365
    %s1370 = scalar_lea.vmem [#allocation1], 1
    %1371 = vst [vmem:[%s1370] ss:$9 sm:$0xff] %v1366
    %v1372 = vld [vmem:[#allocation1] sm:$0xff]
    %1375 = vrot.lane.b32.xlu0 %v994, 64
    %v1376 = vpop.permute.xlu0 %1375
    %v1378 = vsel %vm243, %v1372, %v1376
    %1379 = vmatpush.msra.mxu0 %v134
    %1380 = vmatpush.msra.mxu0 %v132
    %1381 = vmatpush.msra.mxu0 %v130
    %1382 = vmatpush.msra.mxu0 %v128
    %1383 = vmatpush.msra.mxu0 %v126
    %1384 = vmatpush.msra.mxu0 %v124
    %1385 = vmatpush.msra.mxu0 %v122
    %1386 = vmatpush.msra.mxu0 %v120
    %1387 = vmatpush.msra.mxu0 %v118
    %1388 = vmatpush.msra.mxu0 %v116
    %1389 = vmatpush.msra.mxu0 %v114
    %1390 = vmatpush.msra.mxu0 %v112
    %1391 = vmatpush.msra.mxu0 %v110
    %1392 = vmatpush.msra.mxu0 %v108
    %1393 = vmatpush.msra.mxu0 %v106
    %1394 = vmatpush.msra.mxu0 %v104
    %1395 = vmatmul.f32.gmra.mxu0 %v1378
    %v1396 = vpop.f32.mrf.mxu0
    %v1397 = vadd.f32 %v402, %v1396
    %1398 = vdwg.mxu0
    %1399 = vmatpush.msra.mxu0 %v135
    %1400 = vmatpush.msra.mxu0 %v133
    %1401 = vmatpush.msra.mxu0 %v131
    %1402 = vmatpush.msra.mxu0 %v129
    %1403 = vmatpush.msra.mxu0 %v127
    %1404 = vmatpush.msra.mxu0 %v125
    %1405 = vmatpush.msra.mxu0 %v123
    %1406 = vmatpush.msra.mxu0 %v121
    %1407 = vmatpush.msra.mxu0 %v119
    %1408 = vmatpush.msra.mxu0 %v117
    %1409 = vmatpush.msra.mxu0 %v115
    %1410 = vmatpush.msra.mxu0 %v113
    %1411 = vmatpush.msra.mxu0 %v111
    %1412 = vmatpush.msra.mxu0 %v109
    %1413 = vmatpush.msra.mxu0 %v107
    %1414 = vmatpush.msra.mxu0 %v105
    %1415 = vmatmul.f32.gmra.mxu0 %v1378
    %v1416 = vpop.f32.mrf.mxu0
    %v1417 = vadd.f32 %v403, %v1416
    %1418 = vdwg.mxu0
    %v1419 = vxor.u32 %v1397, 2147483648
    %v1420 = vxor.u32 %v1417, 2147483648
    %v1421 = vmul.f32 %v1419, 1.442695
    %v1422 = vpow.pop %v1421
    %v1423 = vmul.f32 %v1420, 1.442695
    %v1424 = vpow.pop %v1423
    %v1425 = vadd.f32 %v1422, 1.0
    %v1426 = vadd.f32 %v1424, 1.0
    %v1427 = vrcp.pop %v1425
    %v1428 = vmul.f32 %v1425, %v1427
    %v1429 = vsub.f32 1.0, %v1428
    %v1430 = vmul.f32 %v1427, %v1429
    %v1431 = vadd.f32 %v1427, %v1430
    %vm1432 = vweird.f32 %v1425
    %vm1433 = vweird.f32 %v1427
    %vm1434 = vmor %vm1432, %vm1433
    %v1435 = vsel %vm1434, %v1427, %v1431
    %v1436 = vand.u32 2147483647, %v1425
    %vm1437 = vcmp.eq.f32.partialorder %v1436, 8.507059e+37
    %v1438 = vand.u32 %v1425, 2147483648
    %v1439 = vor.u32 1.1754944e-38, %v1438
    %v1440 = vsel %vm1437, %v1439, %v1435
    %v1441 = vmul.f32 1.0, %v1440
    %v1442 = vrcp.pop %v1426
    %v1443 = vmul.f32 %v1426, %v1442
    %v1444 = vsub.f32 1.0, %v1443
    %v1445 = vmul.f32 %v1442, %v1444
    %v1446 = vadd.f32 %v1442, %v1445
    %vm1447 = vweird.f32 %v1426
    %vm1448 = vweird.f32 %v1442
    %vm1449 = vmor %vm1447, %vm1448
    %v1450 = vsel %vm1449, %v1442, %v1446
    %v1451 = vand.u32 2147483647, %v1426
    %vm1452 = vcmp.eq.f32.partialorder %v1451, 8.507059e+37
    %v1453 = vand.u32 %v1426, 2147483648
    %v1454 = vor.u32 1.1754944e-38, %v1453
    %v1455 = vsel %vm1452, %v1454, %v1450
    %v1456 = vmul.f32 1.0, %v1455
    %v1457 = vtanh.pop %v1417
    %v1458 = vmul.f32 %v1441, %v988
    %1460 = vrot.lane.b32.xlu0 %v1457, 64
    %v1461 = vpop.permute.xlu0 %1460
    %v1463 = vmul.f32 %v1441, %v1461
    %1465 = vrot.lane.b32.xlu0 %v1463, 64
    %v1466 = vpop.permute.xlu0 %1465
    %v1468 = vadd.f32 %v1458, %v1466
    %v1469 = vtanh.pop %v1468
    %1471 = vrot.lane.b32.xlu0 %v1469, 64
    %v1472 = vpop.permute.xlu0 %1471
    %v1474 = vmul.f32 %v1456, %v1472
    %1476 = vrot.lane.b32.xlu0 %v1224, 64
    %v1477 = vpop.permute.xlu0 %1476
    %v1479 = vsel %vm243, %v1474, %v1477
    %v1480 = vsel %vm243, %v1477, 0
    %1482 = vmatpush.msra.mxu0 %v197
    %1483 = vmatpush.msra.mxu0 %v193
    %1484 = vmatpush.msra.mxu0 %v189
    %1485 = vmatpush.msra.mxu0 %v185
    %1486 = vmatpush.msra.mxu0 %v181
    %1487 = vmatpush.msra.mxu0 %v177
    %1488 = vmatpush.msra.mxu0 %v173
    %1489 = vmatpush.msra.mxu0 %v169
    %1490 = vmatpush.msra.mxu0 %v165
    %1491 = vmatpush.msra.mxu0 %v161
    %1492 = vmatpush.msra.mxu0 %v157
    %1493 = vmatpush.msra.mxu0 %v153
    %1494 = vmatpush.msra.mxu0 %v149
    %1495 = vmatpush.msra.mxu0 %v145
    %1496 = vmatpush.msra.mxu0 %v141
    %1497 = vmatpush.msra.mxu0 %v137
    %1498 = vmatmul.f32.gmra.mxu0 %v1479
    %v1499 = vpop.f32.mrf.mxu0
    %v1500 = vadd.f32 %v512, %v1499
    %1501 = vdwg.mxu0
    %1502 = vmatpush.msra.mxu0 0.0
    %1503 = vmatpush.msra.mxu0 0.0
    %1504 = vmatpush.msra.mxu0 0.0
    %1505 = vmatpush.msra.mxu0 0.0
    %1506 = vmatpush.msra.mxu0 0.0
    %1507 = vmatpush.msra.mxu0 0.0
    %1508 = vmatpush.msra.mxu0 0.0
    %1509 = vmatpush.msra.mxu0 0.0
    %1510 = vmatpush.msra.mxu0 %v229
    %1511 = vmatpush.msra.mxu0 %v225
    %1512 = vmatpush.msra.mxu0 %v221
    %1513 = vmatpush.msra.mxu0 %v217
    %1514 = vmatpush.msra.mxu0 %v213
    %1515 = vmatpush.msra.mxu0 %v209
    %1516 = vmatpush.msra.mxu0 %v205
    %1517 = vmatpush.msra.mxu0 %v201
    %1518 = vmatmul.f32.gmra.mxu0 %v1480
    %v1519 = vpop.f32.mrf.mxu0
    %v1520 = vadd.f32 %v1500, %v1519
    %1521 = vdwg.mxu0
    %1522 = vmatpush.msra.mxu0 %v198
    %1523 = vmatpush.msra.mxu0 %v194
    %1524 = vmatpush.msra.mxu0 %v190
    %1525 = vmatpush.msra.mxu0 %v186
    %1526 = vmatpush.msra.mxu0 %v182
    %1527 = vmatpush.msra.mxu0 %v178
    %1528 = vmatpush.msra.mxu0 %v174
    %1529 = vmatpush.msra.mxu0 %v170
    %1530 = vmatpush.msra.mxu0 %v166
    %1531 = vmatpush.msra.mxu0 %v162
    %1532 = vmatpush.msra.mxu0 %v158
    %1533 = vmatpush.msra.mxu0 %v154
    %1534 = vmatpush.msra.mxu0 %v150
    %1535 = vmatpush.msra.mxu0 %v146
    %1536 = vmatpush.msra.mxu0 %v142
    %1537 = vmatpush.msra.mxu0 %v138
    %1538 = vmatmul.f32.gmra.mxu0 %v1479
    %v1539 = vpop.f32.mrf.mxu0
    %v1540 = vadd.f32 %v513, %v1539
    %1541 = vdwg.mxu0
    %1542 = vmatpush.msra.mxu0 0.0
    %1543 = vmatpush.msra.mxu0 0.0
    %1544 = vmatpush.msra.mxu0 0.0
    %1545 = vmatpush.msra.mxu0 0.0
    %1546 = vmatpush.msra.mxu0 0.0
    %1547 = vmatpush.msra.mxu0 0.0
    %1548 = vmatpush.msra.mxu0 0.0
    %1549 = vmatpush.msra.mxu0 0.0
    %1550 = vmatpush.msra.mxu0 %v230
    %1551 = vmatpush.msra.mxu0 %v226
    %1552 = vmatpush.msra.mxu0 %v222
    %1553 = vmatpush.msra.mxu0 %v218
    %1554 = vmatpush.msra.mxu0 %v214
    %1555 = vmatpush.msra.mxu0 %v210
    %1556 = vmatpush.msra.mxu0 %v206
    %1557 = vmatpush.msra.mxu0 %v202
    %1558 = vmatmul.f32.gmra.mxu0 %v1480
    %v1559 = vpop.f32.mrf.mxu0
    %v1560 = vadd.f32 %v1540, %v1559
    %1561 = vdwg.mxu0
    %1562 = vmatpush.msra.mxu0 %v199
    %1563 = vmatpush.msra.mxu0 %v195
    %1564 = vmatpush.msra.mxu0 %v191
    %1565 = vmatpush.msra.mxu0 %v187
    %1566 = vmatpush.msra.mxu0 %v183
    %1567 = vmatpush.msra.mxu0 %v179
    %1568 = vmatpush.msra.mxu0 %v175
    %1569 = vmatpush.msra.mxu0 %v171
    %1570 = vmatpush.msra.mxu0 %v167
    %1571 = vmatpush.msra.mxu0 %v163
    %1572 = vmatpush.msra.mxu0 %v159
    %1573 = vmatpush.msra.mxu0 %v155
    %1574 = vmatpush.msra.mxu0 %v151
    %1575 = vmatpush.msra.mxu0 %v147
    %1576 = vmatpush.msra.mxu0 %v143
    %1577 = vmatpush.msra.mxu0 %v139
    %1578 = vmatmul.f32.gmra.mxu0 %v1479
    %v1579 = vpop.f32.mrf.mxu0
    %v1580 = vadd.f32 %v514, %v1579
    %1581 = vdwg.mxu0
    %1582 = vmatpush.msra.mxu0 0.0
    %1583 = vmatpush.msra.mxu0 0.0
    %1584 = vmatpush.msra.mxu0 0.0
    %1585 = vmatpush.msra.mxu0 0.0
    %1586 = vmatpush.msra.mxu0 0.0
    %1587 = vmatpush.msra.mxu0 0.0
    %1588 = vmatpush.msra.mxu0 0.0
    %1589 = vmatpush.msra.mxu0 0.0
    %1590 = vmatpush.msra.mxu0 %v231
    %1591 = vmatpush.msra.mxu0 %v227
    %1592 = vmatpush.msra.mxu0 %v223
    %1593 = vmatpush.msra.mxu0 %v219
    %1594 = vmatpush.msra.mxu0 %v215
    %1595 = vmatpush.msra.mxu0 %v211
    %1596 = vmatpush.msra.mxu0 %v207
    %1597 = vmatpush.msra.mxu0 %v203
    %1598 = vmatmul.f32.gmra.mxu0 %v1480
    %v1599 = vpop.f32.mrf.mxu0
    %v1600 = vadd.f32 %v1580, %v1599
    %1601 = vdwg.mxu0
    %1602 = vmatpush.msra.mxu0 %v200
    %1603 = vmatpush.msra.mxu0 %v196
    %1604 = vmatpush.msra.mxu0 %v192
    %1605 = vmatpush.msra.mxu0 %v188
    %1606 = vmatpush.msra.mxu0 %v184
    %1607 = vmatpush.msra.mxu0 %v180
    %1608 = vmatpush.msra.mxu0 %v176
    %1609 = vmatpush.msra.mxu0 %v172
    %1610 = vmatpush.msra.mxu0 %v168
    %1611 = vmatpush.msra.mxu0 %v164
    %1612 = vmatpush.msra.mxu0 %v160
    %1613 = vmatpush.msra.mxu0 %v156
    %1614 = vmatpush.msra.mxu0 %v152
    %1615 = vmatpush.msra.mxu0 %v148
    %1616 = vmatpush.msra.mxu0 %v144
    %1617 = vmatpush.msra.mxu0 %v140
    %1618 = vmatmul.f32.gmra.mxu0 %v1479
    %v1619 = vpop.f32.mrf.mxu0
    %v1620 = vadd.f32 %v515, %v1619
    %1621 = vdwg.mxu0
    %1622 = vmatpush.msra.mxu0 0.0
    %1623 = vmatpush.msra.mxu0 0.0
    %1624 = vmatpush.msra.mxu0 0.0
    %1625 = vmatpush.msra.mxu0 0.0
    %1626 = vmatpush.msra.mxu0 0.0
    %1627 = vmatpush.msra.mxu0 0.0
    %1628 = vmatpush.msra.mxu0 0.0
    %1629 = vmatpush.msra.mxu0 0.0
    %1630 = vmatpush.msra.mxu0 %v232
    %1631 = vmatpush.msra.mxu0 %v228
    %1632 = vmatpush.msra.mxu0 %v224
    %1633 = vmatpush.msra.mxu0 %v220
    %1634 = vmatpush.msra.mxu0 %v216
    %1635 = vmatpush.msra.mxu0 %v212
    %1636 = vmatpush.msra.mxu0 %v208
    %1637 = vmatpush.msra.mxu0 %v204
    %1638 = vmatmul.f32.gmra.mxu0 %v1480
    %v1639 = vpop.f32.mrf.mxu0
    %v1640 = vadd.f32 %v1620, %v1639
    %1641 = vdwg.mxu0
    %v1642 = vxor.u32 %v1520, 2147483648
    %v1643 = vxor.u32 %v1560, 2147483648
    %v1644 = vxor.u32 %v1600, 2147483648
    %v1645 = vmul.f32 %v1642, 1.442695
    %v1646 = vpow.pop %v1645
    %v1647 = vmul.f32 %v1643, 1.442695
    %v1648 = vpow.pop %v1647
    %v1649 = vmul.f32 %v1644, 1.442695
    %v1650 = vpow.pop %v1649
    %v1651 = vadd.f32 %v1646, 1.0
    %v1652 = vadd.f32 %v1648, 1.0
    %v1653 = vadd.f32 %v1650, 1.0
    %v1654 = vrcp.pop %v1651
    %v1655 = vmul.f32 %v1651, %v1654
    %v1656 = vsub.f32 1.0, %v1655
    %v1657 = vmul.f32 %v1654, %v1656
    %v1658 = vadd.f32 %v1654, %v1657
    %vm1659 = vweird.f32 %v1651
    %vm1660 = vweird.f32 %v1654
    %vm1661 = vmor %vm1659, %vm1660
    %v1662 = vsel %vm1661, %v1654, %v1658
    %v1663 = vand.u32 2147483647, %v1651
    %vm1664 = vcmp.eq.f32.partialorder %v1663, 8.507059e+37
    %v1665 = vand.u32 %v1651, 2147483648
    %v1666 = vor.u32 1.1754944e-38, %v1665
    %v1667 = vsel %vm1664, %v1666, %v1662
    %v1668 = vmul.f32 1.0, %v1667
    %v1669 = vrcp.pop %v1652
    %v1670 = vmul.f32 %v1652, %v1669
    %v1671 = vsub.f32 1.0, %v1670
    %v1672 = vmul.f32 %v1669, %v1671
    %v1673 = vadd.f32 %v1669, %v1672
    %vm1674 = vweird.f32 %v1652
    %vm1675 = vweird.f32 %v1669
    %vm1676 = vmor %vm1674, %vm1675
    %v1677 = vsel %vm1676, %v1669, %v1673
    %v1678 = vand.u32 2147483647, %v1652
    %vm1679 = vcmp.eq.f32.partialorder %v1678, 8.507059e+37
    %v1680 = vand.u32 %v1652, 2147483648
    %v1681 = vor.u32 1.1754944e-38, %v1680
    %v1682 = vsel %vm1679, %v1681, %v1677
    %v1683 = vmul.f32 1.0, %v1682
    %v1684 = vrcp.pop %v1653
    %v1685 = vmul.f32 %v1653, %v1684
    %v1686 = vsub.f32 1.0, %v1685
    %v1687 = vmul.f32 %v1684, %v1686
    %v1688 = vadd.f32 %v1684, %v1687
    %vm1689 = vweird.f32 %v1653
    %vm1690 = vweird.f32 %v1684
    %vm1691 = vmor %vm1689, %vm1690
    %v1692 = vsel %vm1691, %v1684, %v1688
    %v1693 = vand.u32 2147483647, %v1653
    %vm1694 = vcmp.eq.f32.partialorder %v1693, 8.507059e+37
    %v1695 = vand.u32 %v1653, 2147483648
    %v1696 = vor.u32 1.1754944e-38, %v1695
    %v1697 = vsel %vm1694, %v1696, %v1692
    %v1698 = vmul.f32 1.0, %v1697
    %v1699 = vtanh.pop %v1640
    %v1700 = vmul.f32 %v1683, %v1222
    %v1701 = vmul.f32 %v1668, %v1699
    %v1702 = vadd.f32 %v1700, %v1701
    %v1703 = vtanh.pop %v1702
    %v1704 = vmul.f32 %v1698, %v1703
    %s1705 = scalar_lea.vmem [#allocation8], 3
    %v1706 = vld [vmem:[%s1705] ss:$8 sm:$0x3]
    %s1707 = scalar_lea.vmem [#allocation8], 19
    %v1708 = vld [vmem:[%s1707] ss:$8 sm:$0x3]
    %1709 = vst [vmem:[#allocation1] ss:$9 sm:$0xff] %v1365
    %s1710 = scalar_lea.vmem [#allocation1], 1
    %1711 = vst [vmem:[%s1710] ss:$9 sm:$0xff] %v1366
    %v1712 = vld [vmem:[#allocation1] sm:$0xff]
    %v1713 = vsel %vm243, %v1712, 0
    %1715 = vmatpush.msra.mxu0 0.0
    %1716 = vmatpush.msra.mxu0 0.0
    %1717 = vmatpush.msra.mxu0 0.0
    %1718 = vmatpush.msra.mxu0 0.0
    %1719 = vmatpush.msra.mxu0 0.0
    %1720 = vmatpush.msra.mxu0 0.0
    %1721 = vmatpush.msra.mxu0 0.0
    %1722 = vmatpush.msra.mxu0 0.0
    %1723 = vmatpush.msra.mxu0 %v102
    %1724 = vmatpush.msra.mxu0 %v100
    %1725 = vmatpush.msra.mxu0 %v98
    %1726 = vmatpush.msra.mxu0 %v96
    %1727 = vmatpush.msra.mxu0 %v94
    %1728 = vmatpush.msra.mxu0 %v92
    %1729 = vmatpush.msra.mxu0 %v90
    %1730 = vmatpush.msra.mxu0 %v88
    %1731 = vmatmul.f32.gmra.mxu0 %v1713
    %v1732 = vpop.f32.mrf.mxu0
    %v1733 = vadd.f32 0.0, %v1732
    %1734 = vdwg.mxu0
    %1735 = vmatpush.msra.mxu0 0.0
    %1736 = vmatpush.msra.mxu0 0.0
    %1737 = vmatpush.msra.mxu0 0.0
    %1738 = vmatpush.msra.mxu0 0.0
    %1739 = vmatpush.msra.mxu0 0.0
    %1740 = vmatpush.msra.mxu0 0.0
    %1741 = vmatpush.msra.mxu0 0.0
    %1742 = vmatpush.msra.mxu0 0.0
    %1743 = vmatpush.msra.mxu0 %v103
    %1744 = vmatpush.msra.mxu0 %v101
    %1745 = vmatpush.msra.mxu0 %v99
    %1746 = vmatpush.msra.mxu0 %v97
    %1747 = vmatpush.msra.mxu0 %v95
    %1748 = vmatpush.msra.mxu0 %v93
    %1749 = vmatpush.msra.mxu0 %v91
    %1750 = vmatpush.msra.mxu0 %v89
    %1751 = vmatmul.f32.gmra.mxu0 %v1713
    %v1752 = vpop.f32.mrf.mxu0
    %v1753 = vadd.f32 0.0, %v1752
    %1754 = vdwg.mxu0
    %v1757 = vrot.slane %v1753, 7
    %v1758 = vsel %vm290, %v1733, %v1757
    %v1759 = vsel %vm292, %v1733, %v1757
    %v1760 = vrot.slane %v1759, 1
    %v1763 = vadd.f32 %v1706, %v1758
    %v1764 = vadd.f32 %v1708, %v1760
    %v1765 = vxor.u32 %v1763, 2147483648
    %v1766 = vxor.u32 %v1764, 2147483648
    %v1767 = vmul.f32 %v1765, 1.442695
    %v1768 = vpow.pop %v1767
    %v1769 = vmul.f32 %v1766, 1.442695
    %v1770 = vpow.pop %v1769
    %v1771 = vadd.f32 %v1768, 1.0
    %v1772 = vadd.f32 %v1770, 1.0
    %v1773 = vrcp.pop %v1771
    %v1774 = vmul.f32 %v1771, %v1773
    %v1775 = vsub.f32 1.0, %v1774
    %v1776 = vmul.f32 %v1773, %v1775
    %v1777 = vadd.f32 %v1773, %v1776
    %vm1778 = vweird.f32 %v1771
    %vm1779 = vweird.f32 %v1773
    %vm1780 = vmor %vm1778, %vm1779
    %v1781 = vsel %vm1780, %v1773, %v1777
    %v1782 = vand.u32 2147483647, %v1771
    %vm1783 = vcmp.eq.f32.partialorder %v1782, 8.507059e+37
    %v1784 = vand.u32 %v1771, 2147483648
    %v1785 = vor.u32 1.1754944e-38, %v1784
    %v1786 = vsel %vm1783, %v1785, %v1781
    %v1787 = vmul.f32 1.0, %v1786
    %v1788 = vrcp.pop %v1772
    %v1789 = vmul.f32 %v1772, %v1788
    %v1790 = vsub.f32 1.0, %v1789
    %v1791 = vmul.f32 %v1788, %v1790
    %v1792 = vadd.f32 %v1788, %v1791
    %vm1793 = vweird.f32 %v1772
    %vm1794 = vweird.f32 %v1788
    %vm1795 = vmor %vm1793, %vm1794
    %v1796 = vsel %vm1795, %v1788, %v1792
    %v1797 = vand.u32 2147483647, %v1772
    %vm1798 = vcmp.eq.f32.partialorder %v1797, 8.507059e+37
    %v1799 = vand.u32 %v1772, 2147483648
    %v1800 = vor.u32 1.1754944e-38, %v1799
    %v1801 = vsel %vm1798, %v1800, %v1796
    %v1802 = vmul.f32 1.0, %v1801
    %1805 = vrot.lane.b32.xlu0 %v1763, 64
    %v1806 = vpop.permute.xlu0 %1805
    %1807 = vrot.lane.b32.xlu0 %v1764, 64
    %v1808 = vpop.permute.xlu0 %1807
    %v1809 = vrot.slane %v1806, 1
    %v1810 = vrot.slane %v1808, 1
    %v1813 = vtanh.pop %v1809
    %v1814 = vtanh.pop %v1810
    %v1815 = vmul.f32 %v1787, %v1347
    %v1816 = vmul.f32 %v1802, %v1348
    %v1817 = vmul.f32 %v1787, %v1813
    %v1818 = vmul.f32 %v1802, %v1814
    %1821 = vrot.lane.b32.xlu0 %v1817, 64
    %v1822 = vpop.permute.xlu0 %1821
    %1823 = vrot.lane.b32.xlu0 %v1818, 64
    %v1824 = vpop.permute.xlu0 %1823
    %v1827 = vadd.f32 %v1815, %v1822
    %v1828 = vadd.f32 %v1816, %v1824
    %v1829 = vtanh.pop %v1827
    %v1830 = vtanh.pop %v1828
    %v1833 = vrot.slane %v1787, 1
    %v1834 = vrot.slane %v1802, 1
    %1839 = vrot.lane.b32.xlu0 %v1829, 64
    %v1840 = vpop.permute.xlu0 %1839
    %1841 = vrot.lane.b32.xlu0 %v1830, 64
    %v1842 = vpop.permute.xlu0 %1841
    %v1845 = vmul.f32 %v1833, %v1840
    %v1846 = vmul.f32 %v1834, %v1842
    %1849 = vst [vmem:[#allocation1] ss:$9 sm:$0xff] %v1845
    %s1850 = scalar_lea.vmem [#allocation1], 1
    %1851 = vst [vmem:[%s1850] ss:$9 sm:$0xff] %v1846
    %v1852 = vld [vmem:[#allocation1] sm:$0xff]
    %1855 = vrot.lane.b32.xlu0 %v1474, 64
    %v1856 = vpop.permute.xlu0 %1855
    %v1858 = vsel %vm243, %v1852, %v1856
    %1859 = vmatpush.msra.mxu0 %v134
    %1860 = vmatpush.msra.mxu0 %v132
    %1861 = vmatpush.msra.mxu0 %v130
    %1862 = vmatpush.msra.mxu0 %v128
    %1863 = vmatpush.msra.mxu0 %v126
    %1864 = vmatpush.msra.mxu0 %v124
    %1865 = vmatpush.msra.mxu0 %v122
    %1866 = vmatpush.msra.mxu0 %v120
    %1867 = vmatpush.msra.mxu0 %v118
    %1868 = vmatpush.msra.mxu0 %v116
    %1869 = vmatpush.msra.mxu0 %v114
    %1870 = vmatpush.msra.mxu0 %v112
    %1871 = vmatpush.msra.mxu0 %v110
    %1872 = vmatpush.msra.mxu0 %v108
    %1873 = vmatpush.msra.mxu0 %v106
    %1874 = vmatpush.msra.mxu0 %v104
    %1875 = vmatmul.f32.gmra.mxu0 %v1858
    %v1876 = vpop.f32.mrf.mxu0
    %v1877 = vadd.f32 %v402, %v1876
    %1878 = vdwg.mxu0
    %1879 = vmatpush.msra.mxu0 %v135
    %1880 = vmatpush.msra.mxu0 %v133
    %1881 = vmatpush.msra.mxu0 %v131
    %1882 = vmatpush.msra.mxu0 %v129
    %1883 = vmatpush.msra.mxu0 %v127
    %1884 = vmatpush.msra.mxu0 %v125
    %1885 = vmatpush.msra.mxu0 %v123
    %1886 = vmatpush.msra.mxu0 %v121
    %1887 = vmatpush.msra.mxu0 %v119
    %1888 = vmatpush.msra.mxu0 %v117
    %1889 = vmatpush.msra.mxu0 %v115
    %1890 = vmatpush.msra.mxu0 %v113
    %1891 = vmatpush.msra.mxu0 %v111
    %1892 = vmatpush.msra.mxu0 %v109
    %1893 = vmatpush.msra.mxu0 %v107
    %1894 = vmatpush.msra.mxu0 %v105
    %1895 = vmatmul.f32.gmra.mxu0 %v1858
    %v1896 = vpop.f32.mrf.mxu0
    %v1897 = vadd.f32 %v403, %v1896
    %1898 = vdwg.mxu0
    %v1899 = vxor.u32 %v1877, 2147483648
    %v1900 = vxor.u32 %v1897, 2147483648
    %v1901 = vmul.f32 %v1899, 1.442695
    %v1902 = vpow.pop %v1901
    %v1903 = vmul.f32 %v1900, 1.442695
    %v1904 = vpow.pop %v1903
    %v1905 = vadd.f32 %v1902, 1.0
    %v1906 = vadd.f32 %v1904, 1.0
    %v1907 = vrcp.pop %v1905
    %v1908 = vmul.f32 %v1905, %v1907
    %v1909 = vsub.f32 1.0, %v1908
    %v1910 = vmul.f32 %v1907, %v1909
    %v1911 = vadd.f32 %v1907, %v1910
    %vm1912 = vweird.f32 %v1905
    %vm1913 = vweird.f32 %v1907
    %vm1914 = vmor %vm1912, %vm1913
    %v1915 = vsel %vm1914, %v1907, %v1911
    %v1916 = vand.u32 2147483647, %v1905
    %vm1917 = vcmp.eq.f32.partialorder %v1916, 8.507059e+37
    %v1918 = vand.u32 %v1905, 2147483648
    %v1919 = vor.u32 1.1754944e-38, %v1918
    %v1920 = vsel %vm1917, %v1919, %v1915
    %v1921 = vmul.f32 1.0, %v1920
    %v1922 = vrcp.pop %v1906
    %v1923 = vmul.f32 %v1906, %v1922
    %v1924 = vsub.f32 1.0, %v1923
    %v1925 = vmul.f32 %v1922, %v1924
    %v1926 = vadd.f32 %v1922, %v1925
    %vm1927 = vweird.f32 %v1906
    %vm1928 = vweird.f32 %v1922
    %vm1929 = vmor %vm1927, %vm1928
    %v1930 = vsel %vm1929, %v1922, %v1926
    %v1931 = vand.u32 2147483647, %v1906
    %vm1932 = vcmp.eq.f32.partialorder %v1931, 8.507059e+37
    %v1933 = vand.u32 %v1906, 2147483648
    %v1934 = vor.u32 1.1754944e-38, %v1933
    %v1935 = vsel %vm1932, %v1934, %v1930
    %v1936 = vmul.f32 1.0, %v1935
    %v1937 = vtanh.pop %v1897
    %v1938 = vmul.f32 %v1921, %v1468
    %1940 = vrot.lane.b32.xlu0 %v1937, 64
    %v1941 = vpop.permute.xlu0 %1940
    %v1943 = vmul.f32 %v1921, %v1941
    %1945 = vrot.lane.b32.xlu0 %v1943, 64
    %v1946 = vpop.permute.xlu0 %1945
    %v1948 = vadd.f32 %v1938, %v1946
    %v1949 = vtanh.pop %v1948
    %1951 = vrot.lane.b32.xlu0 %v1949, 64
    %v1952 = vpop.permute.xlu0 %1951
    %v1954 = vmul.f32 %v1936, %v1952
    %1956 = vrot.lane.b32.xlu0 %v1704, 64
    %v1957 = vpop.permute.xlu0 %1956
    %v1959 = vsel %vm243, %v1954, %v1957
    %v1960 = vsel %vm243, %v1957, 0
    %1962 = vmatpush.msra.mxu0 %v197
    %1963 = vmatpush.msra.mxu0 %v193
    %1964 = vmatpush.msra.mxu0 %v189
    %1965 = vmatpush.msra.mxu0 %v185
    %1966 = vmatpush.msra.mxu0 %v181
    %1967 = vmatpush.msra.mxu0 %v177
    %1968 = vmatpush.msra.mxu0 %v173
    %1969 = vmatpush.msra.mxu0 %v169
    %1970 = vmatpush.msra.mxu0 %v165
    %1971 = vmatpush.msra.mxu0 %v161
    %1972 = vmatpush.msra.mxu0 %v157
    %1973 = vmatpush.msra.mxu0 %v153
    %1974 = vmatpush.msra.mxu0 %v149
    %1975 = vmatpush.msra.mxu0 %v145
    %1976 = vmatpush.msra.mxu0 %v141
    %1977 = vmatpush.msra.mxu0 %v137
    %1978 = vmatmul.f32.gmra.mxu0 %v1959
    %v1979 = vpop.f32.mrf.mxu0
    %v1980 = vadd.f32 %v512, %v1979
    %1981 = vdwg.mxu0
    %1982 = vmatpush.msra.mxu0 0.0
    %1983 = vmatpush.msra.mxu0 0.0
    %1984 = vmatpush.msra.mxu0 0.0
    %1985 = vmatpush.msra.mxu0 0.0
    %1986 = vmatpush.msra.mxu0 0.0
    %1987 = vmatpush.msra.mxu0 0.0
    %1988 = vmatpush.msra.mxu0 0.0
    %1989 = vmatpush.msra.mxu0 0.0
    %1990 = vmatpush.msra.mxu0 %v229
    %1991 = vmatpush.msra.mxu0 %v225
    %1992 = vmatpush.msra.mxu0 %v221
    %1993 = vmatpush.msra.mxu0 %v217
    %1994 = vmatpush.msra.mxu0 %v213
    %1995 = vmatpush.msra.mxu0 %v209
    %1996 = vmatpush.msra.mxu0 %v205
    %1997 = vmatpush.msra.mxu0 %v201
    %1998 = vmatmul.f32.gmra.mxu0 %v1960
    %v1999 = vpop.f32.mrf.mxu0
    %v2000 = vadd.f32 %v1980, %v1999
    %2001 = vdwg.mxu0
    %2002 = vmatpush.msra.mxu0 %v198
    %2003 = vmatpush.msra.mxu0 %v194
    %2004 = vmatpush.msra.mxu0 %v190
    %2005 = vmatpush.msra.mxu0 %v186
    %2006 = vmatpush.msra.mxu0 %v182
    %2007 = vmatpush.msra.mxu0 %v178
    %2008 = vmatpush.msra.mxu0 %v174
    %2009 = vmatpush.msra.mxu0 %v170
    %2010 = vmatpush.msra.mxu0 %v166
    %2011 = vmatpush.msra.mxu0 %v162
    %2012 = vmatpush.msra.mxu0 %v158
    %2013 = vmatpush.msra.mxu0 %v154
    %2014 = vmatpush.msra.mxu0 %v150
    %2015 = vmatpush.msra.mxu0 %v146
    %2016 = vmatpush.msra.mxu0 %v142
    %2017 = vmatpush.msra.mxu0 %v138
    %2018 = vmatmul.f32.gmra.mxu0 %v1959
    %v2019 = vpop.f32.mrf.mxu0
    %v2020 = vadd.f32 %v513, %v2019
    %2021 = vdwg.mxu0
    %2022 = vmatpush.msra.mxu0 0.0
    %2023 = vmatpush.msra.mxu0 0.0
    %2024 = vmatpush.msra.mxu0 0.0
    %2025 = vmatpush.msra.mxu0 0.0
    %2026 = vmatpush.msra.mxu0 0.0
    %2027 = vmatpush.msra.mxu0 0.0
    %2028 = vmatpush.msra.mxu0 0.0
    %2029 = vmatpush.msra.mxu0 0.0
    %2030 = vmatpush.msra.mxu0 %v230
    %2031 = vmatpush.msra.mxu0 %v226
    %2032 = vmatpush.msra.mxu0 %v222
    %2033 = vmatpush.msra.mxu0 %v218
    %2034 = vmatpush.msra.mxu0 %v214
    %2035 = vmatpush.msra.mxu0 %v210
    %2036 = vmatpush.msra.mxu0 %v206
    %2037 = vmatpush.msra.mxu0 %v202
    %2038 = vmatmul.f32.gmra.mxu0 %v1960
    %v2039 = vpop.f32.mrf.mxu0
    %v2040 = vadd.f32 %v2020, %v2039
    %2041 = vdwg.mxu0
    %2042 = vmatpush.msra.mxu0 %v199
    %2043 = vmatpush.msra.mxu0 %v195
    %2044 = vmatpush.msra.mxu0 %v191
    %2045 = vmatpush.msra.mxu0 %v187
    %2046 = vmatpush.msra.mxu0 %v183
    %2047 = vmatpush.msra.mxu0 %v179
    %2048 = vmatpush.msra.mxu0 %v175
    %2049 = vmatpush.msra.mxu0 %v171
    %2050 = vmatpush.msra.mxu0 %v167
    %2051 = vmatpush.msra.mxu0 %v163
    %2052 = vmatpush.msra.mxu0 %v159
    %2053 = vmatpush.msra.mxu0 %v155
    %2054 = vmatpush.msra.mxu0 %v151
    %2055 = vmatpush.msra.mxu0 %v147
    %2056 = vmatpush.msra.mxu0 %v143
    %2057 = vmatpush.msra.mxu0 %v139
    %2058 = vmatmul.f32.gmra.mxu0 %v1959
    %v2059 = vpop.f32.mrf.mxu0
    %v2060 = vadd.f32 %v514, %v2059
    %2061 = vdwg.mxu0
    %2062 = vmatpush.msra.mxu0 0.0
    %2063 = vmatpush.msra.mxu0 0.0
    %2064 = vmatpush.msra.mxu0 0.0
    %2065 = vmatpush.msra.mxu0 0.0
    %2066 = vmatpush.msra.mxu0 0.0
    %2067 = vmatpush.msra.mxu0 0.0
    %2068 = vmatpush.msra.mxu0 0.0
    %2069 = vmatpush.msra.mxu0 0.0
    %2070 = vmatpush.msra.mxu0 %v231
    %2071 = vmatpush.msra.mxu0 %v227
    %2072 = vmatpush.msra.mxu0 %v223
    %2073 = vmatpush.msra.mxu0 %v219
    %2074 = vmatpush.msra.mxu0 %v215
    %2075 = vmatpush.msra.mxu0 %v211
    %2076 = vmatpush.msra.mxu0 %v207
    %2077 = vmatpush.msra.mxu0 %v203
    %2078 = vmatmul.f32.gmra.mxu0 %v1960
    %v2079 = vpop.f32.mrf.mxu0
    %v2080 = vadd.f32 %v2060, %v2079
    %2081 = vdwg.mxu0
    %2082 = vmatpush.msra.mxu0 %v200
    %2083 = vmatpush.msra.mxu0 %v196
    %2084 = vmatpush.msra.mxu0 %v192
    %2085 = vmatpush.msra.mxu0 %v188
    %2086 = vmatpush.msra.mxu0 %v184
    %2087 = vmatpush.msra.mxu0 %v180
    %2088 = vmatpush.msra.mxu0 %v176
    %2089 = vmatpush.msra.mxu0 %v172
    %2090 = vmatpush.msra.mxu0 %v168
    %2091 = vmatpush.msra.mxu0 %v164
    %2092 = vmatpush.msra.mxu0 %v160
    %2093 = vmatpush.msra.mxu0 %v156
    %2094 = vmatpush.msra.mxu0 %v152
    %2095 = vmatpush.msra.mxu0 %v148
    %2096 = vmatpush.msra.mxu0 %v144
    %2097 = vmatpush.msra.mxu0 %v140
    %2098 = vmatmul.f32.gmra.mxu0 %v1959
    %v2099 = vpop.f32.mrf.mxu0
    %v2100 = vadd.f32 %v515, %v2099
    %2101 = vdwg.mxu0
    %2102 = vmatpush.msra.mxu0 0.0
    %2103 = vmatpush.msra.mxu0 0.0
    %2104 = vmatpush.msra.mxu0 0.0
    %2105 = vmatpush.msra.mxu0 0.0
    %2106 = vmatpush.msra.mxu0 0.0
    %2107 = vmatpush.msra.mxu0 0.0
    %2108 = vmatpush.msra.mxu0 0.0
    %2109 = vmatpush.msra.mxu0 0.0
    %2110 = vmatpush.msra.mxu0 %v232
    %2111 = vmatpush.msra.mxu0 %v228
    %2112 = vmatpush.msra.mxu0 %v224
    %2113 = vmatpush.msra.mxu0 %v220
    %2114 = vmatpush.msra.mxu0 %v216
    %2115 = vmatpush.msra.mxu0 %v212
    %2116 = vmatpush.msra.mxu0 %v208
    %2117 = vmatpush.msra.mxu0 %v204
    %2118 = vmatmul.f32.gmra.mxu0 %v1960
    %v2119 = vpop.f32.mrf.mxu0
    %v2120 = vadd.f32 %v2100, %v2119
    %2121 = vdwg.mxu0
    %v2122 = vxor.u32 %v2000, 2147483648
    %v2123 = vxor.u32 %v2040, 2147483648
    %v2124 = vxor.u32 %v2080, 2147483648
    %v2125 = vmul.f32 %v2122, 1.442695
    %v2126 = vpow.pop %v2125
    %v2127 = vmul.f32 %v2123, 1.442695
    %v2128 = vpow.pop %v2127
    %v2129 = vmul.f32 %v2124, 1.442695
    %v2130 = vpow.pop %v2129
    %v2131 = vadd.f32 %v2126, 1.0
    %v2132 = vadd.f32 %v2128, 1.0
    %v2133 = vadd.f32 %v2130, 1.0
    %v2134 = vrcp.pop %v2131
    %v2135 = vmul.f32 %v2131, %v2134
    %v2136 = vsub.f32 1.0, %v2135
    %v2137 = vmul.f32 %v2134, %v2136
    %v2138 = vadd.f32 %v2134, %v2137
    %vm2139 = vweird.f32 %v2131
    %vm2140 = vweird.f32 %v2134
    %vm2141 = vmor %vm2139, %vm2140
    %v2142 = vsel %vm2141, %v2134, %v2138
    %v2143 = vand.u32 2147483647, %v2131
    %vm2144 = vcmp.eq.f32.partialorder %v2143, 8.507059e+37
    %v2145 = vand.u32 %v2131, 2147483648
    %v2146 = vor.u32 1.1754944e-38, %v2145
    %v2147 = vsel %vm2144, %v2146, %v2142
    %v2148 = vmul.f32 1.0, %v2147
    %v2149 = vrcp.pop %v2132
    %v2150 = vmul.f32 %v2132, %v2149
    %v2151 = vsub.f32 1.0, %v2150
    %v2152 = vmul.f32 %v2149, %v2151
    %v2153 = vadd.f32 %v2149, %v2152
    %vm2154 = vweird.f32 %v2132
    %vm2155 = vweird.f32 %v2149
    %vm2156 = vmor %vm2154, %vm2155
    %v2157 = vsel %vm2156, %v2149, %v2153
    %v2158 = vand.u32 2147483647, %v2132
    %vm2159 = vcmp.eq.f32.partialorder %v2158, 8.507059e+37
    %v2160 = vand.u32 %v2132, 2147483648
    %v2161 = vor.u32 1.1754944e-38, %v2160
    %v2162 = vsel %vm2159, %v2161, %v2157
    %v2163 = vmul.f32 1.0, %v2162
    %v2164 = vrcp.pop %v2133
    %v2165 = vmul.f32 %v2133, %v2164
    %v2166 = vsub.f32 1.0, %v2165
    %v2167 = vmul.f32 %v2164, %v2166
    %v2168 = vadd.f32 %v2164, %v2167
    %vm2169 = vweird.f32 %v2133
    %vm2170 = vweird.f32 %v2164
    %vm2171 = vmor %vm2169, %vm2170
    %v2172 = vsel %vm2171, %v2164, %v2168
    %v2173 = vand.u32 2147483647, %v2133
    %vm2174 = vcmp.eq.f32.partialorder %v2173, 8.507059e+37
    %v2175 = vand.u32 %v2133, 2147483648
    %v2176 = vor.u32 1.1754944e-38, %v2175
    %v2177 = vsel %vm2174, %v2176, %v2172
    %v2178 = vmul.f32 1.0, %v2177
    %v2179 = vtanh.pop %v2120
    %v2180 = vmul.f32 %v2163, %v1702
    %v2181 = vmul.f32 %v2148, %v2179
    %v2182 = vadd.f32 %v2180, %v2181
    %v2183 = vtanh.pop %v2182
    %v2184 = vmul.f32 %v2178, %v2183
    %s2185 = scalar_lea.vmem [#allocation8], 4
    %v2186 = vld [vmem:[%s2185] ss:$8 sm:$0x3]
    %s2187 = scalar_lea.vmem [#allocation8], 20
    %v2188 = vld [vmem:[%s2187] ss:$8 sm:$0x3]
    %2189 = vst [vmem:[#allocation1] ss:$9 sm:$0xff] %v1845
    %s2190 = scalar_lea.vmem [#allocation1], 1
    %2191 = vst [vmem:[%s2190] ss:$9 sm:$0xff] %v1846
    %v2192 = vld [vmem:[#allocation1] sm:$0xff]
    %v2193 = vsel %vm243, %v2192, 0
    %2195 = vmatpush.msra.mxu0 0.0
    %2196 = vmatpush.msra.mxu0 0.0
    %2197 = vmatpush.msra.mxu0 0.0
    %2198 = vmatpush.msra.mxu0 0.0
    %2199 = vmatpush.msra.mxu0 0.0
    %2200 = vmatpush.msra.mxu0 0.0
    %2201 = vmatpush.msra.mxu0 0.0
    %2202 = vmatpush.msra.mxu0 0.0
    %2203 = vmatpush.msra.mxu0 %v102
    %2204 = vmatpush.msra.mxu0 %v100
    %2205 = vmatpush.msra.mxu0 %v98
    %2206 = vmatpush.msra.mxu0 %v96
    %2207 = vmatpush.msra.mxu0 %v94
    %2208 = vmatpush.msra.mxu0 %v92
    %2209 = vmatpush.msra.mxu0 %v90
    %2210 = vmatpush.msra.mxu0 %v88
    %2211 = vmatmul.f32.gmra.mxu0 %v2193
    %v2212 = vpop.f32.mrf.mxu0
    %v2213 = vadd.f32 0.0, %v2212
    %2214 = vdwg.mxu0
    %2215 = vmatpush.msra.mxu0 0.0
    %2216 = vmatpush.msra.mxu0 0.0
    %2217 = vmatpush.msra.mxu0 0.0
    %2218 = vmatpush.msra.mxu0 0.0
    %2219 = vmatpush.msra.mxu0 0.0
    %2220 = vmatpush.msra.mxu0 0.0
    %2221 = vmatpush.msra.mxu0 0.0
    %2222 = vmatpush.msra.mxu0 0.0
    %2223 = vmatpush.msra.mxu0 %v103
    %2224 = vmatpush.msra.mxu0 %v101
    %2225 = vmatpush.msra.mxu0 %v99
    %2226 = vmatpush.msra.mxu0 %v97
    %2227 = vmatpush.msra.mxu0 %v95
    %2228 = vmatpush.msra.mxu0 %v93
    %2229 = vmatpush.msra.mxu0 %v91
    %2230 = vmatpush.msra.mxu0 %v89
    %2231 = vmatmul.f32.gmra.mxu0 %v2193
    %v2232 = vpop.f32.mrf.mxu0
    %v2233 = vadd.f32 0.0, %v2232
    %2234 = vdwg.mxu0
    %v2237 = vrot.slane %v2233, 7
    %v2238 = vsel %vm290, %v2213, %v2237
    %v2239 = vsel %vm292, %v2213, %v2237
    %v2240 = vrot.slane %v2239, 1
    %v2243 = vadd.f32 %v2186, %v2238
    %v2244 = vadd.f32 %v2188, %v2240
    %v2245 = vxor.u32 %v2243, 2147483648
    %v2246 = vxor.u32 %v2244, 2147483648
    %v2247 = vmul.f32 %v2245, 1.442695
    %v2248 = vpow.pop %v2247
    %v2249 = vmul.f32 %v2246, 1.442695
    %v2250 = vpow.pop %v2249
    %v2251 = vadd.f32 %v2248, 1.0
    %v2252 = vadd.f32 %v2250, 1.0
    %v2253 = vrcp.pop %v2251
    %v2254 = vmul.f32 %v2251, %v2253
    %v2255 = vsub.f32 1.0, %v2254
    %v2256 = vmul.f32 %v2253, %v2255
    %v2257 = vadd.f32 %v2253, %v2256
    %vm2258 = vweird.f32 %v2251
    %vm2259 = vweird.f32 %v2253
    %vm2260 = vmor %vm2258, %vm2259
    %v2261 = vsel %vm2260, %v2253, %v2257
    %v2262 = vand.u32 2147483647, %v2251
    %vm2263 = vcmp.eq.f32.partialorder %v2262, 8.507059e+37
    %v2264 = vand.u32 %v2251, 2147483648
    %v2265 = vor.u32 1.1754944e-38, %v2264
    %v2266 = vsel %vm2263, %v2265, %v2261
    %v2267 = vmul.f32 1.0, %v2266
    %v2268 = vrcp.pop %v2252
    %v2269 = vmul.f32 %v2252, %v2268
    %v2270 = vsub.f32 1.0, %v2269
    %v2271 = vmul.f32 %v2268, %v2270
    %v2272 = vadd.f32 %v2268, %v2271
    %vm2273 = vweird.f32 %v2252
    %vm2274 = vweird.f32 %v2268
    %vm2275 = vmor %vm2273, %vm2274
    %v2276 = vsel %vm2275, %v2268, %v2272
    %v2277 = vand.u32 2147483647, %v2252
    %vm2278 = vcmp.eq.f32.partialorder %v2277, 8.507059e+37
    %v2279 = vand.u32 %v2252, 2147483648
    %v2280 = vor.u32 1.1754944e-38, %v2279
    %v2281 = vsel %vm2278, %v2280, %v2276
    %v2282 = vmul.f32 1.0, %v2281
    %2285 = vrot.lane.b32.xlu0 %v2243, 64
    %v2286 = vpop.permute.xlu0 %2285
    %2287 = vrot.lane.b32.xlu0 %v2244, 64
    %v2288 = vpop.permute.xlu0 %2287
    %v2289 = vrot.slane %v2286, 1
    %v2290 = vrot.slane %v2288, 1
    %v2293 = vtanh.pop %v2289
    %v2294 = vtanh.pop %v2290
    %v2295 = vmul.f32 %v2267, %v1827
    %v2296 = vmul.f32 %v2282, %v1828
    %v2297 = vmul.f32 %v2267, %v2293
    %v2298 = vmul.f32 %v2282, %v2294
    %2301 = vrot.lane.b32.xlu0 %v2297, 64
    %v2302 = vpop.permute.xlu0 %2301
    %2303 = vrot.lane.b32.xlu0 %v2298, 64
    %v2304 = vpop.permute.xlu0 %2303
    %v2307 = vadd.f32 %v2295, %v2302
    %v2308 = vadd.f32 %v2296, %v2304
    %v2309 = vtanh.pop %v2307
    %v2310 = vtanh.pop %v2308
    %v2313 = vrot.slane %v2267, 1
    %v2314 = vrot.slane %v2282, 1
    %2319 = vrot.lane.b32.xlu0 %v2309, 64
    %v2320 = vpop.permute.xlu0 %2319
    %2321 = vrot.lane.b32.xlu0 %v2310, 64
    %v2322 = vpop.permute.xlu0 %2321
    %v2325 = vmul.f32 %v2313, %v2320
    %v2326 = vmul.f32 %v2314, %v2322
    %2329 = vst [vmem:[#allocation1] ss:$9 sm:$0xff] %v2325
    %s2330 = scalar_lea.vmem [#allocation1], 1
    %2331 = vst [vmem:[%s2330] ss:$9 sm:$0xff] %v2326
    %v2332 = vld [vmem:[#allocation1] sm:$0xff]
    %2335 = vrot.lane.b32.xlu0 %v1954, 64
    %v2336 = vpop.permute.xlu0 %2335
    %v2338 = vsel %vm243, %v2332, %v2336
    %2339 = vmatpush.msra.mxu0 %v134
    %2340 = vmatpush.msra.mxu0 %v132
    %2341 = vmatpush.msra.mxu0 %v130
    %2342 = vmatpush.msra.mxu0 %v128
    %2343 = vmatpush.msra.mxu0 %v126
    %2344 = vmatpush.msra.mxu0 %v124
    %2345 = vmatpush.msra.mxu0 %v122
    %2346 = vmatpush.msra.mxu0 %v120
    %2347 = vmatpush.msra.mxu0 %v118
    %2348 = vmatpush.msra.mxu0 %v116
    %2349 = vmatpush.msra.mxu0 %v114
    %2350 = vmatpush.msra.mxu0 %v112
    %2351 = vmatpush.msra.mxu0 %v110
    %2352 = vmatpush.msra.mxu0 %v108
    %2353 = vmatpush.msra.mxu0 %v106
    %2354 = vmatpush.msra.mxu0 %v104
    %2355 = vmatmul.f32.gmra.mxu0 %v2338
    %v2356 = vpop.f32.mrf.mxu0
    %v2357 = vadd.f32 %v402, %v2356
    %2358 = vdwg.mxu0
    %2359 = vmatpush.msra.mxu0 %v135
    %2360 = vmatpush.msra.mxu0 %v133
    %2361 = vmatpush.msra.mxu0 %v131
    %2362 = vmatpush.msra.mxu0 %v129
    %2363 = vmatpush.msra.mxu0 %v127
    %2364 = vmatpush.msra.mxu0 %v125
    %2365 = vmatpush.msra.mxu0 %v123
    %2366 = vmatpush.msra.mxu0 %v121
    %2367 = vmatpush.msra.mxu0 %v119
    %2368 = vmatpush.msra.mxu0 %v117
    %2369 = vmatpush.msra.mxu0 %v115
    %2370 = vmatpush.msra.mxu0 %v113
    %2371 = vmatpush.msra.mxu0 %v111
    %2372 = vmatpush.msra.mxu0 %v109
    %2373 = vmatpush.msra.mxu0 %v107
    %2374 = vmatpush.msra.mxu0 %v105
    %2375 = vmatmul.f32.gmra.mxu0 %v2338
    %v2376 = vpop.f32.mrf.mxu0
    %v2377 = vadd.f32 %v403, %v2376
    %2378 = vdwg.mxu0
    %v2379 = vxor.u32 %v2357, 2147483648
    %v2380 = vxor.u32 %v2377, 2147483648
    %v2381 = vmul.f32 %v2379, 1.442695
    %v2382 = vpow.pop %v2381
    %v2383 = vmul.f32 %v2380, 1.442695
    %v2384 = vpow.pop %v2383
    %v2385 = vadd.f32 %v2382, 1.0
    %v2386 = vadd.f32 %v2384, 1.0
    %v2387 = vrcp.pop %v2385
    %v2388 = vmul.f32 %v2385, %v2387
    %v2389 = vsub.f32 1.0, %v2388
    %v2390 = vmul.f32 %v2387, %v2389
    %v2391 = vadd.f32 %v2387, %v2390
    %vm2392 = vweird.f32 %v2385
    %vm2393 = vweird.f32 %v2387
    %vm2394 = vmor %vm2392, %vm2393
    %v2395 = vsel %vm2394, %v2387, %v2391
    %v2396 = vand.u32 2147483647, %v2385
    %vm2397 = vcmp.eq.f32.partialorder %v2396, 8.507059e+37
    %v2398 = vand.u32 %v2385, 2147483648
    %v2399 = vor.u32 1.1754944e-38, %v2398
    %v2400 = vsel %vm2397, %v2399, %v2395
    %v2401 = vmul.f32 1.0, %v2400
    %v2402 = vrcp.pop %v2386
    %v2403 = vmul.f32 %v2386, %v2402
    %v2404 = vsub.f32 1.0, %v2403
    %v2405 = vmul.f32 %v2402, %v2404
    %v2406 = vadd.f32 %v2402, %v2405
    %vm2407 = vweird.f32 %v2386
    %vm2408 = vweird.f32 %v2402
    %vm2409 = vmor %vm2407, %vm2408
    %v2410 = vsel %vm2409, %v2402, %v2406
    %v2411 = vand.u32 2147483647, %v2386
    %vm2412 = vcmp.eq.f32.partialorder %v2411, 8.507059e+37
    %v2413 = vand.u32 %v2386, 2147483648
    %v2414 = vor.u32 1.1754944e-38, %v2413
    %v2415 = vsel %vm2412, %v2414, %v2410
    %v2416 = vmul.f32 1.0, %v2415
    %v2417 = vtanh.pop %v2377
    %v2418 = vmul.f32 %v2401, %v1948
    %2420 = vrot.lane.b32.xlu0 %v2417, 64
    %v2421 = vpop.permute.xlu0 %2420
    %v2423 = vmul.f32 %v2401, %v2421
    %2425 = vrot.lane.b32.xlu0 %v2423, 64
    %v2426 = vpop.permute.xlu0 %2425
    %v2428 = vadd.f32 %v2418, %v2426
    %v2429 = vtanh.pop %v2428
    %2431 = vrot.lane.b32.xlu0 %v2429, 64
    %v2432 = vpop.permute.xlu0 %2431
    %v2434 = vmul.f32 %v2416, %v2432
    %2436 = vrot.lane.b32.xlu0 %v2184, 64
    %v2437 = vpop.permute.xlu0 %2436
    %v2439 = vsel %vm243, %v2434, %v2437
    %v2440 = vsel %vm243, %v2437, 0
    %2442 = vmatpush.msra.mxu0 %v197
    %2443 = vmatpush.msra.mxu0 %v193
    %2444 = vmatpush.msra.mxu0 %v189
    %2445 = vmatpush.msra.mxu0 %v185
    %2446 = vmatpush.msra.mxu0 %v181
    %2447 = vmatpush.msra.mxu0 %v177
    %2448 = vmatpush.msra.mxu0 %v173
    %2449 = vmatpush.msra.mxu0 %v169
    %2450 = vmatpush.msra.mxu0 %v165
    %2451 = vmatpush.msra.mxu0 %v161
    %2452 = vmatpush.msra.mxu0 %v157
    %2453 = vmatpush.msra.mxu0 %v153
    %2454 = vmatpush.msra.mxu0 %v149
    %2455 = vmatpush.msra.mxu0 %v145
    %2456 = vmatpush.msra.mxu0 %v141
    %2457 = vmatpush.msra.mxu0 %v137
    %2458 = vmatmul.f32.gmra.mxu0 %v2439
    %v2459 = vpop.f32.mrf.mxu0
    %v2460 = vadd.f32 %v512, %v2459
    %2461 = vdwg.mxu0
    %2462 = vmatpush.msra.mxu0 0.0
    %2463 = vmatpush.msra.mxu0 0.0
    %2464 = vmatpush.msra.mxu0 0.0
    %2465 = vmatpush.msra.mxu0 0.0
    %2466 = vmatpush.msra.mxu0 0.0
    %2467 = vmatpush.msra.mxu0 0.0
    %2468 = vmatpush.msra.mxu0 0.0
    %2469 = vmatpush.msra.mxu0 0.0
    %2470 = vmatpush.msra.mxu0 %v229
    %2471 = vmatpush.msra.mxu0 %v225
    %2472 = vmatpush.msra.mxu0 %v221
    %2473 = vmatpush.msra.mxu0 %v217
    %2474 = vmatpush.msra.mxu0 %v213
    %2475 = vmatpush.msra.mxu0 %v209
    %2476 = vmatpush.msra.mxu0 %v205
    %2477 = vmatpush.msra.mxu0 %v201
    %2478 = vmatmul.f32.gmra.mxu0 %v2440
    %v2479 = vpop.f32.mrf.mxu0
    %v2480 = vadd.f32 %v2460, %v2479
    %2481 = vdwg.mxu0
    %2482 = vmatpush.msra.mxu0 %v198
    %2483 = vmatpush.msra.mxu0 %v194
    %2484 = vmatpush.msra.mxu0 %v190
    %2485 = vmatpush.msra.mxu0 %v186
    %2486 = vmatpush.msra.mxu0 %v182
    %2487 = vmatpush.msra.mxu0 %v178
    %2488 = vmatpush.msra.mxu0 %v174
    %2489 = vmatpush.msra.mxu0 %v170
    %2490 = vmatpush.msra.mxu0 %v166
    %2491 = vmatpush.msra.mxu0 %v162
    %2492 = vmatpush.msra.mxu0 %v158
    %2493 = vmatpush.msra.mxu0 %v154
    %2494 = vmatpush.msra.mxu0 %v150
    %2495 = vmatpush.msra.mxu0 %v146
    %2496 = vmatpush.msra.mxu0 %v142
    %2497 = vmatpush.msra.mxu0 %v138
    %2498 = vmatmul.f32.gmra.mxu0 %v2439
    %v2499 = vpop.f32.mrf.mxu0
    %v2500 = vadd.f32 %v513, %v2499
    %2501 = vdwg.mxu0
    %2502 = vmatpush.msra.mxu0 0.0
    %2503 = vmatpush.msra.mxu0 0.0
    %2504 = vmatpush.msra.mxu0 0.0
    %2505 = vmatpush.msra.mxu0 0.0
    %2506 = vmatpush.msra.mxu0 0.0
    %2507 = vmatpush.msra.mxu0 0.0
    %2508 = vmatpush.msra.mxu0 0.0
    %2509 = vmatpush.msra.mxu0 0.0
    %2510 = vmatpush.msra.mxu0 %v230
    %2511 = vmatpush.msra.mxu0 %v226
    %2512 = vmatpush.msra.mxu0 %v222
    %2513 = vmatpush.msra.mxu0 %v218
    %2514 = vmatpush.msra.mxu0 %v214
    %2515 = vmatpush.msra.mxu0 %v210
    %2516 = vmatpush.msra.mxu0 %v206
    %2517 = vmatpush.msra.mxu0 %v202
    %2518 = vmatmul.f32.gmra.mxu0 %v2440
    %v2519 = vpop.f32.mrf.mxu0
    %v2520 = vadd.f32 %v2500, %v2519
    %2521 = vdwg.mxu0
    %2522 = vmatpush.msra.mxu0 %v199
    %2523 = vmatpush.msra.mxu0 %v195
    %2524 = vmatpush.msra.mxu0 %v191
    %2525 = vmatpush.msra.mxu0 %v187
    %2526 = vmatpush.msra.mxu0 %v183
    %2527 = vmatpush.msra.mxu0 %v179
    %2528 = vmatpush.msra.mxu0 %v175
    %2529 = vmatpush.msra.mxu0 %v171
    %2530 = vmatpush.msra.mxu0 %v167
    %2531 = vmatpush.msra.mxu0 %v163
    %2532 = vmatpush.msra.mxu0 %v159
    %2533 = vmatpush.msra.mxu0 %v155
    %2534 = vmatpush.msra.mxu0 %v151
    %2535 = vmatpush.msra.mxu0 %v147
    %2536 = vmatpush.msra.mxu0 %v143
    %2537 = vmatpush.msra.mxu0 %v139
    %2538 = vmatmul.f32.gmra.mxu0 %v2439
    %v2539 = vpop.f32.mrf.mxu0
    %v2540 = vadd.f32 %v514, %v2539
    %2541 = vdwg.mxu0
    %2542 = vmatpush.msra.mxu0 0.0
    %2543 = vmatpush.msra.mxu0 0.0
    %2544 = vmatpush.msra.mxu0 0.0
    %2545 = vmatpush.msra.mxu0 0.0
    %2546 = vmatpush.msra.mxu0 0.0
    %2547 = vmatpush.msra.mxu0 0.0
    %2548 = vmatpush.msra.mxu0 0.0
    %2549 = vmatpush.msra.mxu0 0.0
    %2550 = vmatpush.msra.mxu0 %v231
    %2551 = vmatpush.msra.mxu0 %v227
    %2552 = vmatpush.msra.mxu0 %v223
    %2553 = vmatpush.msra.mxu0 %v219
    %2554 = vmatpush.msra.mxu0 %v215
    %2555 = vmatpush.msra.mxu0 %v211
    %2556 = vmatpush.msra.mxu0 %v207
    %2557 = vmatpush.msra.mxu0 %v203
    %2558 = vmatmul.f32.gmra.mxu0 %v2440
    %v2559 = vpop.f32.mrf.mxu0
    %v2560 = vadd.f32 %v2540, %v2559
    %2561 = vdwg.mxu0
    %2562 = vmatpush.msra.mxu0 %v200
    %2563 = vmatpush.msra.mxu0 %v196
    %2564 = vmatpush.msra.mxu0 %v192
    %2565 = vmatpush.msra.mxu0 %v188
    %2566 = vmatpush.msra.mxu0 %v184
    %2567 = vmatpush.msra.mxu0 %v180
    %2568 = vmatpush.msra.mxu0 %v176
    %2569 = vmatpush.msra.mxu0 %v172
    %2570 = vmatpush.msra.mxu0 %v168
    %2571 = vmatpush.msra.mxu0 %v164
    %2572 = vmatpush.msra.mxu0 %v160
    %2573 = vmatpush.msra.mxu0 %v156
    %2574 = vmatpush.msra.mxu0 %v152
    %2575 = vmatpush.msra.mxu0 %v148
    %2576 = vmatpush.msra.mxu0 %v144
    %2577 = vmatpush.msra.mxu0 %v140
    %2578 = vmatmul.f32.gmra.mxu0 %v2439
    %v2579 = vpop.f32.mrf.mxu0
    %v2580 = vadd.f32 %v515, %v2579
    %2581 = vdwg.mxu0
    %2582 = vmatpush.msra.mxu0 0.0
    %2583 = vmatpush.msra.mxu0 0.0
    %2584 = vmatpush.msra.mxu0 0.0
    %2585 = vmatpush.msra.mxu0 0.0
    %2586 = vmatpush.msra.mxu0 0.0
    %2587 = vmatpush.msra.mxu0 0.0
    %2588 = vmatpush.msra.mxu0 0.0
    %2589 = vmatpush.msra.mxu0 0.0
    %2590 = vmatpush.msra.mxu0 %v232
    %2591 = vmatpush.msra.mxu0 %v228
    %2592 = vmatpush.msra.mxu0 %v224
    %2593 = vmatpush.msra.mxu0 %v220
    %2594 = vmatpush.msra.mxu0 %v216
    %2595 = vmatpush.msra.mxu0 %v212
    %2596 = vmatpush.msra.mxu0 %v208
    %2597 = vmatpush.msra.mxu0 %v204
    %2598 = vmatmul.f32.gmra.mxu0 %v2440
    %v2599 = vpop.f32.mrf.mxu0
    %v2600 = vadd.f32 %v2580, %v2599
    %2601 = vdwg.mxu0
    %v2602 = vxor.u32 %v2480, 2147483648
    %v2603 = vxor.u32 %v2520, 2147483648
    %v2604 = vxor.u32 %v2560, 2147483648
    %v2605 = vmul.f32 %v2602, 1.442695
    %v2606 = vpow.pop %v2605
    %v2607 = vmul.f32 %v2603, 1.442695
    %v2608 = vpow.pop %v2607
    %v2609 = vmul.f32 %v2604, 1.442695
    %v2610 = vpow.pop %v2609
    %v2611 = vadd.f32 %v2606, 1.0
    %v2612 = vadd.f32 %v2608, 1.0
    %v2613 = vadd.f32 %v2610, 1.0
    %v2614 = vrcp.pop %v2611
    %v2615 = vmul.f32 %v2611, %v2614
    %v2616 = vsub.f32 1.0, %v2615
    %v2617 = vmul.f32 %v2614, %v2616
    %v2618 = vadd.f32 %v2614, %v2617
    %vm2619 = vweird.f32 %v2611
    %vm2620 = vweird.f32 %v2614
    %vm2621 = vmor %vm2619, %vm2620
    %v2622 = vsel %vm2621, %v2614, %v2618
    %v2623 = vand.u32 2147483647, %v2611
    %vm2624 = vcmp.eq.f32.partialorder %v2623, 8.507059e+37
    %v2625 = vand.u32 %v2611, 2147483648
    %v2626 = vor.u32 1.1754944e-38, %v2625
    %v2627 = vsel %vm2624, %v2626, %v2622
    %v2628 = vmul.f32 1.0, %v2627
    %v2629 = vrcp.pop %v2612
    %v2630 = vmul.f32 %v2612, %v2629
    %v2631 = vsub.f32 1.0, %v2630
    %v2632 = vmul.f32 %v2629, %v2631
    %v2633 = vadd.f32 %v2629, %v2632
    %vm2634 = vweird.f32 %v2612
    %vm2635 = vweird.f32 %v2629
    %vm2636 = vmor %vm2634, %vm2635
    %v2637 = vsel %vm2636, %v2629, %v2633
    %v2638 = vand.u32 2147483647, %v2612
    %vm2639 = vcmp.eq.f32.partialorder %v2638, 8.507059e+37
    %v2640 = vand.u32 %v2612, 2147483648
    %v2641 = vor.u32 1.1754944e-38, %v2640
    %v2642 = vsel %vm2639, %v2641, %v2637
    %v2643 = vmul.f32 1.0, %v2642
    %v2644 = vrcp.pop %v2613
    %v2645 = vmul.f32 %v2613, %v2644
    %v2646 = vsub.f32 1.0, %v2645
    %v2647 = vmul.f32 %v2644, %v2646
    %v2648 = vadd.f32 %v2644, %v2647
    %vm2649 = vweird.f32 %v2613
    %vm2650 = vweird.f32 %v2644
    %vm2651 = vmor %vm2649, %vm2650
    %v2652 = vsel %vm2651, %v2644, %v2648
    %v2653 = vand.u32 2147483647, %v2613
    %vm2654 = vcmp.eq.f32.partialorder %v2653, 8.507059e+37
    %v2655 = vand.u32 %v2613, 2147483648
    %v2656 = vor.u32 1.1754944e-38, %v2655
    %v2657 = vsel %vm2654, %v2656, %v2652
    %v2658 = vmul.f32 1.0, %v2657
    %v2659 = vtanh.pop %v2600
    %v2660 = vmul.f32 %v2643, %v2182
    %v2661 = vmul.f32 %v2628, %v2659
    %v2662 = vadd.f32 %v2660, %v2661
    %v2663 = vtanh.pop %v2662
    %v2664 = vmul.f32 %v2658, %v2663
    %s2665 = scalar_lea.vmem [#allocation8], 5
    %v2666 = vld [vmem:[%s2665] ss:$8 sm:$0x3]
    %s2667 = scalar_lea.vmem [#allocation8], 21
    %v2668 = vld [vmem:[%s2667] ss:$8 sm:$0x3]
    %2669 = vst [vmem:[#allocation1] ss:$9 sm:$0xff] %v2325
    %s2670 = scalar_lea.vmem [#allocation1], 1
    %2671 = vst [vmem:[%s2670] ss:$9 sm:$0xff] %v2326
    %v2672 = vld [vmem:[#allocation1] sm:$0xff]
    %v2673 = vsel %vm243, %v2672, 0
    %2675 = vmatpush.msra.mxu0 0.0
    %2676 = vmatpush.msra.mxu0 0.0
    %2677 = vmatpush.msra.mxu0 0.0
    %2678 = vmatpush.msra.mxu0 0.0
    %2679 = vmatpush.msra.mxu0 0.0
    %2680 = vmatpush.msra.mxu0 0.0
    %2681 = vmatpush.msra.mxu0 0.0
    %2682 = vmatpush.msra.mxu0 0.0
    %2683 = vmatpush.msra.mxu0 %v102
    %2684 = vmatpush.msra.mxu0 %v100
    %2685 = vmatpush.msra.mxu0 %v98
    %2686 = vmatpush.msra.mxu0 %v96
    %2687 = vmatpush.msra.mxu0 %v94
    %2688 = vmatpush.msra.mxu0 %v92
    %2689 = vmatpush.msra.mxu0 %v90
    %2690 = vmatpush.msra.mxu0 %v88
    %2691 = vmatmul.f32.gmra.mxu0 %v2673
    %v2692 = vpop.f32.mrf.mxu0
    %v2693 = vadd.f32 0.0, %v2692
    %2694 = vdwg.mxu0
    %2695 = vmatpush.msra.mxu0 0.0
    %2696 = vmatpush.msra.mxu0 0.0
    %2697 = vmatpush.msra.mxu0 0.0
    %2698 = vmatpush.msra.mxu0 0.0
    %2699 = vmatpush.msra.mxu0 0.0
    %2700 = vmatpush.msra.mxu0 0.0
    %2701 = vmatpush.msra.mxu0 0.0
    %2702 = vmatpush.msra.mxu0 0.0
    %2703 = vmatpush.msra.mxu0 %v103
    %2704 = vmatpush.msra.mxu0 %v101
    %2705 = vmatpush.msra.mxu0 %v99
    %2706 = vmatpush.msra.mxu0 %v97
    %2707 = vmatpush.msra.mxu0 %v95
    %2708 = vmatpush.msra.mxu0 %v93
    %2709 = vmatpush.msra.mxu0 %v91
    %2710 = vmatpush.msra.mxu0 %v89
    %2711 = vmatmul.f32.gmra.mxu0 %v2673
    %v2712 = vpop.f32.mrf.mxu0
    %v2713 = vadd.f32 0.0, %v2712
    %2714 = vdwg.mxu0
    %v2717 = vrot.slane %v2713, 7
    %v2718 = vsel %vm290, %v2693, %v2717
    %v2719 = vsel %vm292, %v2693, %v2717
    %v2720 = vrot.slane %v2719, 1
    %v2723 = vadd.f32 %v2666, %v2718
    %v2724 = vadd.f32 %v2668, %v2720
    %v2725 = vxor.u32 %v2723, 2147483648
    %v2726 = vxor.u32 %v2724, 2147483648
    %v2727 = vmul.f32 %v2725, 1.442695
    %v2728 = vpow.pop %v2727
    %v2729 = vmul.f32 %v2726, 1.442695
    %v2730 = vpow.pop %v2729
    %v2731 = vadd.f32 %v2728, 1.0
    %v2732 = vadd.f32 %v2730, 1.0
    %v2733 = vrcp.pop %v2731
    %v2734 = vmul.f32 %v2731, %v2733
    %v2735 = vsub.f32 1.0, %v2734
    %v2736 = vmul.f32 %v2733, %v2735
    %v2737 = vadd.f32 %v2733, %v2736
    %vm2738 = vweird.f32 %v2731
    %vm2739 = vweird.f32 %v2733
    %vm2740 = vmor %vm2738, %vm2739
    %v2741 = vsel %vm2740, %v2733, %v2737
    %v2742 = vand.u32 2147483647, %v2731
    %vm2743 = vcmp.eq.f32.partialorder %v2742, 8.507059e+37
    %v2744 = vand.u32 %v2731, 2147483648
    %v2745 = vor.u32 1.1754944e-38, %v2744
    %v2746 = vsel %vm2743, %v2745, %v2741
    %v2747 = vmul.f32 1.0, %v2746
    %v2748 = vrcp.pop %v2732
    %v2749 = vmul.f32 %v2732, %v2748
    %v2750 = vsub.f32 1.0, %v2749
    %v2751 = vmul.f32 %v2748, %v2750
    %v2752 = vadd.f32 %v2748, %v2751
    %vm2753 = vweird.f32 %v2732
    %vm2754 = vweird.f32 %v2748
    %vm2755 = vmor %vm2753, %vm2754
    %v2756 = vsel %vm2755, %v2748, %v2752
    %v2757 = vand.u32 2147483647, %v2732
    %vm2758 = vcmp.eq.f32.partialorder %v2757, 8.507059e+37
    %v2759 = vand.u32 %v2732, 2147483648
    %v2760 = vor.u32 1.1754944e-38, %v2759
    %v2761 = vsel %vm2758, %v2760, %v2756
    %v2762 = vmul.f32 1.0, %v2761
    %2765 = vrot.lane.b32.xlu0 %v2723, 64
    %v2766 = vpop.permute.xlu0 %2765
    %2767 = vrot.lane.b32.xlu0 %v2724, 64
    %v2768 = vpop.permute.xlu0 %2767
    %v2769 = vrot.slane %v2766, 1
    %v2770 = vrot.slane %v2768, 1
    %v2773 = vtanh.pop %v2769
    %v2774 = vtanh.pop %v2770
    %v2775 = vmul.f32 %v2747, %v2307
    %v2776 = vmul.f32 %v2762, %v2308
    %v2777 = vmul.f32 %v2747, %v2773
    %v2778 = vmul.f32 %v2762, %v2774
    %2781 = vrot.lane.b32.xlu0 %v2777, 64
    %v2782 = vpop.permute.xlu0 %2781
    %2783 = vrot.lane.b32.xlu0 %v2778, 64
    %v2784 = vpop.permute.xlu0 %2783
    %v2787 = vadd.f32 %v2775, %v2782
    %v2788 = vadd.f32 %v2776, %v2784
    %v2789 = vtanh.pop %v2787
    %v2790 = vtanh.pop %v2788
    %v2793 = vrot.slane %v2747, 1
    %v2794 = vrot.slane %v2762, 1
    %2799 = vrot.lane.b32.xlu0 %v2789, 64
    %v2800 = vpop.permute.xlu0 %2799
    %2801 = vrot.lane.b32.xlu0 %v2790, 64
    %v2802 = vpop.permute.xlu0 %2801
    %v2805 = vmul.f32 %v2793, %v2800
    %v2806 = vmul.f32 %v2794, %v2802
    %2809 = vst [vmem:[#allocation1] ss:$9 sm:$0xff] %v2805
    %s2810 = scalar_lea.vmem [#allocation1], 1
    %2811 = vst [vmem:[%s2810] ss:$9 sm:$0xff] %v2806
    %v2812 = vld [vmem:[#allocation1] sm:$0xff]
    %2815 = vrot.lane.b32.xlu0 %v2434, 64
    %v2816 = vpop.permute.xlu0 %2815
    %v2818 = vsel %vm243, %v2812, %v2816
    %2819 = vmatpush.msra.mxu0 %v134
    %2820 = vmatpush.msra.mxu0 %v132
    %2821 = vmatpush.msra.mxu0 %v130
    %2822 = vmatpush.msra.mxu0 %v128
    %2823 = vmatpush.msra.mxu0 %v126
    %2824 = vmatpush.msra.mxu0 %v124
    %2825 = vmatpush.msra.mxu0 %v122
    %2826 = vmatpush.msra.mxu0 %v120
    %2827 = vmatpush.msra.mxu0 %v118
    %2828 = vmatpush.msra.mxu0 %v116
    %2829 = vmatpush.msra.mxu0 %v114
    %2830 = vmatpush.msra.mxu0 %v112
    %2831 = vmatpush.msra.mxu0 %v110
    %2832 = vmatpush.msra.mxu0 %v108
    %2833 = vmatpush.msra.mxu0 %v106
    %2834 = vmatpush.msra.mxu0 %v104
    %2835 = vmatmul.f32.gmra.mxu0 %v2818
    %v2836 = vpop.f32.mrf.mxu0
    %v2837 = vadd.f32 %v402, %v2836
    %2838 = vdwg.mxu0
    %2839 = vmatpush.msra.mxu0 %v135
    %2840 = vmatpush.msra.mxu0 %v133
    %2841 = vmatpush.msra.mxu0 %v131
    %2842 = vmatpush.msra.mxu0 %v129
    %2843 = vmatpush.msra.mxu0 %v127
    %2844 = vmatpush.msra.mxu0 %v125
    %2845 = vmatpush.msra.mxu0 %v123
    %2846 = vmatpush.msra.mxu0 %v121
    %2847 = vmatpush.msra.mxu0 %v119
    %2848 = vmatpush.msra.mxu0 %v117
    %2849 = vmatpush.msra.mxu0 %v115
    %2850 = vmatpush.msra.mxu0 %v113
    %2851 = vmatpush.msra.mxu0 %v111
    %2852 = vmatpush.msra.mxu0 %v109
    %2853 = vmatpush.msra.mxu0 %v107
    %2854 = vmatpush.msra.mxu0 %v105
    %2855 = vmatmul.f32.gmra.mxu0 %v2818
    %v2856 = vpop.f32.mrf.mxu0
    %v2857 = vadd.f32 %v403, %v2856
    %2858 = vdwg.mxu0
    %v2859 = vxor.u32 %v2837, 2147483648
    %v2860 = vxor.u32 %v2857, 2147483648
    %v2861 = vmul.f32 %v2859, 1.442695
    %v2862 = vpow.pop %v2861
    %v2863 = vmul.f32 %v2860, 1.442695
    %v2864 = vpow.pop %v2863
    %v2865 = vadd.f32 %v2862, 1.0
    %v2866 = vadd.f32 %v2864, 1.0
    %v2867 = vrcp.pop %v2865
    %v2868 = vmul.f32 %v2865, %v2867
    %v2869 = vsub.f32 1.0, %v2868
    %v2870 = vmul.f32 %v2867, %v2869
    %v2871 = vadd.f32 %v2867, %v2870
    %vm2872 = vweird.f32 %v2865
    %vm2873 = vweird.f32 %v2867
    %vm2874 = vmor %vm2872, %vm2873
    %v2875 = vsel %vm2874, %v2867, %v2871
    %v2876 = vand.u32 2147483647, %v2865
    %vm2877 = vcmp.eq.f32.partialorder %v2876, 8.507059e+37
    %v2878 = vand.u32 %v2865, 2147483648
    %v2879 = vor.u32 1.1754944e-38, %v2878
    %v2880 = vsel %vm2877, %v2879, %v2875
    %v2881 = vmul.f32 1.0, %v2880
    %v2882 = vrcp.pop %v2866
    %v2883 = vmul.f32 %v2866, %v2882
    %v2884 = vsub.f32 1.0, %v2883
    %v2885 = vmul.f32 %v2882, %v2884
    %v2886 = vadd.f32 %v2882, %v2885
    %vm2887 = vweird.f32 %v2866
    %vm2888 = vweird.f32 %v2882
    %vm2889 = vmor %vm2887, %vm2888
    %v2890 = vsel %vm2889, %v2882, %v2886
    %v2891 = vand.u32 2147483647, %v2866
    %vm2892 = vcmp.eq.f32.partialorder %v2891, 8.507059e+37
    %v2893 = vand.u32 %v2866, 2147483648
    %v2894 = vor.u32 1.1754944e-38, %v2893
    %v2895 = vsel %vm2892, %v2894, %v2890
    %v2896 = vmul.f32 1.0, %v2895
    %v2897 = vtanh.pop %v2857
    %v2898 = vmul.f32 %v2881, %v2428
    %2900 = vrot.lane.b32.xlu0 %v2897, 64
    %v2901 = vpop.permute.xlu0 %2900
    %v2903 = vmul.f32 %v2881, %v2901
    %2905 = vrot.lane.b32.xlu0 %v2903, 64
    %v2906 = vpop.permute.xlu0 %2905
    %v2908 = vadd.f32 %v2898, %v2906
    %v2909 = vtanh.pop %v2908
    %2911 = vrot.lane.b32.xlu0 %v2909, 64
    %v2912 = vpop.permute.xlu0 %2911
    %v2914 = vmul.f32 %v2896, %v2912
    %2916 = vrot.lane.b32.xlu0 %v2664, 64
    %v2917 = vpop.permute.xlu0 %2916
    %v2919 = vsel %vm243, %v2914, %v2917
    %v2920 = vsel %vm243, %v2917, 0
    %2922 = vmatpush.msra.mxu0 %v197
    %2923 = vmatpush.msra.mxu0 %v193
    %2924 = vmatpush.msra.mxu0 %v189
    %2925 = vmatpush.msra.mxu0 %v185
    %2926 = vmatpush.msra.mxu0 %v181
    %2927 = vmatpush.msra.mxu0 %v177
    %2928 = vmatpush.msra.mxu0 %v173
    %2929 = vmatpush.msra.mxu0 %v169
    %2930 = vmatpush.msra.mxu0 %v165
    %2931 = vmatpush.msra.mxu0 %v161
    %2932 = vmatpush.msra.mxu0 %v157
    %2933 = vmatpush.msra.mxu0 %v153
    %2934 = vmatpush.msra.mxu0 %v149
    %2935 = vmatpush.msra.mxu0 %v145
    %2936 = vmatpush.msra.mxu0 %v141
    %2937 = vmatpush.msra.mxu0 %v137
    %2938 = vmatmul.f32.gmra.mxu0 %v2919
    %v2939 = vpop.f32.mrf.mxu0
    %v2940 = vadd.f32 %v512, %v2939
    %2941 = vdwg.mxu0
    %2942 = vmatpush.msra.mxu0 0.0
    %2943 = vmatpush.msra.mxu0 0.0
    %2944 = vmatpush.msra.mxu0 0.0
    %2945 = vmatpush.msra.mxu0 0.0
    %2946 = vmatpush.msra.mxu0 0.0
    %2947 = vmatpush.msra.mxu0 0.0
    %2948 = vmatpush.msra.mxu0 0.0
    %2949 = vmatpush.msra.mxu0 0.0
    %2950 = vmatpush.msra.mxu0 %v229
    %2951 = vmatpush.msra.mxu0 %v225
    %2952 = vmatpush.msra.mxu0 %v221
    %2953 = vmatpush.msra.mxu0 %v217
    %2954 = vmatpush.msra.mxu0 %v213
    %2955 = vmatpush.msra.mxu0 %v209
    %2956 = vmatpush.msra.mxu0 %v205
    %2957 = vmatpush.msra.mxu0 %v201
    %2958 = vmatmul.f32.gmra.mxu0 %v2920
    %v2959 = vpop.f32.mrf.mxu0
    %v2960 = vadd.f32 %v2940, %v2959
    %2961 = vdwg.mxu0
    %2962 = vmatpush.msra.mxu0 %v198
    %2963 = vmatpush.msra.mxu0 %v194
    %2964 = vmatpush.msra.mxu0 %v190
    %2965 = vmatpush.msra.mxu0 %v186
    %2966 = vmatpush.msra.mxu0 %v182
    %2967 = vmatpush.msra.mxu0 %v178
    %2968 = vmatpush.msra.mxu0 %v174
    %2969 = vmatpush.msra.mxu0 %v170
    %2970 = vmatpush.msra.mxu0 %v166
    %2971 = vmatpush.msra.mxu0 %v162
    %2972 = vmatpush.msra.mxu0 %v158
    %2973 = vmatpush.msra.mxu0 %v154
    %2974 = vmatpush.msra.mxu0 %v150
    %2975 = vmatpush.msra.mxu0 %v146
    %2976 = vmatpush.msra.mxu0 %v142
    %2977 = vmatpush.msra.mxu0 %v138
    %2978 = vmatmul.f32.gmra.mxu0 %v2919
    %v2979 = vpop.f32.mrf.mxu0
    %v2980 = vadd.f32 %v513, %v2979
    %2981 = vdwg.mxu0
    %2982 = vmatpush.msra.mxu0 0.0
    %2983 = vmatpush.msra.mxu0 0.0
    %2984 = vmatpush.msra.mxu0 0.0
    %2985 = vmatpush.msra.mxu0 0.0
    %2986 = vmatpush.msra.mxu0 0.0
    %2987 = vmatpush.msra.mxu0 0.0
    %2988 = vmatpush.msra.mxu0 0.0
    %2989 = vmatpush.msra.mxu0 0.0
    %2990 = vmatpush.msra.mxu0 %v230
    %2991 = vmatpush.msra.mxu0 %v226
    %2992 = vmatpush.msra.mxu0 %v222
    %2993 = vmatpush.msra.mxu0 %v218
    %2994 = vmatpush.msra.mxu0 %v214
    %2995 = vmatpush.msra.mxu0 %v210
    %2996 = vmatpush.msra.mxu0 %v206
    %2997 = vmatpush.msra.mxu0 %v202
    %2998 = vmatmul.f32.gmra.mxu0 %v2920
    %v2999 = vpop.f32.mrf.mxu0
    %v3000 = vadd.f32 %v2980, %v2999
    %3001 = vdwg.mxu0
    %3002 = vmatpush.msra.mxu0 %v199
    %3003 = vmatpush.msra.mxu0 %v195
    %3004 = vmatpush.msra.mxu0 %v191
    %3005 = vmatpush.msra.mxu0 %v187
    %3006 = vmatpush.msra.mxu0 %v183
    %3007 = vmatpush.msra.mxu0 %v179
    %3008 = vmatpush.msra.mxu0 %v175
    %3009 = vmatpush.msra.mxu0 %v171
    %3010 = vmatpush.msra.mxu0 %v167
    %3011 = vmatpush.msra.mxu0 %v163
    %3012 = vmatpush.msra.mxu0 %v159
    %3013 = vmatpush.msra.mxu0 %v155
    %3014 = vmatpush.msra.mxu0 %v151
    %3015 = vmatpush.msra.mxu0 %v147
    %3016 = vmatpush.msra.mxu0 %v143
    %3017 = vmatpush.msra.mxu0 %v139
    %3018 = vmatmul.f32.gmra.mxu0 %v2919
    %v3019 = vpop.f32.mrf.mxu0
    %v3020 = vadd.f32 %v514, %v3019
    %3021 = vdwg.mxu0
    %3022 = vmatpush.msra.mxu0 0.0
    %3023 = vmatpush.msra.mxu0 0.0
    %3024 = vmatpush.msra.mxu0 0.0
    %3025 = vmatpush.msra.mxu0 0.0
    %3026 = vmatpush.msra.mxu0 0.0
    %3027 = vmatpush.msra.mxu0 0.0
    %3028 = vmatpush.msra.mxu0 0.0
    %3029 = vmatpush.msra.mxu0 0.0
    %3030 = vmatpush.msra.mxu0 %v231
    %3031 = vmatpush.msra.mxu0 %v227
    %3032 = vmatpush.msra.mxu0 %v223
    %3033 = vmatpush.msra.mxu0 %v219
    %3034 = vmatpush.msra.mxu0 %v215
    %3035 = vmatpush.msra.mxu0 %v211
    %3036 = vmatpush.msra.mxu0 %v207
    %3037 = vmatpush.msra.mxu0 %v203
    %3038 = vmatmul.f32.gmra.mxu0 %v2920
    %v3039 = vpop.f32.mrf.mxu0
    %v3040 = vadd.f32 %v3020, %v3039
    %3041 = vdwg.mxu0
    %3042 = vmatpush.msra.mxu0 %v200
    %3043 = vmatpush.msra.mxu0 %v196
    %3044 = vmatpush.msra.mxu0 %v192
    %3045 = vmatpush.msra.mxu0 %v188
    %3046 = vmatpush.msra.mxu0 %v184
    %3047 = vmatpush.msra.mxu0 %v180
    %3048 = vmatpush.msra.mxu0 %v176
    %3049 = vmatpush.msra.mxu0 %v172
    %3050 = vmatpush.msra.mxu0 %v168
    %3051 = vmatpush.msra.mxu0 %v164
    %3052 = vmatpush.msra.mxu0 %v160
    %3053 = vmatpush.msra.mxu0 %v156
    %3054 = vmatpush.msra.mxu0 %v152
    %3055 = vmatpush.msra.mxu0 %v148
    %3056 = vmatpush.msra.mxu0 %v144
    %3057 = vmatpush.msra.mxu0 %v140
    %3058 = vmatmul.f32.gmra.mxu0 %v2919
    %v3059 = vpop.f32.mrf.mxu0
    %v3060 = vadd.f32 %v515, %v3059
    %3061 = vdwg.mxu0
    %3062 = vmatpush.msra.mxu0 0.0
    %3063 = vmatpush.msra.mxu0 0.0
    %3064 = vmatpush.msra.mxu0 0.0
    %3065 = vmatpush.msra.mxu0 0.0
    %3066 = vmatpush.msra.mxu0 0.0
    %3067 = vmatpush.msra.mxu0 0.0
    %3068 = vmatpush.msra.mxu0 0.0
    %3069 = vmatpush.msra.mxu0 0.0
    %3070 = vmatpush.msra.mxu0 %v232
    %3071 = vmatpush.msra.mxu0 %v228
    %3072 = vmatpush.msra.mxu0 %v224
    %3073 = vmatpush.msra.mxu0 %v220
    %3074 = vmatpush.msra.mxu0 %v216
    %3075 = vmatpush.msra.mxu0 %v212
    %3076 = vmatpush.msra.mxu0 %v208
    %3077 = vmatpush.msra.mxu0 %v204
    %3078 = vmatmul.f32.gmra.mxu0 %v2920
    %v3079 = vpop.f32.mrf.mxu0
    %v3080 = vadd.f32 %v3060, %v3079
    %3081 = vdwg.mxu0
    %v3082 = vxor.u32 %v2960, 2147483648
    %v3083 = vxor.u32 %v3000, 2147483648
    %v3084 = vxor.u32 %v3040, 2147483648
    %v3085 = vmul.f32 %v3082, 1.442695
    %v3086 = vpow.pop %v3085
    %v3087 = vmul.f32 %v3083, 1.442695
    %v3088 = vpow.pop %v3087
    %v3089 = vmul.f32 %v3084, 1.442695
    %v3090 = vpow.pop %v3089
    %v3091 = vadd.f32 %v3086, 1.0
    %v3092 = vadd.f32 %v3088, 1.0
    %v3093 = vadd.f32 %v3090, 1.0
    %v3094 = vrcp.pop %v3091
    %v3095 = vmul.f32 %v3091, %v3094
    %v3096 = vsub.f32 1.0, %v3095
    %v3097 = vmul.f32 %v3094, %v3096
    %v3098 = vadd.f32 %v3094, %v3097
    %vm3099 = vweird.f32 %v3091
    %vm3100 = vweird.f32 %v3094
    %vm3101 = vmor %vm3099, %vm3100
    %v3102 = vsel %vm3101, %v3094, %v3098
    %v3103 = vand.u32 2147483647, %v3091
    %vm3104 = vcmp.eq.f32.partialorder %v3103, 8.507059e+37
    %v3105 = vand.u32 %v3091, 2147483648
    %v3106 = vor.u32 1.1754944e-38, %v3105
    %v3107 = vsel %vm3104, %v3106, %v3102
    %v3108 = vmul.f32 1.0, %v3107
    %v3109 = vrcp.pop %v3092
    %v3110 = vmul.f32 %v3092, %v3109
    %v3111 = vsub.f32 1.0, %v3110
    %v3112 = vmul.f32 %v3109, %v3111
    %v3113 = vadd.f32 %v3109, %v3112
    %vm3114 = vweird.f32 %v3092
    %vm3115 = vweird.f32 %v3109
    %vm3116 = vmor %vm3114, %vm3115
    %v3117 = vsel %vm3116, %v3109, %v3113
    %v3118 = vand.u32 2147483647, %v3092
    %vm3119 = vcmp.eq.f32.partialorder %v3118, 8.507059e+37
    %v3120 = vand.u32 %v3092, 2147483648
    %v3121 = vor.u32 1.1754944e-38, %v3120
    %v3122 = vsel %vm3119, %v3121, %v3117
    %v3123 = vmul.f32 1.0, %v3122
    %v3124 = vrcp.pop %v3093
    %v3125 = vmul.f32 %v3093, %v3124
    %v3126 = vsub.f32 1.0, %v3125
    %v3127 = vmul.f32 %v3124, %v3126
    %v3128 = vadd.f32 %v3124, %v3127
    %vm3129 = vweird.f32 %v3093
    %vm3130 = vweird.f32 %v3124
    %vm3131 = vmor %vm3129, %vm3130
    %v3132 = vsel %vm3131, %v3124, %v3128
    %v3133 = vand.u32 2147483647, %v3093
    %vm3134 = vcmp.eq.f32.partialorder %v3133, 8.507059e+37
    %v3135 = vand.u32 %v3093, 2147483648
    %v3136 = vor.u32 1.1754944e-38, %v3135
    %v3137 = vsel %vm3134, %v3136, %v3132
    %v3138 = vmul.f32 1.0, %v3137
    %v3139 = vtanh.pop %v3080
    %v3140 = vmul.f32 %v3123, %v2662
    %v3141 = vmul.f32 %v3108, %v3139
    %v3142 = vadd.f32 %v3140, %v3141
    %v3143 = vtanh.pop %v3142
    %v3144 = vmul.f32 %v3138, %v3143
    %s3145 = scalar_lea.vmem [#allocation8], 6
    %v3146 = vld [vmem:[%s3145] ss:$8 sm:$0x3]
    %s3147 = scalar_lea.vmem [#allocation8], 22
    %v3148 = vld [vmem:[%s3147] ss:$8 sm:$0x3]
    %3149 = vst [vmem:[#allocation1] ss:$9 sm:$0xff] %v2805
    %s3150 = scalar_lea.vmem [#allocation1], 1
    %3151 = vst [vmem:[%s3150] ss:$9 sm:$0xff] %v2806
    %v3152 = vld [vmem:[#allocation1] sm:$0xff]
    %v3153 = vsel %vm243, %v3152, 0
    %3155 = vmatpush.msra.mxu0 0.0
    %3156 = vmatpush.msra.mxu0 0.0
    %3157 = vmatpush.msra.mxu0 0.0
    %3158 = vmatpush.msra.mxu0 0.0
    %3159 = vmatpush.msra.mxu0 0.0
    %3160 = vmatpush.msra.mxu0 0.0
    %3161 = vmatpush.msra.mxu0 0.0
    %3162 = vmatpush.msra.mxu0 0.0
    %3163 = vmatpush.msra.mxu0 %v102
    %3164 = vmatpush.msra.mxu0 %v100
    %3165 = vmatpush.msra.mxu0 %v98
    %3166 = vmatpush.msra.mxu0 %v96
    %3167 = vmatpush.msra.mxu0 %v94
    %3168 = vmatpush.msra.mxu0 %v92
    %3169 = vmatpush.msra.mxu0 %v90
    %3170 = vmatpush.msra.mxu0 %v88
    %3171 = vmatmul.f32.gmra.mxu0 %v3153
    %v3172 = vpop.f32.mrf.mxu0
    %v3173 = vadd.f32 0.0, %v3172
    %3174 = vdwg.mxu0
    %3175 = vmatpush.msra.mxu0 0.0
    %3176 = vmatpush.msra.mxu0 0.0
    %3177 = vmatpush.msra.mxu0 0.0
    %3178 = vmatpush.msra.mxu0 0.0
    %3179 = vmatpush.msra.mxu0 0.0
    %3180 = vmatpush.msra.mxu0 0.0
    %3181 = vmatpush.msra.mxu0 0.0
    %3182 = vmatpush.msra.mxu0 0.0
    %3183 = vmatpush.msra.mxu0 %v103
    %3184 = vmatpush.msra.mxu0 %v101
    %3185 = vmatpush.msra.mxu0 %v99
    %3186 = vmatpush.msra.mxu0 %v97
    %3187 = vmatpush.msra.mxu0 %v95
    %3188 = vmatpush.msra.mxu0 %v93
    %3189 = vmatpush.msra.mxu0 %v91
    %3190 = vmatpush.msra.mxu0 %v89
    %3191 = vmatmul.f32.gmra.mxu0 %v3153
    %v3192 = vpop.f32.mrf.mxu0
    %v3193 = vadd.f32 0.0, %v3192
    %3194 = vdwg.mxu0
    %v3197 = vrot.slane %v3193, 7
    %v3198 = vsel %vm290, %v3173, %v3197
    %v3199 = vsel %vm292, %v3173, %v3197
    %v3200 = vrot.slane %v3199, 1
    %v3203 = vadd.f32 %v3146, %v3198
    %v3204 = vadd.f32 %v3148, %v3200
    %v3205 = vxor.u32 %v3203, 2147483648
    %v3206 = vxor.u32 %v3204, 2147483648
    %v3207 = vmul.f32 %v3205, 1.442695
    %v3208 = vpow.pop %v3207
    %v3209 = vmul.f32 %v3206, 1.442695
    %v3210 = vpow.pop %v3209
    %v3211 = vadd.f32 %v3208, 1.0
    %v3212 = vadd.f32 %v3210, 1.0
    %v3213 = vrcp.pop %v3211
    %v3214 = vmul.f32 %v3211, %v3213
    %v3215 = vsub.f32 1.0, %v3214
    %v3216 = vmul.f32 %v3213, %v3215
    %v3217 = vadd.f32 %v3213, %v3216
    %vm3218 = vweird.f32 %v3211
    %vm3219 = vweird.f32 %v3213
    %vm3220 = vmor %vm3218, %vm3219
    %v3221 = vsel %vm3220, %v3213, %v3217
    %v3222 = vand.u32 2147483647, %v3211
    %vm3223 = vcmp.eq.f32.partialorder %v3222, 8.507059e+37
    %v3224 = vand.u32 %v3211, 2147483648
    %v3225 = vor.u32 1.1754944e-38, %v3224
    %v3226 = vsel %vm3223, %v3225, %v3221
    %v3227 = vmul.f32 1.0, %v3226
    %v3228 = vrcp.pop %v3212
    %v3229 = vmul.f32 %v3212, %v3228
    %v3230 = vsub.f32 1.0, %v3229
    %v3231 = vmul.f32 %v3228, %v3230
    %v3232 = vadd.f32 %v3228, %v3231
    %vm3233 = vweird.f32 %v3212
    %vm3234 = vweird.f32 %v3228
    %vm3235 = vmor %vm3233, %vm3234
    %v3236 = vsel %vm3235, %v3228, %v3232
    %v3237 = vand.u32 2147483647, %v3212
    %vm3238 = vcmp.eq.f32.partialorder %v3237, 8.507059e+37
    %v3239 = vand.u32 %v3212, 2147483648
    %v3240 = vor.u32 1.1754944e-38, %v3239
    %v3241 = vsel %vm3238, %v3240, %v3236
    %v3242 = vmul.f32 1.0, %v3241
    %3245 = vrot.lane.b32.xlu0 %v3203, 64
    %v3246 = vpop.permute.xlu0 %3245
    %3247 = vrot.lane.b32.xlu0 %v3204, 64
    %v3248 = vpop.permute.xlu0 %3247
    %v3249 = vrot.slane %v3246, 1
    %v3250 = vrot.slane %v3248, 1
    %v3253 = vtanh.pop %v3249
    %v3254 = vtanh.pop %v3250
    %v3255 = vmul.f32 %v3227, %v2787
    %v3256 = vmul.f32 %v3242, %v2788
    %v3257 = vmul.f32 %v3227, %v3253
    %v3258 = vmul.f32 %v3242, %v3254
    %3261 = vrot.lane.b32.xlu0 %v3257, 64
    %v3262 = vpop.permute.xlu0 %3261
    %3263 = vrot.lane.b32.xlu0 %v3258, 64
    %v3264 = vpop.permute.xlu0 %3263
    %v3267 = vadd.f32 %v3255, %v3262
    %v3268 = vadd.f32 %v3256, %v3264
    %v3269 = vtanh.pop %v3267
    %v3270 = vtanh.pop %v3268
    %v3273 = vrot.slane %v3227, 1
    %v3274 = vrot.slane %v3242, 1
    %3279 = vrot.lane.b32.xlu0 %v3269, 64
    %v3280 = vpop.permute.xlu0 %3279
    %3281 = vrot.lane.b32.xlu0 %v3270, 64
    %v3282 = vpop.permute.xlu0 %3281
    %v3285 = vmul.f32 %v3273, %v3280
    %v3286 = vmul.f32 %v3274, %v3282
    %3289 = vst [vmem:[#allocation1] ss:$9 sm:$0xff] %v3285
    %s3290 = scalar_lea.vmem [#allocation1], 1
    %3291 = vst [vmem:[%s3290] ss:$9 sm:$0xff] %v3286
    %v3292 = vld [vmem:[#allocation1] sm:$0xff]
    %3295 = vrot.lane.b32.xlu0 %v2914, 64
    %v3296 = vpop.permute.xlu0 %3295
    %v3298 = vsel %vm243, %v3292, %v3296
    %3299 = vmatpush.msra.mxu0 %v134
    %3300 = vmatpush.msra.mxu0 %v132
    %3301 = vmatpush.msra.mxu0 %v130
    %3302 = vmatpush.msra.mxu0 %v128
    %3303 = vmatpush.msra.mxu0 %v126
    %3304 = vmatpush.msra.mxu0 %v124
    %3305 = vmatpush.msra.mxu0 %v122
    %3306 = vmatpush.msra.mxu0 %v120
    %3307 = vmatpush.msra.mxu0 %v118
    %3308 = vmatpush.msra.mxu0 %v116
    %3309 = vmatpush.msra.mxu0 %v114
    %3310 = vmatpush.msra.mxu0 %v112
    %3311 = vmatpush.msra.mxu0 %v110
    %3312 = vmatpush.msra.mxu0 %v108
    %3313 = vmatpush.msra.mxu0 %v106
    %3314 = vmatpush.msra.mxu0 %v104
    %3315 = vmatmul.f32.gmra.mxu0 %v3298
    %v3316 = vpop.f32.mrf.mxu0
    %v3317 = vadd.f32 %v402, %v3316
    %3318 = vdwg.mxu0
    %3319 = vmatpush.msra.mxu0 %v135
    %3320 = vmatpush.msra.mxu0 %v133
    %3321 = vmatpush.msra.mxu0 %v131
    %3322 = vmatpush.msra.mxu0 %v129
    %3323 = vmatpush.msra.mxu0 %v127
    %3324 = vmatpush.msra.mxu0 %v125
    %3325 = vmatpush.msra.mxu0 %v123
    %3326 = vmatpush.msra.mxu0 %v121
    %3327 = vmatpush.msra.mxu0 %v119
    %3328 = vmatpush.msra.mxu0 %v117
    %3329 = vmatpush.msra.mxu0 %v115
    %3330 = vmatpush.msra.mxu0 %v113
    %3331 = vmatpush.msra.mxu0 %v111
    %3332 = vmatpush.msra.mxu0 %v109
    %3333 = vmatpush.msra.mxu0 %v107
    %3334 = vmatpush.msra.mxu0 %v105
    %3335 = vmatmul.f32.gmra.mxu0 %v3298
    %v3336 = vpop.f32.mrf.mxu0
    %v3337 = vadd.f32 %v403, %v3336
    %3338 = vdwg.mxu0
    %v3339 = vxor.u32 %v3317, 2147483648
    %v3340 = vxor.u32 %v3337, 2147483648
    %v3341 = vmul.f32 %v3339, 1.442695
    %v3342 = vpow.pop %v3341
    %v3343 = vmul.f32 %v3340, 1.442695
    %v3344 = vpow.pop %v3343
    %v3345 = vadd.f32 %v3342, 1.0
    %v3346 = vadd.f32 %v3344, 1.0
    %v3347 = vrcp.pop %v3345
    %v3348 = vmul.f32 %v3345, %v3347
    %v3349 = vsub.f32 1.0, %v3348
    %v3350 = vmul.f32 %v3347, %v3349
    %v3351 = vadd.f32 %v3347, %v3350
    %vm3352 = vweird.f32 %v3345
    %vm3353 = vweird.f32 %v3347
    %vm3354 = vmor %vm3352, %vm3353
    %v3355 = vsel %vm3354, %v3347, %v3351
    %v3356 = vand.u32 2147483647, %v3345
    %vm3357 = vcmp.eq.f32.partialorder %v3356, 8.507059e+37
    %v3358 = vand.u32 %v3345, 2147483648
    %v3359 = vor.u32 1.1754944e-38, %v3358
    %v3360 = vsel %vm3357, %v3359, %v3355
    %v3361 = vmul.f32 1.0, %v3360
    %v3362 = vrcp.pop %v3346
    %v3363 = vmul.f32 %v3346, %v3362
    %v3364 = vsub.f32 1.0, %v3363
    %v3365 = vmul.f32 %v3362, %v3364
    %v3366 = vadd.f32 %v3362, %v3365
    %vm3367 = vweird.f32 %v3346
    %vm3368 = vweird.f32 %v3362
    %vm3369 = vmor %vm3367, %vm3368
    %v3370 = vsel %vm3369, %v3362, %v3366
    %v3371 = vand.u32 2147483647, %v3346
    %vm3372 = vcmp.eq.f32.partialorder %v3371, 8.507059e+37
    %v3373 = vand.u32 %v3346, 2147483648
    %v3374 = vor.u32 1.1754944e-38, %v3373
    %v3375 = vsel %vm3372, %v3374, %v3370
    %v3376 = vmul.f32 1.0, %v3375
    %v3377 = vtanh.pop %v3337
    %v3378 = vmul.f32 %v3361, %v2908
    %3380 = vrot.lane.b32.xlu0 %v3377, 64
    %v3381 = vpop.permute.xlu0 %3380
    %v3383 = vmul.f32 %v3361, %v3381
    %3385 = vrot.lane.b32.xlu0 %v3383, 64
    %v3386 = vpop.permute.xlu0 %3385
    %v3388 = vadd.f32 %v3378, %v3386
    %v3389 = vtanh.pop %v3388
    %3391 = vrot.lane.b32.xlu0 %v3389, 64
    %v3392 = vpop.permute.xlu0 %3391
    %v3394 = vmul.f32 %v3376, %v3392
    %3396 = vrot.lane.b32.xlu0 %v3144, 64
    %v3397 = vpop.permute.xlu0 %3396
    %v3399 = vsel %vm243, %v3394, %v3397
    %v3400 = vsel %vm243, %v3397, 0
    %3402 = vmatpush.msra.mxu0 %v197
    %3403 = vmatpush.msra.mxu0 %v193
    %3404 = vmatpush.msra.mxu0 %v189
    %3405 = vmatpush.msra.mxu0 %v185
    %3406 = vmatpush.msra.mxu0 %v181
    %3407 = vmatpush.msra.mxu0 %v177
    %3408 = vmatpush.msra.mxu0 %v173
    %3409 = vmatpush.msra.mxu0 %v169
    %3410 = vmatpush.msra.mxu0 %v165
    %3411 = vmatpush.msra.mxu0 %v161
    %3412 = vmatpush.msra.mxu0 %v157
    %3413 = vmatpush.msra.mxu0 %v153
    %3414 = vmatpush.msra.mxu0 %v149
    %3415 = vmatpush.msra.mxu0 %v145
    %3416 = vmatpush.msra.mxu0 %v141
    %3417 = vmatpush.msra.mxu0 %v137
    %3418 = vmatmul.f32.gmra.mxu0 %v3399
    %v3419 = vpop.f32.mrf.mxu0
    %v3420 = vadd.f32 %v512, %v3419
    %3421 = vdwg.mxu0
    %3422 = vmatpush.msra.mxu0 0.0
    %3423 = vmatpush.msra.mxu0 0.0
    %3424 = vmatpush.msra.mxu0 0.0
    %3425 = vmatpush.msra.mxu0 0.0
    %3426 = vmatpush.msra.mxu0 0.0
    %3427 = vmatpush.msra.mxu0 0.0
    %3428 = vmatpush.msra.mxu0 0.0
    %3429 = vmatpush.msra.mxu0 0.0
    %3430 = vmatpush.msra.mxu0 %v229
    %3431 = vmatpush.msra.mxu0 %v225
    %3432 = vmatpush.msra.mxu0 %v221
    %3433 = vmatpush.msra.mxu0 %v217
    %3434 = vmatpush.msra.mxu0 %v213
    %3435 = vmatpush.msra.mxu0 %v209
    %3436 = vmatpush.msra.mxu0 %v205
    %3437 = vmatpush.msra.mxu0 %v201
    %3438 = vmatmul.f32.gmra.mxu0 %v3400
    %v3439 = vpop.f32.mrf.mxu0
    %v3440 = vadd.f32 %v3420, %v3439
    %3441 = vdwg.mxu0
    %3442 = vmatpush.msra.mxu0 %v198
    %3443 = vmatpush.msra.mxu0 %v194
    %3444 = vmatpush.msra.mxu0 %v190
    %3445 = vmatpush.msra.mxu0 %v186
    %3446 = vmatpush.msra.mxu0 %v182
    %3447 = vmatpush.msra.mxu0 %v178
    %3448 = vmatpush.msra.mxu0 %v174
    %3449 = vmatpush.msra.mxu0 %v170
    %3450 = vmatpush.msra.mxu0 %v166
    %3451 = vmatpush.msra.mxu0 %v162
    %3452 = vmatpush.msra.mxu0 %v158
    %3453 = vmatpush.msra.mxu0 %v154
    %3454 = vmatpush.msra.mxu0 %v150
    %3455 = vmatpush.msra.mxu0 %v146
    %3456 = vmatpush.msra.mxu0 %v142
    %3457 = vmatpush.msra.mxu0 %v138
    %3458 = vmatmul.f32.gmra.mxu0 %v3399
    %v3459 = vpop.f32.mrf.mxu0
    %v3460 = vadd.f32 %v513, %v3459
    %3461 = vdwg.mxu0
    %3462 = vmatpush.msra.mxu0 0.0
    %3463 = vmatpush.msra.mxu0 0.0
    %3464 = vmatpush.msra.mxu0 0.0
    %3465 = vmatpush.msra.mxu0 0.0
    %3466 = vmatpush.msra.mxu0 0.0
    %3467 = vmatpush.msra.mxu0 0.0
    %3468 = vmatpush.msra.mxu0 0.0
    %3469 = vmatpush.msra.mxu0 0.0
    %3470 = vmatpush.msra.mxu0 %v230
    %3471 = vmatpush.msra.mxu0 %v226
    %3472 = vmatpush.msra.mxu0 %v222
    %3473 = vmatpush.msra.mxu0 %v218
    %3474 = vmatpush.msra.mxu0 %v214
    %3475 = vmatpush.msra.mxu0 %v210
    %3476 = vmatpush.msra.mxu0 %v206
    %3477 = vmatpush.msra.mxu0 %v202
    %3478 = vmatmul.f32.gmra.mxu0 %v3400
    %v3479 = vpop.f32.mrf.mxu0
    %v3480 = vadd.f32 %v3460, %v3479
    %3481 = vdwg.mxu0
    %3482 = vmatpush.msra.mxu0 %v199
    %3483 = vmatpush.msra.mxu0 %v195
    %3484 = vmatpush.msra.mxu0 %v191
    %3485 = vmatpush.msra.mxu0 %v187
    %3486 = vmatpush.msra.mxu0 %v183
    %3487 = vmatpush.msra.mxu0 %v179
    %3488 = vmatpush.msra.mxu0 %v175
    %3489 = vmatpush.msra.mxu0 %v171
    %3490 = vmatpush.msra.mxu0 %v167
    %3491 = vmatpush.msra.mxu0 %v163
    %3492 = vmatpush.msra.mxu0 %v159
    %3493 = vmatpush.msra.mxu0 %v155
    %3494 = vmatpush.msra.mxu0 %v151
    %3495 = vmatpush.msra.mxu0 %v147
    %3496 = vmatpush.msra.mxu0 %v143
    %3497 = vmatpush.msra.mxu0 %v139
    %3498 = vmatmul.f32.gmra.mxu0 %v3399
    %v3499 = vpop.f32.mrf.mxu0
    %v3500 = vadd.f32 %v514, %v3499
    %3501 = vdwg.mxu0
    %3502 = vmatpush.msra.mxu0 0.0
    %3503 = vmatpush.msra.mxu0 0.0
    %3504 = vmatpush.msra.mxu0 0.0
    %3505 = vmatpush.msra.mxu0 0.0
    %3506 = vmatpush.msra.mxu0 0.0
    %3507 = vmatpush.msra.mxu0 0.0
    %3508 = vmatpush.msra.mxu0 0.0
    %3509 = vmatpush.msra.mxu0 0.0
    %3510 = vmatpush.msra.mxu0 %v231
    %3511 = vmatpush.msra.mxu0 %v227
    %3512 = vmatpush.msra.mxu0 %v223
    %3513 = vmatpush.msra.mxu0 %v219
    %3514 = vmatpush.msra.mxu0 %v215
    %3515 = vmatpush.msra.mxu0 %v211
    %3516 = vmatpush.msra.mxu0 %v207
    %3517 = vmatpush.msra.mxu0 %v203
    %3518 = vmatmul.f32.gmra.mxu0 %v3400
    %v3519 = vpop.f32.mrf.mxu0
    %v3520 = vadd.f32 %v3500, %v3519
    %3521 = vdwg.mxu0
    %3522 = vmatpush.msra.mxu0 %v200
    %3523 = vmatpush.msra.mxu0 %v196
    %3524 = vmatpush.msra.mxu0 %v192
    %3525 = vmatpush.msra.mxu0 %v188
    %3526 = vmatpush.msra.mxu0 %v184
    %3527 = vmatpush.msra.mxu0 %v180
    %3528 = vmatpush.msra.mxu0 %v176
    %3529 = vmatpush.msra.mxu0 %v172
    %3530 = vmatpush.msra.mxu0 %v168
    %3531 = vmatpush.msra.mxu0 %v164
    %3532 = vmatpush.msra.mxu0 %v160
    %3533 = vmatpush.msra.mxu0 %v156
    %3534 = vmatpush.msra.mxu0 %v152
    %3535 = vmatpush.msra.mxu0 %v148
    %3536 = vmatpush.msra.mxu0 %v144
    %3537 = vmatpush.msra.mxu0 %v140
    %3538 = vmatmul.f32.gmra.mxu0 %v3399
    %v3539 = vpop.f32.mrf.mxu0
    %v3540 = vadd.f32 %v515, %v3539
    %3541 = vdwg.mxu0
    %3542 = vmatpush.msra.mxu0 0.0
    %3543 = vmatpush.msra.mxu0 0.0
    %3544 = vmatpush.msra.mxu0 0.0
    %3545 = vmatpush.msra.mxu0 0.0
    %3546 = vmatpush.msra.mxu0 0.0
    %3547 = vmatpush.msra.mxu0 0.0
    %3548 = vmatpush.msra.mxu0 0.0
    %3549 = vmatpush.msra.mxu0 0.0
    %3550 = vmatpush.msra.mxu0 %v232
    %3551 = vmatpush.msra.mxu0 %v228
    %3552 = vmatpush.msra.mxu0 %v224
    %3553 = vmatpush.msra.mxu0 %v220
    %3554 = vmatpush.msra.mxu0 %v216
    %3555 = vmatpush.msra.mxu0 %v212
    %3556 = vmatpush.msra.mxu0 %v208
    %3557 = vmatpush.msra.mxu0 %v204
    %3558 = vmatmul.f32.gmra.mxu0 %v3400
    %v3559 = vpop.f32.mrf.mxu0
    %v3560 = vadd.f32 %v3540, %v3559
    %3561 = vdwg.mxu0
    %v3562 = vxor.u32 %v3440, 2147483648
    %v3563 = vxor.u32 %v3480, 2147483648
    %v3564 = vxor.u32 %v3520, 2147483648
    %v3565 = vmul.f32 %v3562, 1.442695
    %v3566 = vpow.pop %v3565
    %v3567 = vmul.f32 %v3563, 1.442695
    %v3568 = vpow.pop %v3567
    %v3569 = vmul.f32 %v3564, 1.442695
    %v3570 = vpow.pop %v3569
    %v3571 = vadd.f32 %v3566, 1.0
    %v3572 = vadd.f32 %v3568, 1.0
    %v3573 = vadd.f32 %v3570, 1.0
    %v3574 = vrcp.pop %v3571
    %v3575 = vmul.f32 %v3571, %v3574
    %v3576 = vsub.f32 1.0, %v3575
    %v3577 = vmul.f32 %v3574, %v3576
    %v3578 = vadd.f32 %v3574, %v3577
    %vm3579 = vweird.f32 %v3571
    %vm3580 = vweird.f32 %v3574
    %vm3581 = vmor %vm3579, %vm3580
    %v3582 = vsel %vm3581, %v3574, %v3578
    %v3583 = vand.u32 2147483647, %v3571
    %vm3584 = vcmp.eq.f32.partialorder %v3583, 8.507059e+37
    %v3585 = vand.u32 %v3571, 2147483648
    %v3586 = vor.u32 1.1754944e-38, %v3585
    %v3587 = vsel %vm3584, %v3586, %v3582
    %v3588 = vmul.f32 1.0, %v3587
    %v3589 = vrcp.pop %v3572
    %v3590 = vmul.f32 %v3572, %v3589
    %v3591 = vsub.f32 1.0, %v3590
    %v3592 = vmul.f32 %v3589, %v3591
    %v3593 = vadd.f32 %v3589, %v3592
    %vm3594 = vweird.f32 %v3572
    %vm3595 = vweird.f32 %v3589
    %vm3596 = vmor %vm3594, %vm3595
    %v3597 = vsel %vm3596, %v3589, %v3593
    %v3598 = vand.u32 2147483647, %v3572
    %vm3599 = vcmp.eq.f32.partialorder %v3598, 8.507059e+37
    %v3600 = vand.u32 %v3572, 2147483648
    %v3601 = vor.u32 1.1754944e-38, %v3600
    %v3602 = vsel %vm3599, %v3601, %v3597
    %v3603 = vmul.f32 1.0, %v3602
    %v3604 = vrcp.pop %v3573
    %v3605 = vmul.f32 %v3573, %v3604
    %v3606 = vsub.f32 1.0, %v3605
    %v3607 = vmul.f32 %v3604, %v3606
    %v3608 = vadd.f32 %v3604, %v3607
    %vm3609 = vweird.f32 %v3573
    %vm3610 = vweird.f32 %v3604
    %vm3611 = vmor %vm3609, %vm3610
    %v3612 = vsel %vm3611, %v3604, %v3608
    %v3613 = vand.u32 2147483647, %v3573
    %vm3614 = vcmp.eq.f32.partialorder %v3613, 8.507059e+37
    %v3615 = vand.u32 %v3573, 2147483648
    %v3616 = vor.u32 1.1754944e-38, %v3615
    %v3617 = vsel %vm3614, %v3616, %v3612
    %v3618 = vmul.f32 1.0, %v3617
    %v3619 = vtanh.pop %v3560
    %v3620 = vmul.f32 %v3603, %v3142
    %v3621 = vmul.f32 %v3588, %v3619
    %v3622 = vadd.f32 %v3620, %v3621
    %v3623 = vtanh.pop %v3622
    %v3624 = vmul.f32 %v3618, %v3623
    %s3625 = scalar_lea.vmem [#allocation8], 7
    %v3626 = vld [vmem:[%s3625] ss:$8 sm:$0x3]
    %s3627 = scalar_lea.vmem [#allocation8], 23
    %v3628 = vld [vmem:[%s3627] ss:$8 sm:$0x3]
    %3629 = vst [vmem:[#allocation1] ss:$9 sm:$0xff] %v3285
    %s3630 = scalar_lea.vmem [#allocation1], 1
    %3631 = vst [vmem:[%s3630] ss:$9 sm:$0xff] %v3286
    %v3632 = vld [vmem:[#allocation1] sm:$0xff]
    %v3633 = vsel %vm243, %v3632, 0
    %3635 = vmatpush.msra.mxu0 0.0
    %3636 = vmatpush.msra.mxu0 0.0
    %3637 = vmatpush.msra.mxu0 0.0
    %3638 = vmatpush.msra.mxu0 0.0
    %3639 = vmatpush.msra.mxu0 0.0
    %3640 = vmatpush.msra.mxu0 0.0
    %3641 = vmatpush.msra.mxu0 0.0
    %3642 = vmatpush.msra.mxu0 0.0
    %3643 = vmatpush.msra.mxu0 %v102
    %3644 = vmatpush.msra.mxu0 %v100
    %3645 = vmatpush.msra.mxu0 %v98
    %3646 = vmatpush.msra.mxu0 %v96
    %3647 = vmatpush.msra.mxu0 %v94
    %3648 = vmatpush.msra.mxu0 %v92
    %3649 = vmatpush.msra.mxu0 %v90
    %3650 = vmatpush.msra.mxu0 %v88
    %3651 = vmatmul.f32.gmra.mxu0 %v3633
    %v3652 = vpop.f32.mrf.mxu0
    %v3653 = vadd.f32 0.0, %v3652
    %3654 = vdwg.mxu0
    %3655 = vmatpush.msra.mxu0 0.0
    %3656 = vmatpush.msra.mxu0 0.0
    %3657 = vmatpush.msra.mxu0 0.0
    %3658 = vmatpush.msra.mxu0 0.0
    %3659 = vmatpush.msra.mxu0 0.0
    %3660 = vmatpush.msra.mxu0 0.0
    %3661 = vmatpush.msra.mxu0 0.0
    %3662 = vmatpush.msra.mxu0 0.0
    %3663 = vmatpush.msra.mxu0 %v103
    %3664 = vmatpush.msra.mxu0 %v101
    %3665 = vmatpush.msra.mxu0 %v99
    %3666 = vmatpush.msra.mxu0 %v97
    %3667 = vmatpush.msra.mxu0 %v95
    %3668 = vmatpush.msra.mxu0 %v93
    %3669 = vmatpush.msra.mxu0 %v91
    %3670 = vmatpush.msra.mxu0 %v89
    %3671 = vmatmul.f32.gmra.mxu0 %v3633
    %v3672 = vpop.f32.mrf.mxu0
    %v3673 = vadd.f32 0.0, %v3672
    %3674 = vdwg.mxu0
    %v3677 = vrot.slane %v3673, 7
    %v3678 = vsel %vm290, %v3653, %v3677
    %v3679 = vsel %vm292, %v3653, %v3677
    %v3680 = vrot.slane %v3679, 1
    %v3683 = vadd.f32 %v3626, %v3678
    %v3684 = vadd.f32 %v3628, %v3680
    %v3685 = vxor.u32 %v3683, 2147483648
    %v3686 = vxor.u32 %v3684, 2147483648
    %v3687 = vmul.f32 %v3685, 1.442695
    %v3688 = vpow.pop %v3687
    %v3689 = vmul.f32 %v3686, 1.442695
    %v3690 = vpow.pop %v3689
    %v3691 = vadd.f32 %v3688, 1.0
    %v3692 = vadd.f32 %v3690, 1.0
    %v3693 = vrcp.pop %v3691
    %v3694 = vmul.f32 %v3691, %v3693
    %v3695 = vsub.f32 1.0, %v3694
    %v3696 = vmul.f32 %v3693, %v3695
    %v3697 = vadd.f32 %v3693, %v3696
    %vm3698 = vweird.f32 %v3691
    %vm3699 = vweird.f32 %v3693
    %vm3700 = vmor %vm3698, %vm3699
    %v3701 = vsel %vm3700, %v3693, %v3697
    %v3702 = vand.u32 2147483647, %v3691
    %vm3703 = vcmp.eq.f32.partialorder %v3702, 8.507059e+37
    %v3704 = vand.u32 %v3691, 2147483648
    %v3705 = vor.u32 1.1754944e-38, %v3704
    %v3706 = vsel %vm3703, %v3705, %v3701
    %v3707 = vmul.f32 1.0, %v3706
    %v3708 = vrcp.pop %v3692
    %v3709 = vmul.f32 %v3692, %v3708
    %v3710 = vsub.f32 1.0, %v3709
    %v3711 = vmul.f32 %v3708, %v3710
    %v3712 = vadd.f32 %v3708, %v3711
    %vm3713 = vweird.f32 %v3692
    %vm3714 = vweird.f32 %v3708
    %vm3715 = vmor %vm3713, %vm3714
    %v3716 = vsel %vm3715, %v3708, %v3712
    %v3717 = vand.u32 2147483647, %v3692
    %vm3718 = vcmp.eq.f32.partialorder %v3717, 8.507059e+37
    %v3719 = vand.u32 %v3692, 2147483648
    %v3720 = vor.u32 1.1754944e-38, %v3719
    %v3721 = vsel %vm3718, %v3720, %v3716
    %v3722 = vmul.f32 1.0, %v3721
    %3725 = vrot.lane.b32.xlu0 %v3683, 64
    %v3726 = vpop.permute.xlu0 %3725
    %3727 = vrot.lane.b32.xlu0 %v3684, 64
    %v3728 = vpop.permute.xlu0 %3727
    %v3729 = vrot.slane %v3726, 1
    %v3730 = vrot.slane %v3728, 1
    %v3733 = vtanh.pop %v3729
    %v3734 = vtanh.pop %v3730
    %v3735 = vmul.f32 %v3707, %v3267
    %v3736 = vmul.f32 %v3722, %v3268
    %v3737 = vmul.f32 %v3707, %v3733
    %v3738 = vmul.f32 %v3722, %v3734
    %3741 = vrot.lane.b32.xlu0 %v3737, 64
    %v3742 = vpop.permute.xlu0 %3741
    %3743 = vrot.lane.b32.xlu0 %v3738, 64
    %v3744 = vpop.permute.xlu0 %3743
    %v3747 = vadd.f32 %v3735, %v3742
    %v3748 = vadd.f32 %v3736, %v3744
    %v3749 = vtanh.pop %v3747
    %v3750 = vtanh.pop %v3748
    %v3753 = vrot.slane %v3707, 1
    %v3754 = vrot.slane %v3722, 1
    %3759 = vrot.lane.b32.xlu0 %v3749, 64
    %v3760 = vpop.permute.xlu0 %3759
    %3761 = vrot.lane.b32.xlu0 %v3750, 64
    %v3762 = vpop.permute.xlu0 %3761
    %v3765 = vmul.f32 %v3753, %v3760
    %v3766 = vmul.f32 %v3754, %v3762
    %3769 = vst [vmem:[#allocation1] ss:$9 sm:$0xff] %v3765
    %s3770 = scalar_lea.vmem [#allocation1], 1
    %3771 = vst [vmem:[%s3770] ss:$9 sm:$0xff] %v3766
    %v3772 = vld [vmem:[#allocation1] sm:$0xff]
    %3775 = vrot.lane.b32.xlu0 %v3394, 64
    %v3776 = vpop.permute.xlu0 %3775
    %v3778 = vsel %vm243, %v3772, %v3776
    %3779 = vmatpush.msra.mxu0 %v134
    %3780 = vmatpush.msra.mxu0 %v132
    %3781 = vmatpush.msra.mxu0 %v130
    %3782 = vmatpush.msra.mxu0 %v128
    %3783 = vmatpush.msra.mxu0 %v126
    %3784 = vmatpush.msra.mxu0 %v124
    %3785 = vmatpush.msra.mxu0 %v122
    %3786 = vmatpush.msra.mxu0 %v120
    %3787 = vmatpush.msra.mxu0 %v118
    %3788 = vmatpush.msra.mxu0 %v116
    %3789 = vmatpush.msra.mxu0 %v114
    %3790 = vmatpush.msra.mxu0 %v112
    %3791 = vmatpush.msra.mxu0 %v110
    %3792 = vmatpush.msra.mxu0 %v108
    %3793 = vmatpush.msra.mxu0 %v106
    %3794 = vmatpush.msra.mxu0 %v104
    %3795 = vmatmul.f32.gmra.mxu0 %v3778
    %v3796 = vpop.f32.mrf.mxu0
    %v3797 = vadd.f32 %v402, %v3796
    %3798 = vdwg.mxu0
    %3799 = vmatpush.msra.mxu0 %v135
    %3800 = vmatpush.msra.mxu0 %v133
    %3801 = vmatpush.msra.mxu0 %v131
    %3802 = vmatpush.msra.mxu0 %v129
    %3803 = vmatpush.msra.mxu0 %v127
    %3804 = vmatpush.msra.mxu0 %v125
    %3805 = vmatpush.msra.mxu0 %v123
    %3806 = vmatpush.msra.mxu0 %v121
    %3807 = vmatpush.msra.mxu0 %v119
    %3808 = vmatpush.msra.mxu0 %v117
    %3809 = vmatpush.msra.mxu0 %v115
    %3810 = vmatpush.msra.mxu0 %v113
    %3811 = vmatpush.msra.mxu0 %v111
    %3812 = vmatpush.msra.mxu0 %v109
    %3813 = vmatpush.msra.mxu0 %v107
    %3814 = vmatpush.msra.mxu0 %v105
    %3815 = vmatmul.f32.gmra.mxu0 %v3778
    %v3816 = vpop.f32.mrf.mxu0
    %v3817 = vadd.f32 %v403, %v3816
    %3818 = vdwg.mxu0
    %v3819 = vxor.u32 %v3797, 2147483648
    %v3820 = vxor.u32 %v3817, 2147483648
    %v3821 = vmul.f32 %v3819, 1.442695
    %v3822 = vpow.pop %v3821
    %v3823 = vmul.f32 %v3820, 1.442695
    %v3824 = vpow.pop %v3823
    %v3825 = vadd.f32 %v3822, 1.0
    %v3826 = vadd.f32 %v3824, 1.0
    %v3827 = vrcp.pop %v3825
    %v3828 = vmul.f32 %v3825, %v3827
    %v3829 = vsub.f32 1.0, %v3828
    %v3830 = vmul.f32 %v3827, %v3829
    %v3831 = vadd.f32 %v3827, %v3830
    %vm3832 = vweird.f32 %v3825
    %vm3833 = vweird.f32 %v3827
    %vm3834 = vmor %vm3832, %vm3833
    %v3835 = vsel %vm3834, %v3827, %v3831
    %v3836 = vand.u32 2147483647, %v3825
    %vm3837 = vcmp.eq.f32.partialorder %v3836, 8.507059e+37
    %v3838 = vand.u32 %v3825, 2147483648
    %v3839 = vor.u32 1.1754944e-38, %v3838
    %v3840 = vsel %vm3837, %v3839, %v3835
    %v3841 = vmul.f32 1.0, %v3840
    %v3842 = vrcp.pop %v3826
    %v3843 = vmul.f32 %v3826, %v3842
    %v3844 = vsub.f32 1.0, %v3843
    %v3845 = vmul.f32 %v3842, %v3844
    %v3846 = vadd.f32 %v3842, %v3845
    %vm3847 = vweird.f32 %v3826
    %vm3848 = vweird.f32 %v3842
    %vm3849 = vmor %vm3847, %vm3848
    %v3850 = vsel %vm3849, %v3842, %v3846
    %v3851 = vand.u32 2147483647, %v3826
    %vm3852 = vcmp.eq.f32.partialorder %v3851, 8.507059e+37
    %v3853 = vand.u32 %v3826, 2147483648
    %v3854 = vor.u32 1.1754944e-38, %v3853
    %v3855 = vsel %vm3852, %v3854, %v3850
    %v3856 = vmul.f32 1.0, %v3855
    %v3857 = vtanh.pop %v3817
    %v3858 = vmul.f32 %v3841, %v3388
    %3860 = vrot.lane.b32.xlu0 %v3857, 64
    %v3861 = vpop.permute.xlu0 %3860
    %v3863 = vmul.f32 %v3841, %v3861
    %3865 = vrot.lane.b32.xlu0 %v3863, 64
    %v3866 = vpop.permute.xlu0 %3865
    %v3868 = vadd.f32 %v3858, %v3866
    %v3869 = vtanh.pop %v3868
    %3871 = vrot.lane.b32.xlu0 %v3869, 64
    %v3872 = vpop.permute.xlu0 %3871
    %v3874 = vmul.f32 %v3856, %v3872
    %3876 = vrot.lane.b32.xlu0 %v3624, 64
    %v3877 = vpop.permute.xlu0 %3876
    %v3879 = vsel %vm243, %v3874, %v3877
    %v3880 = vsel %vm243, %v3877, 0
    %3882 = vmatpush.msra.mxu0 %v197
    %3883 = vmatpush.msra.mxu0 %v193
    %3884 = vmatpush.msra.mxu0 %v189
    %3885 = vmatpush.msra.mxu0 %v185
    %3886 = vmatpush.msra.mxu0 %v181
    %3887 = vmatpush.msra.mxu0 %v177
    %3888 = vmatpush.msra.mxu0 %v173
    %3889 = vmatpush.msra.mxu0 %v169
    %3890 = vmatpush.msra.mxu0 %v165
    %3891 = vmatpush.msra.mxu0 %v161
    %3892 = vmatpush.msra.mxu0 %v157
    %3893 = vmatpush.msra.mxu0 %v153
    %3894 = vmatpush.msra.mxu0 %v149
    %3895 = vmatpush.msra.mxu0 %v145
    %3896 = vmatpush.msra.mxu0 %v141
    %3897 = vmatpush.msra.mxu0 %v137
    %3898 = vmatmul.f32.gmra.mxu0 %v3879
    %v3899 = vpop.f32.mrf.mxu0
    %v3900 = vadd.f32 %v512, %v3899
    %3901 = vdwg.mxu0
    %3902 = vmatpush.msra.mxu0 0.0
    %3903 = vmatpush.msra.mxu0 0.0
    %3904 = vmatpush.msra.mxu0 0.0
    %3905 = vmatpush.msra.mxu0 0.0
    %3906 = vmatpush.msra.mxu0 0.0
    %3907 = vmatpush.msra.mxu0 0.0
    %3908 = vmatpush.msra.mxu0 0.0
    %3909 = vmatpush.msra.mxu0 0.0
    %3910 = vmatpush.msra.mxu0 %v229
    %3911 = vmatpush.msra.mxu0 %v225
    %3912 = vmatpush.msra.mxu0 %v221
    %3913 = vmatpush.msra.mxu0 %v217
    %3914 = vmatpush.msra.mxu0 %v213
    %3915 = vmatpush.msra.mxu0 %v209
    %3916 = vmatpush.msra.mxu0 %v205
    %3917 = vmatpush.msra.mxu0 %v201
    %3918 = vmatmul.f32.gmra.mxu0 %v3880
    %v3919 = vpop.f32.mrf.mxu0
    %v3920 = vadd.f32 %v3900, %v3919
    %3921 = vdwg.mxu0
    %3922 = vmatpush.msra.mxu0 %v198
    %3923 = vmatpush.msra.mxu0 %v194
    %3924 = vmatpush.msra.mxu0 %v190
    %3925 = vmatpush.msra.mxu0 %v186
    %3926 = vmatpush.msra.mxu0 %v182
    %3927 = vmatpush.msra.mxu0 %v178
    %3928 = vmatpush.msra.mxu0 %v174
    %3929 = vmatpush.msra.mxu0 %v170
    %3930 = vmatpush.msra.mxu0 %v166
    %3931 = vmatpush.msra.mxu0 %v162
    %3932 = vmatpush.msra.mxu0 %v158
    %3933 = vmatpush.msra.mxu0 %v154
    %3934 = vmatpush.msra.mxu0 %v150
    %3935 = vmatpush.msra.mxu0 %v146
    %3936 = vmatpush.msra.mxu0 %v142
    %3937 = vmatpush.msra.mxu0 %v138
    %3938 = vmatmul.f32.gmra.mxu0 %v3879
    %v3939 = vpop.f32.mrf.mxu0
    %v3940 = vadd.f32 %v513, %v3939
    %3941 = vdwg.mxu0
    %3942 = vmatpush.msra.mxu0 0.0
    %3943 = vmatpush.msra.mxu0 0.0
    %3944 = vmatpush.msra.mxu0 0.0
    %3945 = vmatpush.msra.mxu0 0.0
    %3946 = vmatpush.msra.mxu0 0.0
    %3947 = vmatpush.msra.mxu0 0.0
    %3948 = vmatpush.msra.mxu0 0.0
    %3949 = vmatpush.msra.mxu0 0.0
    %3950 = vmatpush.msra.mxu0 %v230
    %3951 = vmatpush.msra.mxu0 %v226
    %3952 = vmatpush.msra.mxu0 %v222
    %3953 = vmatpush.msra.mxu0 %v218
    %3954 = vmatpush.msra.mxu0 %v214
    %3955 = vmatpush.msra.mxu0 %v210
    %3956 = vmatpush.msra.mxu0 %v206
    %3957 = vmatpush.msra.mxu0 %v202
    %3958 = vmatmul.f32.gmra.mxu0 %v3880
    %v3959 = vpop.f32.mrf.mxu0
    %v3960 = vadd.f32 %v3940, %v3959
    %3961 = vdwg.mxu0
    %3962 = vmatpush.msra.mxu0 %v199
    %3963 = vmatpush.msra.mxu0 %v195
    %3964 = vmatpush.msra.mxu0 %v191
    %3965 = vmatpush.msra.mxu0 %v187
    %3966 = vmatpush.msra.mxu0 %v183
    %3967 = vmatpush.msra.mxu0 %v179
    %3968 = vmatpush.msra.mxu0 %v175
    %3969 = vmatpush.msra.mxu0 %v171
    %3970 = vmatpush.msra.mxu0 %v167
    %3971 = vmatpush.msra.mxu0 %v163
    %3972 = vmatpush.msra.mxu0 %v159
    %3973 = vmatpush.msra.mxu0 %v155
    %3974 = vmatpush.msra.mxu0 %v151
    %3975 = vmatpush.msra.mxu0 %v147
    %3976 = vmatpush.msra.mxu0 %v143
    %3977 = vmatpush.msra.mxu0 %v139
    %3978 = vmatmul.f32.gmra.mxu0 %v3879
    %v3979 = vpop.f32.mrf.mxu0
    %v3980 = vadd.f32 %v514, %v3979
    %3981 = vdwg.mxu0
    %3982 = vmatpush.msra.mxu0 0.0
    %3983 = vmatpush.msra.mxu0 0.0
    %3984 = vmatpush.msra.mxu0 0.0
    %3985 = vmatpush.msra.mxu0 0.0
    %3986 = vmatpush.msra.mxu0 0.0
    %3987 = vmatpush.msra.mxu0 0.0
    %3988 = vmatpush.msra.mxu0 0.0
    %3989 = vmatpush.msra.mxu0 0.0
    %3990 = vmatpush.msra.mxu0 %v231
    %3991 = vmatpush.msra.mxu0 %v227
    %3992 = vmatpush.msra.mxu0 %v223
    %3993 = vmatpush.msra.mxu0 %v219
    %3994 = vmatpush.msra.mxu0 %v215
    %3995 = vmatpush.msra.mxu0 %v211
    %3996 = vmatpush.msra.mxu0 %v207
    %3997 = vmatpush.msra.mxu0 %v203
    %3998 = vmatmul.f32.gmra.mxu0 %v3880
    %v3999 = vpop.f32.mrf.mxu0
    %v4000 = vadd.f32 %v3980, %v3999
    %4001 = vdwg.mxu0
    %4002 = vmatpush.msra.mxu0 %v200
    %4003 = vmatpush.msra.mxu0 %v196
    %4004 = vmatpush.msra.mxu0 %v192
    %4005 = vmatpush.msra.mxu0 %v188
    %4006 = vmatpush.msra.mxu0 %v184
    %4007 = vmatpush.msra.mxu0 %v180
    %4008 = vmatpush.msra.mxu0 %v176
    %4009 = vmatpush.msra.mxu0 %v172
    %4010 = vmatpush.msra.mxu0 %v168
    %4011 = vmatpush.msra.mxu0 %v164
    %4012 = vmatpush.msra.mxu0 %v160
    %4013 = vmatpush.msra.mxu0 %v156
    %4014 = vmatpush.msra.mxu0 %v152
    %4015 = vmatpush.msra.mxu0 %v148
    %4016 = vmatpush.msra.mxu0 %v144
    %4017 = vmatpush.msra.mxu0 %v140
    %4018 = vmatmul.f32.gmra.mxu0 %v3879
    %v4019 = vpop.f32.mrf.mxu0
    %v4020 = vadd.f32 %v515, %v4019
    %4021 = vdwg.mxu0
    %4022 = vmatpush.msra.mxu0 0.0
    %4023 = vmatpush.msra.mxu0 0.0
    %4024 = vmatpush.msra.mxu0 0.0
    %4025 = vmatpush.msra.mxu0 0.0
    %4026 = vmatpush.msra.mxu0 0.0
    %4027 = vmatpush.msra.mxu0 0.0
    %4028 = vmatpush.msra.mxu0 0.0
    %4029 = vmatpush.msra.mxu0 0.0
    %4030 = vmatpush.msra.mxu0 %v232
    %4031 = vmatpush.msra.mxu0 %v228
    %4032 = vmatpush.msra.mxu0 %v224
    %4033 = vmatpush.msra.mxu0 %v220
    %4034 = vmatpush.msra.mxu0 %v216
    %4035 = vmatpush.msra.mxu0 %v212
    %4036 = vmatpush.msra.mxu0 %v208
    %4037 = vmatpush.msra.mxu0 %v204
    %4038 = vmatmul.f32.gmra.mxu0 %v3880
    %v4039 = vpop.f32.mrf.mxu0
    %v4040 = vadd.f32 %v4020, %v4039
    %4041 = vdwg.mxu0
    %v4042 = vxor.u32 %v3920, 2147483648
    %v4043 = vxor.u32 %v3960, 2147483648
    %v4044 = vxor.u32 %v4000, 2147483648
    %v4045 = vmul.f32 %v4042, 1.442695
    %v4046 = vpow.pop %v4045
    %v4047 = vmul.f32 %v4043, 1.442695
    %v4048 = vpow.pop %v4047
    %v4049 = vmul.f32 %v4044, 1.442695
    %v4050 = vpow.pop %v4049
    %v4051 = vadd.f32 %v4046, 1.0
    %v4052 = vadd.f32 %v4048, 1.0
    %v4053 = vadd.f32 %v4050, 1.0
    %v4054 = vrcp.pop %v4051
    %v4055 = vmul.f32 %v4051, %v4054
    %v4056 = vsub.f32 1.0, %v4055
    %v4057 = vmul.f32 %v4054, %v4056
    %v4058 = vadd.f32 %v4054, %v4057
    %vm4059 = vweird.f32 %v4051
    %vm4060 = vweird.f32 %v4054
    %vm4061 = vmor %vm4059, %vm4060
    %v4062 = vsel %vm4061, %v4054, %v4058
    %v4063 = vand.u32 2147483647, %v4051
    %vm4064 = vcmp.eq.f32.partialorder %v4063, 8.507059e+37
    %v4065 = vand.u32 %v4051, 2147483648
    %v4066 = vor.u32 1.1754944e-38, %v4065
    %v4067 = vsel %vm4064, %v4066, %v4062
    %v4068 = vmul.f32 1.0, %v4067
    %v4069 = vrcp.pop %v4052
    %v4070 = vmul.f32 %v4052, %v4069
    %v4071 = vsub.f32 1.0, %v4070
    %v4072 = vmul.f32 %v4069, %v4071
    %v4073 = vadd.f32 %v4069, %v4072
    %vm4074 = vweird.f32 %v4052
    %vm4075 = vweird.f32 %v4069
    %vm4076 = vmor %vm4074, %vm4075
    %v4077 = vsel %vm4076, %v4069, %v4073
    %v4078 = vand.u32 2147483647, %v4052
    %vm4079 = vcmp.eq.f32.partialorder %v4078, 8.507059e+37
    %v4080 = vand.u32 %v4052, 2147483648
    %v4081 = vor.u32 1.1754944e-38, %v4080
    %v4082 = vsel %vm4079, %v4081, %v4077
    %v4083 = vmul.f32 1.0, %v4082
    %v4084 = vrcp.pop %v4053
    %v4085 = vmul.f32 %v4053, %v4084
    %v4086 = vsub.f32 1.0, %v4085
    %v4087 = vmul.f32 %v4084, %v4086
    %v4088 = vadd.f32 %v4084, %v4087
    %vm4089 = vweird.f32 %v4053
    %vm4090 = vweird.f32 %v4084
    %vm4091 = vmor %vm4089, %vm4090
    %v4092 = vsel %vm4091, %v4084, %v4088
    %v4093 = vand.u32 2147483647, %v4053
    %vm4094 = vcmp.eq.f32.partialorder %v4093, 8.507059e+37
    %v4095 = vand.u32 %v4053, 2147483648
    %v4096 = vor.u32 1.1754944e-38, %v4095
    %v4097 = vsel %vm4094, %v4096, %v4092
    %v4098 = vmul.f32 1.0, %v4097
    %v4099 = vtanh.pop %v4040
    %v4100 = vmul.f32 %v4083, %v3622
    %v4101 = vmul.f32 %v4068, %v4099
    %v4102 = vadd.f32 %v4100, %v4101
    %v4103 = vtanh.pop %v4102
    %v4104 = vmul.f32 %v4098, %v4103
    %4105 = vst [vmem:[#allocation1] ss:$9 sm:$0xff] %v3765
    %s4106 = scalar_lea.vmem [#allocation1], 1
    %4107 = vst [vmem:[%s4106] ss:$9 sm:$0xff] %v3766
    %v4108 = vld [vmem:[#allocation1] sm:$0xff]
    %vm4110 = vcmask 517120
    %4111 = vst.msk [vmem:[#allocation2] sm:$0x3] %vm4110, %v4108
    %4114 = vst [vmem:[#allocation1] ss:$9 sm:$0xff] %v3747
    %s4115 = scalar_lea.vmem [#allocation1], 1
    %4116 = vst [vmem:[%s4115] ss:$9 sm:$0xff] %v3748
    %v4117 = vld [vmem:[#allocation1] sm:$0xff]
    %4118 = vrot.lane.b32.xlu0 %v4117, 64
    %v4119 = vpop.permute.xlu0 %4118
    %4121 = vst.msk [vmem:[#allocation3] sm:$0x3] %vm4110, %v4119
    %4122 = vst.msk [vmem:[#allocation4] sm:$0x3] %vm4110, %v3874
    %4124 = vrot.lane.b32.xlu0 %v3868, 64
    %v4125 = vpop.permute.xlu0 %4124
    %4127 = vst.msk [vmem:[#allocation5] sm:$0x3] %vm4110, %v4125
    %4128 = vst [vmem:[#allocation6] sm:$0x3] %v4104
    %4129 = vst [vmem:[#allocation7] sm:$0x3] %v4102
    // Predicated region
    $region50: #{tpu_custom_call.1} parent=1 // pred_check
      %p4130 = pneg %p77
    $region51: #{tpu_custom_call.1} parent=1 // pred_check_branch
      %4132 = sbr.rel (%p4130) target = $region53
    $region52: #{tpu_custom_call.1} parent=1 // pred_region
      %v4133 = vld [vmem:[%s6] sm:$0xff]
      %v4134 = vld [vmem:[%s6 + $0x8] sm:$0xff]
      %v4135 = vld [vmem:[%s6 + $0x10] sm:$0xff]
      %v4136 = vld [vmem:[%s6 + $0x18] sm:$0xff]
      %v4137 = vld [vmem:[%s6 + $0x20] sm:$0xff]
      %v4138 = vld [vmem:[%s6 + $0x28] sm:$0xff]
      %v4139 = vld [vmem:[%s6 + $0x30] sm:$0xff]
      %v4140 = vld [vmem:[%s6 + $0x38] sm:$0xff]
      %v4141 = vld [vmem:[%s6 + $0x40] sm:$0xff]
      %v4142 = vld [vmem:[%s6 + $0x48] sm:$0xff]
      %v4143 = vld [vmem:[%s6 + $0x50] sm:$0xff]
      %v4144 = vld [vmem:[%s6 + $0x58] sm:$0xff]
      %v4145 = vld [vmem:[%s6 + $0x60] sm:$0xff]
      %v4146 = vld [vmem:[%s6 + $0x68] sm:$0xff]
      %v4147 = vld [vmem:[%s6 + $0x70] sm:$0xff]
      %v4148 = vld [vmem:[%s6 + $0x78] sm:$0xff]
      %v4149 = vld [vmem:[%s7] sm:$0x1]
      %v4151 = vperm.slane %v4149, 0
      %4153 = vmatpush.msra.mxu0 %v4148
      %4154 = vmatpush.msra.mxu0 %v4147
      %4155 = vmatpush.msra.mxu0 %v4146
      %4156 = vmatpush.msra.mxu0 %v4145
      %4157 = vmatpush.msra.mxu0 %v4144
      %4158 = vmatpush.msra.mxu0 %v4143
      %4159 = vmatpush.msra.mxu0 %v4142
      %4160 = vmatpush.msra.mxu0 %v4141
      %4161 = vmatpush.msra.mxu0 %v4140
      %4162 = vmatpush.msra.mxu0 %v4139
      %4163 = vmatpush.msra.mxu0 %v4138
      %4164 = vmatpush.msra.mxu0 %v4137
      %4165 = vmatpush.msra.mxu0 %v4136
      %4166 = vmatpush.msra.mxu0 %v4135
      %4167 = vmatpush.msra.mxu0 %v4134
      %4168 = vmatpush.msra.mxu0 %v4133
      %4169 = vmatmul.f32.gmra.mxu0 %v4104
      %v4170 = vpop.f32.mrf.mxu0
      %v4171 = vadd.f32 %v4151, %v4170
      %4172 = vdwg.mxu0
      %vm4173 = vcmask 74752
      %4174 = vst.msk [vmem:[#allocation14] sm:$0x3] %vm4173, %v4171
    $region53: #{tpu_custom_call.1} parent=1 // pred_fallthru
      _
    // Predicated region
    $region54: #{tpu_custom_call.1} parent=1 // pred_check
      _
    $region55: #{tpu_custom_call.1} parent=1 // pred_check_branch
      %4176 = sbr.rel (0) target = $region57
    $region56: #{tpu_custom_call.1} parent=1 // pred_region
      %4178 = vsyncadd [#allocation10], 0
      %s4180 = sshll.u32 [#allocation14], 4
      %s4181 = int_to_ptr.vmem [resolvable:$true] %s4180
      %s4182 = sshll.u32 %s8, 4
      %s4183 = int_to_ptr.hbm [resolvable:$true] %s4182
      %4185 = dma.vmem_to_hbm [thread:$0]  %s4181, 32, %s4183, [#allocation10]
    $region57: #{tpu_custom_call.1} parent=1 // pred_fallthru
      _
    // Predicated region
    $region58: #{tpu_custom_call.1} parent=1 // pred_check
      _
    $region59: #{tpu_custom_call.1} parent=1 // pred_check_branch
      %4187 = sbr.rel (0) target = $region61
    $region60: #{tpu_custom_call.1} parent=1 // pred_region
      %4189 = dma.done [#allocation10], 32
    $region61: #{tpu_custom_call.1} parent=1 // pred_fallthru
      _
    %4190 = vsyncpa [#allocation9], 1
    %4191 = vsyncpa [#allocation12], 1
    %4192 = vsyncpa [#allocation10], 1

</llo_original>
